<compile_context>
chip_gen: v6e
topology: v6e:2x2x1
jax: 0.10.0
libtpu: 0.0.40
codegen_flags: <defaults>
</compile_context>

<pallas_src>
import functools

import jax
import jax.numpy as jnp
import numpy as np
from jax import lax
from jax.experimental import pallas as pl
from jax.experimental.pallas import tpu as pltpu


def _round_up(x, m):
    return (x + m - 1) // m * m


def _sigmoid(x):
    # Single EUP op (tanh) instead of exp + divide on the serial recurrence.
    return 0.5 * jnp.tanh(0.5 * x) + 0.5


def _make_gru_kernel(num_layers, hidden_pad, seq_len, batch_block, mm_dtype):
    Hp = hidden_pad
    T = seq_len
    BB = batch_block

    def kernel(*refs):
        # refs: x, [w_ih, w_hh, b_gi, b_hn] * L, fc_w, fc_b, o_ref,
        #       act_buf (scratch), gi_buf (scratch)
        x_ref = refs[0]                              # (T, BB, Dp)     f32
        layer_refs = refs[1:1 + 4 * num_layers]
        fc_w_ref = refs[1 + 4 * num_layers]          # (Hp, out)       mm_dtype
        fc_b_ref = refs[2 + 4 * num_layers]          # (1, out)        f32
        o_ref = refs[3 + 4 * num_layers]             # (BB, out)       f32
        act_buf = refs[4 + 4 * num_layers]           # (T, BB, Hp)     f32
        gi_buf = refs[5 + 4 * num_layers]            # (T, BB, 3Hp)    f32

        h_last = jnp.zeros((BB, Hp), jnp.float32)

        for l in range(num_layers):                  # static unroll over layers
            w_ih = layer_refs[4 * l][...]            # (D_l, 3Hp)  mm_dtype
            w_hh = layer_refs[4 * l + 1][...]        # (Hp, 3Hp)   mm_dtype
            b_gi = layer_refs[4 * l + 2][...]        # (1, 3Hp)    f32: b_ih(+b_hh r,z)
            b_hn = layer_refs[4 * l + 3][...]        # (1, Hp)     f32: b_hh of n gate

            # ---- hoisted input projection for the whole sequence: one big
            #      bf16 MXU matmul (f32 accumulation) instead of T tiny ones
            #      on the latency-critical recurrence ----
            xin = x_ref[...] if l == 0 else act_buf[...]
            d_in = xin.shape[-1]
            xin2 = xin.reshape(T * BB, d_in).astype(mm_dtype)
            gi2 = jnp.dot(xin2, w_ih, preferred_element_type=jnp.float32) + b_gi
            gi_buf[...] = gi2.reshape(T, BB, 3 * Hp)

            b_hn_b = jnp.broadcast_to(b_hn, (BB, Hp))   # hoisted broadcast
            write_act = l < num_layers - 1              # last layer's seq is dead

            def step(t, h, w_hh=w_hh, b_hn_b=b_hn_b, write_act=write_act):
                gi = gi_buf[t]                                      # (BB, 3Hp) f32
                gh = jnp.dot(h.astype(mm_dtype), w_hh,
                             preferred_element_type=jnp.float32)    # (BB, 3Hp) f32
                # PyTorch gate order [r, z, n]; slices are 128-lane aligned.
                r = _sigmoid(gi[:, 0:Hp] + gh[:, 0:Hp])
                z = _sigmoid(gi[:, Hp:2 * Hp] + gh[:, Hp:2 * Hp])
                n = jnp.tanh(gi[:, 2 * Hp:3 * Hp]
                             + r * (gh[:, 2 * Hp:3 * Hp] + b_hn_b))
                h_new = n + z * (h - n)                 # == (1-z)*n + z*h
                if write_act:
                    act_buf[t] = h_new
                return h_new

            h0 = jnp.zeros((BB, Hp), jnp.float32)
            # Serial recurrence: bounded-live-range loop; deep unroll buys
            # little on a serial chain and costs vreg pressure.
            unroll = True if T <= 8 else 4
            h_last = lax.fori_loop(0, T, step, h0, unroll=unroll)

        # out = h_T @ fc_w + fc_b   (fc_w already transposed/padded)
        o_ref[...] = (jnp.dot(h_last.astype(mm_dtype), fc_w_ref[...],
                              preferred_element_type=jnp.float32)
                      + fc_b_ref[...])

    return kernel


def init_gru_params(key, input_dim, hidden_dim, num_layers, output_dim):
    """Deterministic PyTorch-style init: U(-1/sqrt(H), 1/sqrt(H))."""
    params = {"layers": []}
    k = 1.0 / np.sqrt(hidden_dim)
    for l in range(num_layers):
        d_in = input_dim if l == 0 else hidden_dim
        key, k1, k2, k3, k4 = jax.random.split(key, 5)
        params["layers"].append({
            "w_ih": jax.random.uniform(k1, (3 * hidden_dim, d_in), jnp.float32, -k, k),
            "w_hh": jax.random.uniform(k2, (3 * hidden_dim, hidden_dim), jnp.float32, -k, k),
            "b_ih": jax.random.uniform(k3, (3 * hidden_dim,), jnp.float32, -k, k),
            "b_hh": jax.random.uniform(k4, (3 * hidden_dim,), jnp.float32, -k, k),
        })
    kf = 1.0 / np.sqrt(hidden_dim)
    key, k1, k2 = jax.random.split(key, 3)
    params["fc_w"] = jax.random.uniform(k1, (output_dim, hidden_dim), jnp.float32, -kf, kf)
    params["fc_b"] = jax.random.uniform(k2, (output_dim,), jnp.float32, -kf, kf)
    return params


@functools.partial(
    jax.jit,
    static_argnames=("hidden_dim", "num_layers", "output_dim", "use_bf16_matmul"))
def gru_network_forward(x, params, *, hidden_dim, num_layers, output_dim,
                        use_bf16_matmul=True):
    """x: (B, T, D_in) float32, batch_first like the PyTorch module."""
    B, T, D_in = x.shape
    H = hidden_dim
    Hp = _round_up(H, 128)        # lane-aligned hidden size
    Dp = _round_up(D_in, 128)     # lane/K-aligned layer-0 input dim
    mm_dtype = jnp.bfloat16 if use_bf16_matmul else jnp.float32

    # Split the batch into up to 2 sublane-aligned blocks so the grid axis can
    # be sharded across v7x's two TensorCores; no-op on v5e/v6e (1 TC).
    if B > 8:
        n_blk = 2
        Bp = _round_up(B, 16)
    else:
        n_blk = 1
        Bp = _round_up(B, 8)
    BB = Bp // n_blk

    # Time-major + batch/feature zero padding: (T, Bp, Dp).
    # TODO(synk): fold this transpose/pad into the kernel via a time-chunked x
    #             BlockSpec to save the extra HBM pass for very large x.
    x_tm = jnp.transpose(x, (1, 0, 2))
    x_tm = jnp.pad(x_tm, ((0, 0), (0, Bp - B), (0, Dp - D_in)))

    def pad_gates_t(w, d_src, d_dst):
        # w: (3H, d_src) PyTorch layout -> (d_dst, 3Hp) mm_dtype, gate-padded.
        parts = []
        for g in range(3):
            wg = w[g * H:(g + 1) * H, :].T                          # (d_src, H)
            wg = jnp.pad(wg, ((0, d_dst - d_src), (0, Hp - H)))     # (d_dst, Hp)
            parts.append(wg)
        return jnp.concatenate(parts, axis=1).astype(mm_dtype)      # (d_dst, 3Hp)

    def pad_vec(v):
        return jnp.pad(v, (0, Hp - H))

    def full_spec(shape):
        return pl.BlockSpec(shape, lambda i, _s=shape: (0,) * len(_s))

    inputs = [x_tm]
    in_specs = [pl.BlockSpec((T, BB, Dp), lambda i: (0, i, 0))]

    for l in range(num_layers):
        lp = params["layers"][l]
        d_src = D_in if l == 0 else H
        d_dst = Dp if l == 0 else Hp
        w_ih_p = pad_gates_t(lp["w_ih"], d_src, d_dst)              # (d_dst, 3Hp)
        w_hh_p = pad_gates_t(lp["w_hh"], H, Hp)                     # (Hp, 3Hp)
        b_ih, b_hh = lp["b_ih"], lp["b_hh"]
        # Fold b_ih (+ b_hh for the r,z gates) into the precomputed gi; keep
        # b_hh_n separate (it must sit inside the r * (...) product).
        b_gi = jnp.concatenate([
            pad_vec(b_ih[0:H] + b_hh[0:H]),
            pad_vec(b_ih[H:2 * H] + b_hh[H:2 * H]),
            pad_vec(b_ih[2 * H:3 * H]),
        ])[None, :].astype(jnp.float32)                             # (1, 3Hp)
        b_hn = pad_vec(b_hh[2 * H:3 * H])[None, :].astype(jnp.float32)  # (1, Hp)
        inputs += [w_ih_p, w_hh_p, b_gi, b_hn]
        in_specs += [full_spec((d_dst, 3 * Hp)), full_spec((Hp, 3 * Hp)),
                     full_spec((1, 3 * Hp)), full_spec((1, Hp))]

    fc_w_p = jnp.pad(params["fc_w"].T,
                     ((0, Hp - H), (0, 0))).astype(mm_dtype)        # (Hp, out)
    fc_b = params["fc_b"][None, :].astype(jnp.float32)              # (1, out)
    inputs += [fc_w_p, fc_b]
    in_specs += [full_spec((Hp, output_dim)), full_spec((1, output_dim))]

    # Explicit per-generation VMEM budget with headroom for compiler scratch.
    def nbytes(a):
        return int(np.prod(a.shape)) * a.dtype.itemsize

    act_rows = T if num_layers > 1 else 1        # act scratch unused for L == 1
    est = 2 * sum(nbytes(a) for a in inputs)     # double-buffered input blocks
    est += 2 * BB * output_dim * 4               # output block
    est += act_rows * BB * Hp * 4 + T * BB * 3 * Hp * 4   # resident scratch
    try:
        vmem_cap = int(pltpu.get_tpu_info().vmem_capacity_bytes)
    except Exception:                            # conservative fallback
        vmem_cap = 64 * 2**20
    budget = int(vmem_cap * 0.85)
    # TODO(synk): if est > budget (very long T), fall back to a time-chunked
    #             streaming grid instead of the all-resident design.
    vmem_limit = int(max(4 * 2**20, min(budget, 2 * est)))

    kernel = _make_gru_kernel(num_layers, Hp, T, BB, mm_dtype)

    out_p = pl.pallas_call(
        kernel,
        out_shape=jax.ShapeDtypeStruct((Bp, output_dim), jnp.float32),
        grid=(n_blk,),
        in_specs=in_specs,
        out_specs=pl.BlockSpec((BB, output_dim), lambda i: (i, 0)),
        scratch_shapes=[pltpu.VMEM((act_rows, BB, Hp), jnp.float32),
                        pltpu.VMEM((T, BB, 3 * Hp), jnp.float32)],
        compiler_params=pltpu.CompilerParams(
            dimension_semantics=("parallel",),
            vmem_limit_bytes=vmem_limit),
    )(*inputs)
    return out_p[:B]


def gru_network_reference(x, params, *, hidden_dim, num_layers, output_dim):
    """Pure-JAX reference mirroring torch.nn.GRU semantics (for validation)."""
    B, T, _ = x.shape
    H = hidden_dim
    layer_in = x
    for l in range(num_layers):
        lp = params["layers"][l]
        w_ih, w_hh = lp["w_ih"], lp["w_hh"]
        b_ih, b_hh = lp["b_ih"], lp["b_hh"]
        h = jnp.zeros((B, H), jnp.float32)
        outs = []
        for t in range(T):
            x_t = layer_in[:, t, :]
            gi = x_t @ w_ih.T + b_ih
            gh = h @ w_hh.T + b_hh
            r = jax.nn.sigmoid(gi[:, 0:H] + gh[:, 0:H])
            z = jax.nn.sigmoid(gi[:, H:2 * H] + gh[:, H:2 * H])
            n = jnp.tanh(gi[:, 2 * H:3 * H] + r * gh[:, 2 * H:3 * H])
            h = (1.0 - z) * n + z * h
            outs.append(h)
        layer_in = jnp.stack(outs, axis=1)
    last = layer_in[:, -1, :]
    return last @ params["fc_w"].T + params["fc_b"]


if __name__ == "__main__":
    # Small shapes consistent with the module's forward: x is (B, T, input_dim).
    B, T = 2, 8
    input_dim, hidden_dim, num_layers, output_dim = 16, 32, 2, 4

    key = jax.random.PRNGKey(0)
    key, kx = jax.random.split(key)
    x = jax.random.normal(kx, (B, T, input_dim), jnp.float32)
    params = init_gru_params(key, input_dim, hidden_dim, num_layers, output_dim)

    ref = gru_network_reference(
        x, params, hidden_dim=hidden_dim, num_layers=num_layers,
        output_dim=output_dim)

    # 1) f32-matmul variant: tight check of the kernel math / layout plumbing.
    out_f32 = gru_network_forward(
        x, params, hidden_dim=hidden_dim, num_layers=num_layers,
        output_dim=output_dim, use_bf16_matmul=False)
    out_f32 = jax.block_until_ready(out_f32)
    np.testing.assert_allclose(np.asarray(out_f32), np.asarray(ref),
                               atol=2e-4, rtol=2e-4)

    # 2) bf16-matmul variant (perf default): bf16 MXU operands with f32
    #    accumulation -> tolerance loosened by design.
    out_bf16 = gru_network_forward(
        x, params, hidden_dim=hidden_dim, num_layers=num_layers,
        output_dim=output_dim, use_bf16_matmul=True)
    out_bf16 = jax.block_until_ready(out_bf16)
    np.testing.assert_allclose(np.asarray(out_bf16), np.asarray(ref),
                               atol=5e-2, rtol=5e-2)

    print("KERNEL_OK")
</pallas_src>

<mosaic_0001>
module attributes {stable_mosaic.version = 11 : i64} {
  func.func @kernel(%arg0: i32, %arg1: memref<8x8x128xf32, #tpu.memory_space<vmem>>, %arg2: memref<128x384xf32, #tpu.memory_space<vmem>>, %arg3: memref<128x384xf32, #tpu.memory_space<vmem>>, %arg4: memref<1x384xf32, #tpu.memory_space<vmem>>, %arg5: memref<1x128xf32, #tpu.memory_space<vmem>>, %arg6: memref<128x384xf32, #tpu.memory_space<vmem>>, %arg7: memref<128x384xf32, #tpu.memory_space<vmem>>, %arg8: memref<1x384xf32, #tpu.memory_space<vmem>>, %arg9: memref<1x128xf32, #tpu.memory_space<vmem>>, %arg10: memref<128x4xf32, #tpu.memory_space<vmem>>, %arg11: memref<1x4xf32, #tpu.memory_space<vmem>>, %arg12: memref<8x4xf32, #tpu.memory_space<vmem>>, %arg13: memref<8x8x128xf32, #tpu.memory_space<vmem>>, %arg14: memref<8x8x384xf32, #tpu.memory_space<vmem>>) attributes {dimension_semantics = [#tpu.dimension_semantics<parallel>], iteration_bounds = array<i64: 1>, scalar_prefetch = 0 : i64, scratch_operands = 2 : i64, tpu.core_type = #tpu.core_type<tc>, window_params = [{transform_indices = @transform_0, window_bounds = array<i64: 8, 8, 128>}, {pipeline_mode = #tpu.pipeline_mode<synchronous>, transform_indices = @transform_1, window_bounds = array<i64: 128, 384>}, {pipeline_mode = #tpu.pipeline_mode<synchronous>, transform_indices = @transform_2, window_bounds = array<i64: 128, 384>}, {pipeline_mode = #tpu.pipeline_mode<synchronous>, transform_indices = @transform_3, window_bounds = array<i64: 1, 384>}, {pipeline_mode = #tpu.pipeline_mode<synchronous>, transform_indices = @transform_4, window_bounds = array<i64: 1, 128>}, {pipeline_mode = #tpu.pipeline_mode<synchronous>, transform_indices = @transform_5, window_bounds = array<i64: 128, 384>}, {pipeline_mode = #tpu.pipeline_mode<synchronous>, transform_indices = @transform_6, window_bounds = array<i64: 128, 384>}, {pipeline_mode = #tpu.pipeline_mode<synchronous>, transform_indices = @transform_7, window_bounds = array<i64: 1, 384>}, {pipeline_mode = #tpu.pipeline_mode<synchronous>, transform_indices = @transform_8, window_bounds = array<i64: 1, 128>}, {pipeline_mode = #tpu.pipeline_mode<synchronous>, transform_indices = @transform_9, window_bounds = array<i64: 128, 4>}, {pipeline_mode = #tpu.pipeline_mode<synchronous>, transform_indices = @transform_10, window_bounds = array<i64: 1, 4>}, {transform_indices = @transform_11, window_bounds = array<i64: 8, 4>}]} {
    %c0 = arith.constant 0 : index
    %c0_0 = arith.constant 0 : index
    %0 = vector.load %arg2[%c0, %c0_0] : memref<128x384xf32, #tpu.memory_space<vmem>>, vector<128x384xf32>
    %c0_1 = arith.constant 0 : index
    %c0_2 = arith.constant 0 : index
    %1 = vector.load %arg3[%c0_1, %c0_2] : memref<128x384xf32, #tpu.memory_space<vmem>>, vector<128x384xf32>
    %c0_3 = arith.constant 0 : index
    %c0_4 = arith.constant 0 : index
    %2 = vector.load %arg4[%c0_3, %c0_4] : memref<1x384xf32, #tpu.memory_space<vmem>>, vector<1x384xf32>
    %c0_5 = arith.constant 0 : index
    %c0_6 = arith.constant 0 : index
    %3 = vector.load %arg5[%c0_5, %c0_6] : memref<1x128xf32, #tpu.memory_space<vmem>>, vector<1x128xf32>
    %c0_7 = arith.constant 0 : index
    %c0_8 = arith.constant 0 : index
    %c0_9 = arith.constant 0 : index
    %4 = vector.load %arg1[%c0_7, %c0_8, %c0_9] : memref<8x8x128xf32, #tpu.memory_space<vmem>>, vector<8x8x128xf32>
    %5 = vector.shape_cast %4 : vector<8x8x128xf32> to vector<64x128xf32>
    %cst = arith.constant dense<0.000000e+00> : vector<64x384xf32>
    %6 = tpu.matmul %5, %0, %cst {dimension_numbers = #tpu.dot_dimension_numbers<[1], [0], [0], [1], [0, 0, 1, 1], [], []>} : vector<64x128xf32>, vector<128x384xf32>, vector<64x384xf32> -> vector<64x384xf32>
    %7 = vector.broadcast %2 : vector<1x384xf32> to vector<64x384xf32>
    %8 = arith.addf %6, %7 : vector<64x384xf32>
    %9 = vector.shape_cast %8 : vector<64x384xf32> to vector<8x8x384xf32>
    %c0_10 = arith.constant 0 : index
    %c0_11 = arith.constant 0 : index
    %c0_12 = arith.constant 0 : index
    %10 = vector.load %arg14[%c0_10, %c0_11, %c0_12] : memref<8x8x384xf32, #tpu.memory_space<vmem>>, vector<8x8x384xf32>
    tpu.vector_store %arg14[%c0_10, %c0_11, %c0_12], %9 {strides = array<i32>} : memref<8x8x384xf32, #tpu.memory_space<vmem>>, vector<8x8x384xf32>,
    %11 = vector.shape_cast %3 : vector<1x128xf32> to vector<1x128xf32>
    %12 = vector.broadcast %11 : vector<1x128xf32> to vector<8x128xf32>
    %cst_13 = arith.constant 0.000000e+00 : f32
    %13 = vector.broadcast %cst_13 : f32 to vector<8x128xf32>
    %c0_i32 = arith.constant 0 : i32
    %14 = arith.index_cast %c0_i32 : i32 to index
    %c0_14 = arith.constant 0 : index
    %c0_15 = arith.constant 0 : index
    %15 = vector.load %arg14[%14, %c0_14, %c0_15] : memref<8x8x384xf32, #tpu.memory_space<vmem>>, vector<1x8x384xf32>
    %16 = vector.shape_cast %15 : vector<1x8x384xf32> to vector<8x384xf32>
    %cst_16 = arith.constant dense<0.000000e+00> : vector<8x384xf32>
    %17 = tpu.matmul %13, %1, %cst_16 {dimension_numbers = #tpu.dot_dimension_numbers<[1], [0], [0], [1], [0, 0, 1, 1], [], []>} : vector<8x128xf32>, vector<128x384xf32>, vector<8x384xf32> -> vector<8x384xf32>
    %18 = vector.extract_strided_slice %16 {offsets = [0, 0], sizes = [8, 128], strides = [1, 1]} : vector<8x384xf32> to vector<8x128xf32>
    %19 = vector.extract_strided_slice %17 {offsets = [0, 0], sizes = [8, 128], strides = [1, 1]} : vector<8x384xf32> to vector<8x128xf32>
    %20 = arith.addf %18, %19 : vector<8x128xf32>
    %cst_17 = arith.constant 5.000000e-01 : f32
    %21 = vector.broadcast %cst_17 : f32 to vector<8x128xf32>
    %22 = arith.mulf %21, %20 : vector<8x128xf32>
    %23 = math.tanh %22 : vector<8x128xf32>
    %cst_18 = arith.constant 5.000000e-01 : f32
    %24 = vector.broadcast %cst_18 : f32 to vector<8x128xf32>
    %25 = arith.mulf %24, %23 : vector<8x128xf32>
    %cst_19 = arith.constant 5.000000e-01 : f32
    %26 = vector.broadcast %cst_19 : f32 to vector<8x128xf32>
    %27 = arith.addf %25, %26 : vector<8x128xf32>
    %28 = vector.extract_strided_slice %16 {offsets = [0, 128], sizes = [8, 128], strides = [1, 1]} : vector<8x384xf32> to vector<8x128xf32>
    %29 = vector.extract_strided_slice %17 {offsets = [0, 128], sizes = [8, 128], strides = [1, 1]} : vector<8x384xf32> to vector<8x128xf32>
    %30 = arith.addf %28, %29 : vector<8x128xf32>
    %cst_20 = arith.constant 5.000000e-01 : f32
    %31 = vector.broadcast %cst_20 : f32 to vector<8x128xf32>
    %32 = arith.mulf %31, %30 : vector<8x128xf32>
    %33 = math.tanh %32 : vector<8x128xf32>
    %cst_21 = arith.constant 5.000000e-01 : f32
    %34 = vector.broadcast %cst_21 : f32 to vector<8x128xf32>
    %35 = arith.mulf %34, %33 : vector<8x128xf32>
    %cst_22 = arith.constant 5.000000e-01 : f32
    %36 = vector.broadcast %cst_22 : f32 to vector<8x128xf32>
    %37 = arith.addf %35, %36 : vector<8x128xf32>
    %38 = vector.extract_strided_slice %16 {offsets = [0, 256], sizes = [8, 128], strides = [1, 1]} : vector<8x384xf32> to vector<8x128xf32>
    %39 = vector.extract_strided_slice %17 {offsets = [0, 256], sizes = [8, 128], strides = [1, 1]} : vector<8x384xf32> to vector<8x128xf32>
    %40 = arith.addf %39, %12 : vector<8x128xf32>
    %41 = arith.mulf %27, %40 : vector<8x128xf32>
    %42 = arith.addf %38, %41 : vector<8x128xf32>
    %43 = math.tanh %42 : vector<8x128xf32>
    %44 = arith.subf %13, %43 : vector<8x128xf32>
    %45 = arith.mulf %37, %44 : vector<8x128xf32>
    %46 = arith.addf %43, %45 : vector<8x128xf32>
    %47 = arith.index_cast %c0_i32 : i32 to index
    %c0_23 = arith.constant 0 : index
    %c0_24 = arith.constant 0 : index
    %48 = vector.load %arg13[%47, %c0_23, %c0_24] : memref<8x8x128xf32, #tpu.memory_space<vmem>>, vector<1x8x128xf32>
    %49 = vector.shape_cast %48 : vector<1x8x128xf32> to vector<8x128xf32>
    %50 = vector.shape_cast %46 : vector<8x128xf32> to vector<1x8x128xf32>
    tpu.vector_store %arg13[%47, %c0_23, %c0_24], %50 {strides = array<i32>} : memref<8x8x128xf32, #tpu.memory_space<vmem>>, vector<1x8x128xf32>,
    %c1_i32 = arith.constant 1 : i32
    %51 = arith.index_cast %c1_i32 : i32 to index
    %c0_25 = arith.constant 0 : index
    %c0_26 = arith.constant 0 : index
    %52 = vector.load %arg14[%51, %c0_25, %c0_26] : memref<8x8x384xf32, #tpu.memory_space<vmem>>, vector<1x8x384xf32>
    %53 = vector.shape_cast %52 : vector<1x8x384xf32> to vector<8x384xf32>
    %cst_27 = arith.constant dense<0.000000e+00> : vector<8x384xf32>
    %54 = tpu.matmul %46, %1, %cst_27 {dimension_numbers = #tpu.dot_dimension_numbers<[1], [0], [0], [1], [0, 0, 1, 1], [], []>} : vector<8x128xf32>, vector<128x384xf32>, vector<8x384xf32> -> vector<8x384xf32>
    %55 = vector.extract_strided_slice %53 {offsets = [0, 0], sizes = [8, 128], strides = [1, 1]} : vector<8x384xf32> to vector<8x128xf32>
    %56 = vector.extract_strided_slice %54 {offsets = [0, 0], sizes = [8, 128], strides = [1, 1]} : vector<8x384xf32> to vector<8x128xf32>
    %57 = arith.addf %55, %56 : vector<8x128xf32>
    %cst_28 = arith.constant 5.000000e-01 : f32
    %58 = vector.broadcast %cst_28 : f32 to vector<8x128xf32>
    %59 = arith.mulf %58, %57 : vector<8x128xf32>
    %60 = math.tanh %59 : vector<8x128xf32>
    %cst_29 = arith.constant 5.000000e-01 : f32
    %61 = vector.broadcast %cst_29 : f32 to vector<8x128xf32>
    %62 = arith.mulf %61, %60 : vector<8x128xf32>
    %cst_30 = arith.constant 5.000000e-01 : f32
    %63 = vector.broadcast %cst_30 : f32 to vector<8x128xf32>
    %64 = arith.addf %62, %63 : vector<8x128xf32>
    %65 = vector.extract_strided_slice %53 {offsets = [0, 128], sizes = [8, 128], strides = [1, 1]} : vector<8x384xf32> to vector<8x128xf32>
    %66 = vector.extract_strided_slice %54 {offsets = [0, 128], sizes = [8, 128], strides = [1, 1]} : vector<8x384xf32> to vector<8x128xf32>
    %67 = arith.addf %65, %66 : vector<8x128xf32>
    %cst_31 = arith.constant 5.000000e-01 : f32
    %68 = vector.broadcast %cst_31 : f32 to vector<8x128xf32>
    %69 = arith.mulf %68, %67 : vector<8x128xf32>
    %70 = math.tanh %69 : vector<8x128xf32>
    %cst_32 = arith.constant 5.000000e-01 : f32
    %71 = vector.broadcast %cst_32 : f32 to vector<8x128xf32>
    %72 = arith.mulf %71, %70 : vector<8x128xf32>
    %cst_33 = arith.constant 5.000000e-01 : f32
    %73 = vector.broadcast %cst_33 : f32 to vector<8x128xf32>
    %74 = arith.addf %72, %73 : vector<8x128xf32>
    %75 = vector.extract_strided_slice %53 {offsets = [0, 256], sizes = [8, 128], strides = [1, 1]} : vector<8x384xf32> to vector<8x128xf32>
    %76 = vector.extract_strided_slice %54 {offsets = [0, 256], sizes = [8, 128], strides = [1, 1]} : vector<8x384xf32> to vector<8x128xf32>
    %77 = arith.addf %76, %12 : vector<8x128xf32>
    %78 = arith.mulf %64, %77 : vector<8x128xf32>
    %79 = arith.addf %75, %78 : vector<8x128xf32>
    %80 = math.tanh %79 : vector<8x128xf32>
    %81 = arith.subf %46, %80 : vector<8x128xf32>
    %82 = arith.mulf %74, %81 : vector<8x128xf32>
    %83 = arith.addf %80, %82 : vector<8x128xf32>
    %84 = arith.index_cast %c1_i32 : i32 to index
    %c0_34 = arith.constant 0 : index
    %c0_35 = arith.constant 0 : index
    %85 = vector.load %arg13[%84, %c0_34, %c0_35] : memref<8x8x128xf32, #tpu.memory_space<vmem>>, vector<1x8x128xf32>
    %86 = vector.shape_cast %85 : vector<1x8x128xf32> to vector<8x128xf32>
    %87 = vector.shape_cast %83 : vector<8x128xf32> to vector<1x8x128xf32>
    tpu.vector_store %arg13[%84, %c0_34, %c0_35], %87 {strides = array<i32>} : memref<8x8x128xf32, #tpu.memory_space<vmem>>, vector<1x8x128xf32>,
    %c2_i32 = arith.constant 2 : i32
    %88 = arith.index_cast %c2_i32 : i32 to index
    %c0_36 = arith.constant 0 : index
    %c0_37 = arith.constant 0 : index
    %89 = vector.load %arg14[%88, %c0_36, %c0_37] : memref<8x8x384xf32, #tpu.memory_space<vmem>>, vector<1x8x384xf32>
    %90 = vector.shape_cast %89 : vector<1x8x384xf32> to vector<8x384xf32>
    %cst_38 = arith.constant dense<0.000000e+00> : vector<8x384xf32>
    %91 = tpu.matmul %83, %1, %cst_38 {dimension_numbers = #tpu.dot_dimension_numbers<[1], [0], [0], [1], [0, 0, 1, 1], [], []>} : vector<8x128xf32>, vector<128x384xf32>, vector<8x384xf32> -> vector<8x384xf32>
    %92 = vector.extract_strided_slice %90 {offsets = [0, 0], sizes = [8, 128], strides = [1, 1]} : vector<8x384xf32> to vector<8x128xf32>
    %93 = vector.extract_strided_slice %91 {offsets = [0, 0], sizes = [8, 128], strides = [1, 1]} : vector<8x384xf32> to vector<8x128xf32>
    %94 = arith.addf %92, %93 : vector<8x128xf32>
    %cst_39 = arith.constant 5.000000e-01 : f32
    %95 = vector.broadcast %cst_39 : f32 to vector<8x128xf32>
    %96 = arith.mulf %95, %94 : vector<8x128xf32>
    %97 = math.tanh %96 : vector<8x128xf32>
    %cst_40 = arith.constant 5.000000e-01 : f32
    %98 = vector.broadcast %cst_40 : f32 to vector<8x128xf32>
    %99 = arith.mulf %98, %97 : vector<8x128xf32>
    %cst_41 = arith.constant 5.000000e-01 : f32
    %100 = vector.broadcast %cst_41 : f32 to vector<8x128xf32>
    %101 = arith.addf %99, %100 : vector<8x128xf32>
    %102 = vector.extract_strided_slice %90 {offsets = [0, 128], sizes = [8, 128], strides = [1, 1]} : vector<8x384xf32> to vector<8x128xf32>
    %103 = vector.extract_strided_slice %91 {offsets = [0, 128], sizes = [8, 128], strides = [1, 1]} : vector<8x384xf32> to vector<8x128xf32>
    %104 = arith.addf %102, %103 : vector<8x128xf32>
    %cst_42 = arith.constant 5.000000e-01 : f32
    %105 = vector.broadcast %cst_42 : f32 to vector<8x128xf32>
    %106 = arith.mulf %105, %104 : vector<8x128xf32>
    %107 = math.tanh %106 : vector<8x128xf32>
    %cst_43 = arith.constant 5.000000e-01 : f32
    %108 = vector.broadcast %cst_43 : f32 to vector<8x128xf32>
    %109 = arith.mulf %108, %107 : vector<8x128xf32>
    %cst_44 = arith.constant 5.000000e-01 : f32
    %110 = vector.broadcast %cst_44 : f32 to vector<8x128xf32>
    %111 = arith.addf %109, %110 : vector<8x128xf32>
    %112 = vector.extract_strided_slice %90 {offsets = [0, 256], sizes = [8, 128], strides = [1, 1]} : vector<8x384xf32> to vector<8x128xf32>
    %113 = vector.extract_strided_slice %91 {offsets = [0, 256], sizes = [8, 128], strides = [1, 1]} : vector<8x384xf32> to vector<8x128xf32>
    %114 = arith.addf %113, %12 : vector<8x128xf32>
    %115 = arith.mulf %101, %114 : vector<8x128xf32>
    %116 = arith.addf %112, %115 : vector<8x128xf32>
    %117 = math.tanh %116 : vector<8x128xf32>
    %118 = arith.subf %83, %117 : vector<8x128xf32>
    %119 = arith.mulf %111, %118 : vector<8x128xf32>
    %120 = arith.addf %117, %119 : vector<8x128xf32>
    %121 = arith.index_cast %c2_i32 : i32 to index
    %c0_45 = arith.constant 0 : index
    %c0_46 = arith.constant 0 : index
    %122 = vector.load %arg13[%121, %c0_45, %c0_46] : memref<8x8x128xf32, #tpu.memory_space<vmem>>, vector<1x8x128xf32>
    %123 = vector.shape_cast %122 : vector<1x8x128xf32> to vector<8x128xf32>
    %124 = vector.shape_cast %120 : vector<8x128xf32> to vector<1x8x128xf32>
    tpu.vector_store %arg13[%121, %c0_45, %c0_46], %124 {strides = array<i32>} : memref<8x8x128xf32, #tpu.memory_space<vmem>>, vector<1x8x128xf32>,
    %c3_i32 = arith.constant 3 : i32
    %125 = arith.index_cast %c3_i32 : i32 to index
    %c0_47 = arith.constant 0 : index
    %c0_48 = arith.constant 0 : index
    %126 = vector.load %arg14[%125, %c0_47, %c0_48] : memref<8x8x384xf32, #tpu.memory_space<vmem>>, vector<1x8x384xf32>
    %127 = vector.shape_cast %126 : vector<1x8x384xf32> to vector<8x384xf32>
    %cst_49 = arith.constant dense<0.000000e+00> : vector<8x384xf32>
    %128 = tpu.matmul %120, %1, %cst_49 {dimension_numbers = #tpu.dot_dimension_numbers<[1], [0], [0], [1], [0, 0, 1, 1], [], []>} : vector<8x128xf32>, vector<128x384xf32>, vector<8x384xf32> -> vector<8x384xf32>
    %129 = vector.extract_strided_slice %127 {offsets = [0, 0], sizes = [8, 128], strides = [1, 1]} : vector<8x384xf32> to vector<8x128xf32>
    %130 = vector.extract_strided_slice %128 {offsets = [0, 0], sizes = [8, 128], strides = [1, 1]} : vector<8x384xf32> to vector<8x128xf32>
    %131 = arith.addf %129, %130 : vector<8x128xf32>
    %cst_50 = arith.constant 5.000000e-01 : f32
    %132 = vector.broadcast %cst_50 : f32 to vector<8x128xf32>
    %133 = arith.mulf %132, %131 : vector<8x128xf32>
    %134 = math.tanh %133 : vector<8x128xf32>
    %cst_51 = arith.constant 5.000000e-01 : f32
    %135 = vector.broadcast %cst_51 : f32 to vector<8x128xf32>
    %136 = arith.mulf %135, %134 : vector<8x128xf32>
    %cst_52 = arith.constant 5.000000e-01 : f32
    %137 = vector.broadcast %cst_52 : f32 to vector<8x128xf32>
    %138 = arith.addf %136, %137 : vector<8x128xf32>
    %139 = vector.extract_strided_slice %127 {offsets = [0, 128], sizes = [8, 128], strides = [1, 1]} : vector<8x384xf32> to vector<8x128xf32>
    %140 = vector.extract_strided_slice %128 {offsets = [0, 128], sizes = [8, 128], strides = [1, 1]} : vector<8x384xf32> to vector<8x128xf32>
    %141 = arith.addf %139, %140 : vector<8x128xf32>
    %cst_53 = arith.constant 5.000000e-01 : f32
    %142 = vector.broadcast %cst_53 : f32 to vector<8x128xf32>
    %143 = arith.mulf %142, %141 : vector<8x128xf32>
    %144 = math.tanh %143 : vector<8x128xf32>
    %cst_54 = arith.constant 5.000000e-01 : f32
    %145 = vector.broadcast %cst_54 : f32 to vector<8x128xf32>
    %146 = arith.mulf %145, %144 : vector<8x128xf32>
    %cst_55 = arith.constant 5.000000e-01 : f32
    %147 = vector.broadcast %cst_55 : f32 to vector<8x128xf32>
    %148 = arith.addf %146, %147 : vector<8x128xf32>
    %149 = vector.extract_strided_slice %127 {offsets = [0, 256], sizes = [8, 128], strides = [1, 1]} : vector<8x384xf32> to vector<8x128xf32>
    %150 = vector.extract_strided_slice %128 {offsets = [0, 256], sizes = [8, 128], strides = [1, 1]} : vector<8x384xf32> to vector<8x128xf32>
    %151 = arith.addf %150, %12 : vector<8x128xf32>
    %152 = arith.mulf %138, %151 : vector<8x128xf32>
    %153 = arith.addf %149, %152 : vector<8x128xf32>
    %154 = math.tanh %153 : vector<8x128xf32>
    %155 = arith.subf %120, %154 : vector<8x128xf32>
    %156 = arith.mulf %148, %155 : vector<8x128xf32>
    %157 = arith.addf %154, %156 : vector<8x128xf32>
    %158 = arith.index_cast %c3_i32 : i32 to index
    %c0_56 = arith.constant 0 : index
    %c0_57 = arith.constant 0 : index
    %159 = vector.load %arg13[%158, %c0_56, %c0_57] : memref<8x8x128xf32, #tpu.memory_space<vmem>>, vector<1x8x128xf32>
    %160 = vector.shape_cast %159 : vector<1x8x128xf32> to vector<8x128xf32>
    %161 = vector.shape_cast %157 : vector<8x128xf32> to vector<1x8x128xf32>
    tpu.vector_store %arg13[%158, %c0_56, %c0_57], %161 {strides = array<i32>} : memref<8x8x128xf32, #tpu.memory_space<vmem>>, vector<1x8x128xf32>,
    %c4_i32 = arith.constant 4 : i32
    %162 = arith.index_cast %c4_i32 : i32 to index
    %c0_58 = arith.constant 0 : index
    %c0_59 = arith.constant 0 : index
    %163 = vector.load %arg14[%162, %c0_58, %c0_59] : memref<8x8x384xf32, #tpu.memory_space<vmem>>, vector<1x8x384xf32>
    %164 = vector.shape_cast %163 : vector<1x8x384xf32> to vector<8x384xf32>
    %cst_60 = arith.constant dense<0.000000e+00> : vector<8x384xf32>
    %165 = tpu.matmul %157, %1, %cst_60 {dimension_numbers = #tpu.dot_dimension_numbers<[1], [0], [0], [1], [0, 0, 1, 1], [], []>} : vector<8x128xf32>, vector<128x384xf32>, vector<8x384xf32> -> vector<8x384xf32>
    %166 = vector.extract_strided_slice %164 {offsets = [0, 0], sizes = [8, 128], strides = [1, 1]} : vector<8x384xf32> to vector<8x128xf32>
    %167 = vector.extract_strided_slice %165 {offsets = [0, 0], sizes = [8, 128], strides = [1, 1]} : vector<8x384xf32> to vector<8x128xf32>
    %168 = arith.addf %166, %167 : vector<8x128xf32>
    %cst_61 = arith.constant 5.000000e-01 : f32
    %169 = vector.broadcast %cst_61 : f32 to vector<8x128xf32>
    %170 = arith.mulf %169, %168 : vector<8x128xf32>
    %171 = math.tanh %170 : vector<8x128xf32>
    %cst_62 = arith.constant 5.000000e-01 : f32
    %172 = vector.broadcast %cst_62 : f32 to vector<8x128xf32>
    %173 = arith.mulf %172, %171 : vector<8x128xf32>
    %cst_63 = arith.constant 5.000000e-01 : f32
    %174 = vector.broadcast %cst_63 : f32 to vector<8x128xf32>
    %175 = arith.addf %173, %174 : vector<8x128xf32>
    %176 = vector.extract_strided_slice %164 {offsets = [0, 128], sizes = [8, 128], strides = [1, 1]} : vector<8x384xf32> to vector<8x128xf32>
    %177 = vector.extract_strided_slice %165 {offsets = [0, 128], sizes = [8, 128], strides = [1, 1]} : vector<8x384xf32> to vector<8x128xf32>
    %178 = arith.addf %176, %177 : vector<8x128xf32>
    %cst_64 = arith.constant 5.000000e-01 : f32
    %179 = vector.broadcast %cst_64 : f32 to vector<8x128xf32>
    %180 = arith.mulf %179, %178 : vector<8x128xf32>
    %181 = math.tanh %180 : vector<8x128xf32>
    %cst_65 = arith.constant 5.000000e-01 : f32
    %182 = vector.broadcast %cst_65 : f32 to vector<8x128xf32>
    %183 = arith.mulf %182, %181 : vector<8x128xf32>
    %cst_66 = arith.constant 5.000000e-01 : f32
    %184 = vector.broadcast %cst_66 : f32 to vector<8x128xf32>
    %185 = arith.addf %183, %184 : vector<8x128xf32>
    %186 = vector.extract_strided_slice %164 {offsets = [0, 256], sizes = [8, 128], strides = [1, 1]} : vector<8x384xf32> to vector<8x128xf32>
    %187 = vector.extract_strided_slice %165 {offsets = [0, 256], sizes = [8, 128], strides = [1, 1]} : vector<8x384xf32> to vector<8x128xf32>
    %188 = arith.addf %187, %12 : vector<8x128xf32>
    %189 = arith.mulf %175, %188 : vector<8x128xf32>
    %190 = arith.addf %186, %189 : vector<8x128xf32>
    %191 = math.tanh %190 : vector<8x128xf32>
    %192 = arith.subf %157, %191 : vector<8x128xf32>
    %193 = arith.mulf %185, %192 : vector<8x128xf32>
    %194 = arith.addf %191, %193 : vector<8x128xf32>
    %195 = arith.index_cast %c4_i32 : i32 to index
    %c0_67 = arith.constant 0 : index
    %c0_68 = arith.constant 0 : index
    %196 = vector.load %arg13[%195, %c0_67, %c0_68] : memref<8x8x128xf32, #tpu.memory_space<vmem>>, vector<1x8x128xf32>
    %197 = vector.shape_cast %196 : vector<1x8x128xf32> to vector<8x128xf32>
    %198 = vector.shape_cast %194 : vector<8x128xf32> to vector<1x8x128xf32>
    tpu.vector_store %arg13[%195, %c0_67, %c0_68], %198 {strides = array<i32>} : memref<8x8x128xf32, #tpu.memory_space<vmem>>, vector<1x8x128xf32>,
    %c5_i32 = arith.constant 5 : i32
    %199 = arith.index_cast %c5_i32 : i32 to index
    %c0_69 = arith.constant 0 : index
    %c0_70 = arith.constant 0 : index
    %200 = vector.load %arg14[%199, %c0_69, %c0_70] : memref<8x8x384xf32, #tpu.memory_space<vmem>>, vector<1x8x384xf32>
    %201 = vector.shape_cast %200 : vector<1x8x384xf32> to vector<8x384xf32>
    %cst_71 = arith.constant dense<0.000000e+00> : vector<8x384xf32>
    %202 = tpu.matmul %194, %1, %cst_71 {dimension_numbers = #tpu.dot_dimension_numbers<[1], [0], [0], [1], [0, 0, 1, 1], [], []>} : vector<8x128xf32>, vector<128x384xf32>, vector<8x384xf32> -> vector<8x384xf32>
    %203 = vector.extract_strided_slice %201 {offsets = [0, 0], sizes = [8, 128], strides = [1, 1]} : vector<8x384xf32> to vector<8x128xf32>
    %204 = vector.extract_strided_slice %202 {offsets = [0, 0], sizes = [8, 128], strides = [1, 1]} : vector<8x384xf32> to vector<8x128xf32>
    %205 = arith.addf %203, %204 : vector<8x128xf32>
    %cst_72 = arith.constant 5.000000e-01 : f32
    %206 = vector.broadcast %cst_72 : f32 to vector<8x128xf32>
    %207 = arith.mulf %206, %205 : vector<8x128xf32>
    %208 = math.tanh %207 : vector<8x128xf32>
    %cst_73 = arith.constant 5.000000e-01 : f32
    %209 = vector.broadcast %cst_73 : f32 to vector<8x128xf32>
    %210 = arith.mulf %209, %208 : vector<8x128xf32>
    %cst_74 = arith.constant 5.000000e-01 : f32
    %211 = vector.broadcast %cst_74 : f32 to vector<8x128xf32>
    %212 = arith.addf %210, %211 : vector<8x128xf32>
    %213 = vector.extract_strided_slice %201 {offsets = [0, 128], sizes = [8, 128], strides = [1, 1]} : vector<8x384xf32> to vector<8x128xf32>
    %214 = vector.extract_strided_slice %202 {offsets = [0, 128], sizes = [8, 128], strides = [1, 1]} : vector<8x384xf32> to vector<8x128xf32>
    %215 = arith.addf %213, %214 : vector<8x128xf32>
    %cst_75 = arith.constant 5.000000e-01 : f32
    %216 = vector.broadcast %cst_75 : f32 to vector<8x128xf32>
    %217 = arith.mulf %216, %215 : vector<8x128xf32>
    %218 = math.tanh %217 : vector<8x128xf32>
    %cst_76 = arith.constant 5.000000e-01 : f32
    %219 = vector.broadcast %cst_76 : f32 to vector<8x128xf32>
    %220 = arith.mulf %219, %218 : vector<8x128xf32>
    %cst_77 = arith.constant 5.000000e-01 : f32
    %221 = vector.broadcast %cst_77 : f32 to vector<8x128xf32>
    %222 = arith.addf %220, %221 : vector<8x128xf32>
    %223 = vector.extract_strided_slice %201 {offsets = [0, 256], sizes = [8, 128], strides = [1, 1]} : vector<8x384xf32> to vector<8x128xf32>
    %224 = vector.extract_strided_slice %202 {offsets = [0, 256], sizes = [8, 128], strides = [1, 1]} : vector<8x384xf32> to vector<8x128xf32>
    %225 = arith.addf %224, %12 : vector<8x128xf32>
    %226 = arith.mulf %212, %225 : vector<8x128xf32>
    %227 = arith.addf %223, %226 : vector<8x128xf32>
    %228 = math.tanh %227 : vector<8x128xf32>
    %229 = arith.subf %194, %228 : vector<8x128xf32>
    %230 = arith.mulf %222, %229 : vector<8x128xf32>
    %231 = arith.addf %228, %230 : vector<8x128xf32>
    %232 = arith.index_cast %c5_i32 : i32 to index
    %c0_78 = arith.constant 0 : index
    %c0_79 = arith.constant 0 : index
    %233 = vector.load %arg13[%232, %c0_78, %c0_79] : memref<8x8x128xf32, #tpu.memory_space<vmem>>, vector<1x8x128xf32>
    %234 = vector.shape_cast %233 : vector<1x8x128xf32> to vector<8x128xf32>
    %235 = vector.shape_cast %231 : vector<8x128xf32> to vector<1x8x128xf32>
    tpu.vector_store %arg13[%232, %c0_78, %c0_79], %235 {strides = array<i32>} : memref<8x8x128xf32, #tpu.memory_space<vmem>>, vector<1x8x128xf32>,
    %c6_i32 = arith.constant 6 : i32
    %236 = arith.index_cast %c6_i32 : i32 to index
    %c0_80 = arith.constant 0 : index
    %c0_81 = arith.constant 0 : index
    %237 = vector.load %arg14[%236, %c0_80, %c0_81] : memref<8x8x384xf32, #tpu.memory_space<vmem>>, vector<1x8x384xf32>
    %238 = vector.shape_cast %237 : vector<1x8x384xf32> to vector<8x384xf32>
    %cst_82 = arith.constant dense<0.000000e+00> : vector<8x384xf32>
    %239 = tpu.matmul %231, %1, %cst_82 {dimension_numbers = #tpu.dot_dimension_numbers<[1], [0], [0], [1], [0, 0, 1, 1], [], []>} : vector<8x128xf32>, vector<128x384xf32>, vector<8x384xf32> -> vector<8x384xf32>
    %240 = vector.extract_strided_slice %238 {offsets = [0, 0], sizes = [8, 128], strides = [1, 1]} : vector<8x384xf32> to vector<8x128xf32>
    %241 = vector.extract_strided_slice %239 {offsets = [0, 0], sizes = [8, 128], strides = [1, 1]} : vector<8x384xf32> to vector<8x128xf32>
    %242 = arith.addf %240, %241 : vector<8x128xf32>
    %cst_83 = arith.constant 5.000000e-01 : f32
    %243 = vector.broadcast %cst_83 : f32 to vector<8x128xf32>
    %244 = arith.mulf %243, %242 : vector<8x128xf32>
    %245 = math.tanh %244 : vector<8x128xf32>
    %cst_84 = arith.constant 5.000000e-01 : f32
    %246 = vector.broadcast %cst_84 : f32 to vector<8x128xf32>
    %247 = arith.mulf %246, %245 : vector<8x128xf32>
    %cst_85 = arith.constant 5.000000e-01 : f32
    %248 = vector.broadcast %cst_85 : f32 to vector<8x128xf32>
    %249 = arith.addf %247, %248 : vector<8x128xf32>
    %250 = vector.extract_strided_slice %238 {offsets = [0, 128], sizes = [8, 128], strides = [1, 1]} : vector<8x384xf32> to vector<8x128xf32>
    %251 = vector.extract_strided_slice %239 {offsets = [0, 128], sizes = [8, 128], strides = [1, 1]} : vector<8x384xf32> to vector<8x128xf32>
    %252 = arith.addf %250, %251 : vector<8x128xf32>
    %cst_86 = arith.constant 5.000000e-01 : f32
    %253 = vector.broadcast %cst_86 : f32 to vector<8x128xf32>
    %254 = arith.mulf %253, %252 : vector<8x128xf32>
    %255 = math.tanh %254 : vector<8x128xf32>
    %cst_87 = arith.constant 5.000000e-01 : f32
    %256 = vector.broadcast %cst_87 : f32 to vector<8x128xf32>
    %257 = arith.mulf %256, %255 : vector<8x128xf32>
    %cst_88 = arith.constant 5.000000e-01 : f32
    %258 = vector.broadcast %cst_88 : f32 to vector<8x128xf32>
    %259 = arith.addf %257, %258 : vector<8x128xf32>
    %260 = vector.extract_strided_slice %238 {offsets = [0, 256], sizes = [8, 128], strides = [1, 1]} : vector<8x384xf32> to vector<8x128xf32>
    %261 = vector.extract_strided_slice %239 {offsets = [0, 256], sizes = [8, 128], strides = [1, 1]} : vector<8x384xf32> to vector<8x128xf32>
    %262 = arith.addf %261, %12 : vector<8x128xf32>
    %263 = arith.mulf %249, %262 : vector<8x128xf32>
    %264 = arith.addf %260, %263 : vector<8x128xf32>
    %265 = math.tanh %264 : vector<8x128xf32>
    %266 = arith.subf %231, %265 : vector<8x128xf32>
    %267 = arith.mulf %259, %266 : vector<8x128xf32>
    %268 = arith.addf %265, %267 : vector<8x128xf32>
    %269 = arith.index_cast %c6_i32 : i32 to index
    %c0_89 = arith.constant 0 : index
    %c0_90 = arith.constant 0 : index
    %270 = vector.load %arg13[%269, %c0_89, %c0_90] : memref<8x8x128xf32, #tpu.memory_space<vmem>>, vector<1x8x128xf32>
    %271 = vector.shape_cast %270 : vector<1x8x128xf32> to vector<8x128xf32>
    %272 = vector.shape_cast %268 : vector<8x128xf32> to vector<1x8x128xf32>
    tpu.vector_store %arg13[%269, %c0_89, %c0_90], %272 {strides = array<i32>} : memref<8x8x128xf32, #tpu.memory_space<vmem>>, vector<1x8x128xf32>,
    %c7_i32 = arith.constant 7 : i32
    %273 = arith.index_cast %c7_i32 : i32 to index
    %c0_91 = arith.constant 0 : index
    %c0_92 = arith.constant 0 : index
    %274 = vector.load %arg14[%273, %c0_91, %c0_92] : memref<8x8x384xf32, #tpu.memory_space<vmem>>, vector<1x8x384xf32>
    %275 = vector.shape_cast %274 : vector<1x8x384xf32> to vector<8x384xf32>
    %cst_93 = arith.constant dense<0.000000e+00> : vector<8x384xf32>
    %276 = tpu.matmul %268, %1, %cst_93 {dimension_numbers = #tpu.dot_dimension_numbers<[1], [0], [0], [1], [0, 0, 1, 1], [], []>} : vector<8x128xf32>, vector<128x384xf32>, vector<8x384xf32> -> vector<8x384xf32>
    %277 = vector.extract_strided_slice %275 {offsets = [0, 0], sizes = [8, 128], strides = [1, 1]} : vector<8x384xf32> to vector<8x128xf32>
    %278 = vector.extract_strided_slice %276 {offsets = [0, 0], sizes = [8, 128], strides = [1, 1]} : vector<8x384xf32> to vector<8x128xf32>
    %279 = arith.addf %277, %278 : vector<8x128xf32>
    %cst_94 = arith.constant 5.000000e-01 : f32
    %280 = vector.broadcast %cst_94 : f32 to vector<8x128xf32>
    %281 = arith.mulf %280, %279 : vector<8x128xf32>
    %282 = math.tanh %281 : vector<8x128xf32>
    %cst_95 = arith.constant 5.000000e-01 : f32
    %283 = vector.broadcast %cst_95 : f32 to vector<8x128xf32>
    %284 = arith.mulf %283, %282 : vector<8x128xf32>
    %cst_96 = arith.constant 5.000000e-01 : f32
    %285 = vector.broadcast %cst_96 : f32 to vector<8x128xf32>
    %286 = arith.addf %284, %285 : vector<8x128xf32>
    %287 = vector.extract_strided_slice %275 {offsets = [0, 128], sizes = [8, 128], strides = [1, 1]} : vector<8x384xf32> to vector<8x128xf32>
    %288 = vector.extract_strided_slice %276 {offsets = [0, 128], sizes = [8, 128], strides = [1, 1]} : vector<8x384xf32> to vector<8x128xf32>
    %289 = arith.addf %287, %288 : vector<8x128xf32>
    %cst_97 = arith.constant 5.000000e-01 : f32
    %290 = vector.broadcast %cst_97 : f32 to vector<8x128xf32>
    %291 = arith.mulf %290, %289 : vector<8x128xf32>
    %292 = math.tanh %291 : vector<8x128xf32>
    %cst_98 = arith.constant 5.000000e-01 : f32
    %293 = vector.broadcast %cst_98 : f32 to vector<8x128xf32>
    %294 = arith.mulf %293, %292 : vector<8x128xf32>
    %cst_99 = arith.constant 5.000000e-01 : f32
    %295 = vector.broadcast %cst_99 : f32 to vector<8x128xf32>
    %296 = arith.addf %294, %295 : vector<8x128xf32>
    %297 = vector.extract_strided_slice %275 {offsets = [0, 256], sizes = [8, 128], strides = [1, 1]} : vector<8x384xf32> to vector<8x128xf32>
    %298 = vector.extract_strided_slice %276 {offsets = [0, 256], sizes = [8, 128], strides = [1, 1]} : vector<8x384xf32> to vector<8x128xf32>
    %299 = arith.addf %298, %12 : vector<8x128xf32>
    %300 = arith.mulf %286, %299 : vector<8x128xf32>
    %301 = arith.addf %297, %300 : vector<8x128xf32>
    %302 = math.tanh %301 : vector<8x128xf32>
    %303 = arith.subf %268, %302 : vector<8x128xf32>
    %304 = arith.mulf %296, %303 : vector<8x128xf32>
    %305 = arith.addf %302, %304 : vector<8x128xf32>
    %306 = arith.index_cast %c7_i32 : i32 to index
    %c0_100 = arith.constant 0 : index
    %c0_101 = arith.constant 0 : index
    %307 = vector.load %arg13[%306, %c0_100, %c0_101] : memref<8x8x128xf32, #tpu.memory_space<vmem>>, vector<1x8x128xf32>
    %308 = vector.shape_cast %307 : vector<1x8x128xf32> to vector<8x128xf32>
    %309 = vector.shape_cast %305 : vector<8x128xf32> to vector<1x8x128xf32>
    tpu.vector_store %arg13[%306, %c0_100, %c0_101], %309 {strides = array<i32>} : memref<8x8x128xf32, #tpu.memory_space<vmem>>, vector<1x8x128xf32>,
    %c8_i32 = arith.constant 8 : i32
    %c0_102 = arith.constant 0 : index
    %c0_103 = arith.constant 0 : index
    %310 = vector.load %arg6[%c0_102, %c0_103] : memref<128x384xf32, #tpu.memory_space<vmem>>, vector<128x384xf32>
    %c0_104 = arith.constant 0 : index
    %c0_105 = arith.constant 0 : index
    %311 = vector.load %arg7[%c0_104, %c0_105] : memref<128x384xf32, #tpu.memory_space<vmem>>, vector<128x384xf32>
    %c0_106 = arith.constant 0 : index
    %c0_107 = arith.constant 0 : index
    %312 = vector.load %arg8[%c0_106, %c0_107] : memref<1x384xf32, #tpu.memory_space<vmem>>, vector<1x384xf32>
    %c0_108 = arith.constant 0 : index
    %c0_109 = arith.constant 0 : index
    %313 = vector.load %arg9[%c0_108, %c0_109] : memref<1x128xf32, #tpu.memory_space<vmem>>, vector<1x128xf32>
    %c0_110 = arith.constant 0 : index
    %c0_111 = arith.constant 0 : index
    %c0_112 = arith.constant 0 : index
    %314 = vector.load %arg13[%c0_110, %c0_111, %c0_112] : memref<8x8x128xf32, #tpu.memory_space<vmem>>, vector<8x8x128xf32>
    %315 = vector.shape_cast %314 : vector<8x8x128xf32> to vector<64x128xf32>
    %cst_113 = arith.constant dense<0.000000e+00> : vector<64x384xf32>
    %316 = tpu.matmul %315, %310, %cst_113 {dimension_numbers = #tpu.dot_dimension_numbers<[1], [0], [0], [1], [0, 0, 1, 1], [], []>} : vector<64x128xf32>, vector<128x384xf32>, vector<64x384xf32> -> vector<64x384xf32>
    %317 = vector.broadcast %312 : vector<1x384xf32> to vector<64x384xf32>
    %318 = arith.addf %316, %317 : vector<64x384xf32>
    %319 = vector.shape_cast %318 : vector<64x384xf32> to vector<8x8x384xf32>
    %c0_114 = arith.constant 0 : index
    %c0_115 = arith.constant 0 : index
    %c0_116 = arith.constant 0 : index
    %320 = vector.load %arg14[%c0_114, %c0_115, %c0_116] : memref<8x8x384xf32, #tpu.memory_space<vmem>>, vector<8x8x384xf32>
    tpu.vector_store %arg14[%c0_114, %c0_115, %c0_116], %319 {strides = array<i32>} : memref<8x8x384xf32, #tpu.memory_space<vmem>>, vector<8x8x384xf32>,
    %321 = vector.shape_cast %313 : vector<1x128xf32> to vector<1x128xf32>
    %322 = vector.broadcast %321 : vector<1x128xf32> to vector<8x128xf32>
    %cst_117 = arith.constant 0.000000e+00 : f32
    %323 = vector.broadcast %cst_117 : f32 to vector<8x128xf32>
    %c0_i32_118 = arith.constant 0 : i32
    %324 = arith.index_cast %c0_i32_118 : i32 to index
    %c0_119 = arith.constant 0 : index
    %c0_120 = arith.constant 0 : index
    %325 = vector.load %arg14[%324, %c0_119, %c0_120] : memref<8x8x384xf32, #tpu.memory_space<vmem>>, vector<1x8x384xf32>
    %326 = vector.shape_cast %325 : vector<1x8x384xf32> to vector<8x384xf32>
    %cst_121 = arith.constant dense<0.000000e+00> : vector<8x384xf32>
    %327 = tpu.matmul %323, %311, %cst_121 {dimension_numbers = #tpu.dot_dimension_numbers<[1], [0], [0], [1], [0, 0, 1, 1], [], []>} : vector<8x128xf32>, vector<128x384xf32>, vector<8x384xf32> -> vector<8x384xf32>
    %328 = vector.extract_strided_slice %326 {offsets = [0, 0], sizes = [8, 128], strides = [1, 1]} : vector<8x384xf32> to vector<8x128xf32>
    %329 = vector.extract_strided_slice %327 {offsets = [0, 0], sizes = [8, 128], strides = [1, 1]} : vector<8x384xf32> to vector<8x128xf32>
    %330 = arith.addf %328, %329 : vector<8x128xf32>
    %cst_122 = arith.constant 5.000000e-01 : f32
    %331 = vector.broadcast %cst_122 : f32 to vector<8x128xf32>
    %332 = arith.mulf %331, %330 : vector<8x128xf32>
    %333 = math.tanh %332 : vector<8x128xf32>
    %cst_123 = arith.constant 5.000000e-01 : f32
    %334 = vector.broadcast %cst_123 : f32 to vector<8x128xf32>
    %335 = arith.mulf %334, %333 : vector<8x128xf32>
    %cst_124 = arith.constant 5.000000e-01 : f32
    %336 = vector.broadcast %cst_124 : f32 to vector<8x128xf32>
    %337 = arith.addf %335, %336 : vector<8x128xf32>
    %338 = vector.extract_strided_slice %326 {offsets = [0, 128], sizes = [8, 128], strides = [1, 1]} : vector<8x384xf32> to vector<8x128xf32>
    %339 = vector.extract_strided_slice %327 {offsets = [0, 128], sizes = [8, 128], strides = [1, 1]} : vector<8x384xf32> to vector<8x128xf32>
    %340 = arith.addf %338, %339 : vector<8x128xf32>
    %cst_125 = arith.constant 5.000000e-01 : f32
    %341 = vector.broadcast %cst_125 : f32 to vector<8x128xf32>
    %342 = arith.mulf %341, %340 : vector<8x128xf32>
    %343 = math.tanh %342 : vector<8x128xf32>
    %cst_126 = arith.constant 5.000000e-01 : f32
    %344 = vector.broadcast %cst_126 : f32 to vector<8x128xf32>
    %345 = arith.mulf %344, %343 : vector<8x128xf32>
    %cst_127 = arith.constant 5.000000e-01 : f32
    %346 = vector.broadcast %cst_127 : f32 to vector<8x128xf32>
    %347 = arith.addf %345, %346 : vector<8x128xf32>
    %348 = vector.extract_strided_slice %326 {offsets = [0, 256], sizes = [8, 128], strides = [1, 1]} : vector<8x384xf32> to vector<8x128xf32>
    %349 = vector.extract_strided_slice %327 {offsets = [0, 256], sizes = [8, 128], strides = [1, 1]} : vector<8x384xf32> to vector<8x128xf32>
    %350 = arith.addf %349, %322 : vector<8x128xf32>
    %351 = arith.mulf %337, %350 : vector<8x128xf32>
    %352 = arith.addf %348, %351 : vector<8x128xf32>
    %353 = math.tanh %352 : vector<8x128xf32>
    %354 = arith.subf %323, %353 : vector<8x128xf32>
    %355 = arith.mulf %347, %354 : vector<8x128xf32>
    %356 = arith.addf %353, %355 : vector<8x128xf32>
    %c1_i32_128 = arith.constant 1 : i32
    %357 = arith.index_cast %c1_i32_128 : i32 to index
    %c0_129 = arith.constant 0 : index
    %c0_130 = arith.constant 0 : index
    %358 = vector.load %arg14[%357, %c0_129, %c0_130] : memref<8x8x384xf32, #tpu.memory_space<vmem>>, vector<1x8x384xf32>
    %359 = vector.shape_cast %358 : vector<1x8x384xf32> to vector<8x384xf32>
    %cst_131 = arith.constant dense<0.000000e+00> : vector<8x384xf32>
    %360 = tpu.matmul %356, %311, %cst_131 {dimension_numbers = #tpu.dot_dimension_numbers<[1], [0], [0], [1], [0, 0, 1, 1], [], []>} : vector<8x128xf32>, vector<128x384xf32>, vector<8x384xf32> -> vector<8x384xf32>
    %361 = vector.extract_strided_slice %359 {offsets = [0, 0], sizes = [8, 128], strides = [1, 1]} : vector<8x384xf32> to vector<8x128xf32>
    %362 = vector.extract_strided_slice %360 {offsets = [0, 0], sizes = [8, 128], strides = [1, 1]} : vector<8x384xf32> to vector<8x128xf32>
    %363 = arith.addf %361, %362 : vector<8x128xf32>
    %cst_132 = arith.constant 5.000000e-01 : f32
    %364 = vector.broadcast %cst_132 : f32 to vector<8x128xf32>
    %365 = arith.mulf %364, %363 : vector<8x128xf32>
    %366 = math.tanh %365 : vector<8x128xf32>
    %cst_133 = arith.constant 5.000000e-01 : f32
    %367 = vector.broadcast %cst_133 : f32 to vector<8x128xf32>
    %368 = arith.mulf %367, %366 : vector<8x128xf32>
    %cst_134 = arith.constant 5.000000e-01 : f32
    %369 = vector.broadcast %cst_134 : f32 to vector<8x128xf32>
    %370 = arith.addf %368, %369 : vector<8x128xf32>
    %371 = vector.extract_strided_slice %359 {offsets = [0, 128], sizes = [8, 128], strides = [1, 1]} : vector<8x384xf32> to vector<8x128xf32>
    %372 = vector.extract_strided_slice %360 {offsets = [0, 128], sizes = [8, 128], strides = [1, 1]} : vector<8x384xf32> to vector<8x128xf32>
    %373 = arith.addf %371, %372 : vector<8x128xf32>
    %cst_135 = arith.constant 5.000000e-01 : f32
    %374 = vector.broadcast %cst_135 : f32 to vector<8x128xf32>
    %375 = arith.mulf %374, %373 : vector<8x128xf32>
    %376 = math.tanh %375 : vector<8x128xf32>
    %cst_136 = arith.constant 5.000000e-01 : f32
    %377 = vector.broadcast %cst_136 : f32 to vector<8x128xf32>
    %378 = arith.mulf %377, %376 : vector<8x128xf32>
    %cst_137 = arith.constant 5.000000e-01 : f32
    %379 = vector.broadcast %cst_137 : f32 to vector<8x128xf32>
    %380 = arith.addf %378, %379 : vector<8x128xf32>
    %381 = vector.extract_strided_slice %359 {offsets = [0, 256], sizes = [8, 128], strides = [1, 1]} : vector<8x384xf32> to vector<8x128xf32>
    %382 = vector.extract_strided_slice %360 {offsets = [0, 256], sizes = [8, 128], strides = [1, 1]} : vector<8x384xf32> to vector<8x128xf32>
    %383 = arith.addf %382, %322 : vector<8x128xf32>
    %384 = arith.mulf %370, %383 : vector<8x128xf32>
    %385 = arith.addf %381, %384 : vector<8x128xf32>
    %386 = math.tanh %385 : vector<8x128xf32>
    %387 = arith.subf %356, %386 : vector<8x128xf32>
    %388 = arith.mulf %380, %387 : vector<8x128xf32>
    %389 = arith.addf %386, %388 : vector<8x128xf32>
    %c2_i32_138 = arith.constant 2 : i32
    %390 = arith.index_cast %c2_i32_138 : i32 to index
    %c0_139 = arith.constant 0 : index
    %c0_140 = arith.constant 0 : index
    %391 = vector.load %arg14[%390, %c0_139, %c0_140] : memref<8x8x384xf32, #tpu.memory_space<vmem>>, vector<1x8x384xf32>
    %392 = vector.shape_cast %391 : vector<1x8x384xf32> to vector<8x384xf32>
    %cst_141 = arith.constant dense<0.000000e+00> : vector<8x384xf32>
    %393 = tpu.matmul %389, %311, %cst_141 {dimension_numbers = #tpu.dot_dimension_numbers<[1], [0], [0], [1], [0, 0, 1, 1], [], []>} : vector<8x128xf32>, vector<128x384xf32>, vector<8x384xf32> -> vector<8x384xf32>
    %394 = vector.extract_strided_slice %392 {offsets = [0, 0], sizes = [8, 128], strides = [1, 1]} : vector<8x384xf32> to vector<8x128xf32>
    %395 = vector.extract_strided_slice %393 {offsets = [0, 0], sizes = [8, 128], strides = [1, 1]} : vector<8x384xf32> to vector<8x128xf32>
    %396 = arith.addf %394, %395 : vector<8x128xf32>
    %cst_142 = arith.constant 5.000000e-01 : f32
    %397 = vector.broadcast %cst_142 : f32 to vector<8x128xf32>
    %398 = arith.mulf %397, %396 : vector<8x128xf32>
    %399 = math.tanh %398 : vector<8x128xf32>
    %cst_143 = arith.constant 5.000000e-01 : f32
    %400 = vector.broadcast %cst_143 : f32 to vector<8x128xf32>
    %401 = arith.mulf %400, %399 : vector<8x128xf32>
    %cst_144 = arith.constant 5.000000e-01 : f32
    %402 = vector.broadcast %cst_144 : f32 to vector<8x128xf32>
    %403 = arith.addf %401, %402 : vector<8x128xf32>
    %404 = vector.extract_strided_slice %392 {offsets = [0, 128], sizes = [8, 128], strides = [1, 1]} : vector<8x384xf32> to vector<8x128xf32>
    %405 = vector.extract_strided_slice %393 {offsets = [0, 128], sizes = [8, 128], strides = [1, 1]} : vector<8x384xf32> to vector<8x128xf32>
    %406 = arith.addf %404, %405 : vector<8x128xf32>
    %cst_145 = arith.constant 5.000000e-01 : f32
    %407 = vector.broadcast %cst_145 : f32 to vector<8x128xf32>
    %408 = arith.mulf %407, %406 : vector<8x128xf32>
    %409 = math.tanh %408 : vector<8x128xf32>
    %cst_146 = arith.constant 5.000000e-01 : f32
    %410 = vector.broadcast %cst_146 : f32 to vector<8x128xf32>
    %411 = arith.mulf %410, %409 : vector<8x128xf32>
    %cst_147 = arith.constant 5.000000e-01 : f32
    %412 = vector.broadcast %cst_147 : f32 to vector<8x128xf32>
    %413 = arith.addf %411, %412 : vector<8x128xf32>
    %414 = vector.extract_strided_slice %392 {offsets = [0, 256], sizes = [8, 128], strides = [1, 1]} : vector<8x384xf32> to vector<8x128xf32>
    %415 = vector.extract_strided_slice %393 {offsets = [0, 256], sizes = [8, 128], strides = [1, 1]} : vector<8x384xf32> to vector<8x128xf32>
    %416 = arith.addf %415, %322 : vector<8x128xf32>
    %417 = arith.mulf %403, %416 : vector<8x128xf32>
    %418 = arith.addf %414, %417 : vector<8x128xf32>
    %419 = math.tanh %418 : vector<8x128xf32>
    %420 = arith.subf %389, %419 : vector<8x128xf32>
    %421 = arith.mulf %413, %420 : vector<8x128xf32>
    %422 = arith.addf %419, %421 : vector<8x128xf32>
    %c3_i32_148 = arith.constant 3 : i32
    %423 = arith.index_cast %c3_i32_148 : i32 to index
    %c0_149 = arith.constant 0 : index
    %c0_150 = arith.constant 0 : index
    %424 = vector.load %arg14[%423, %c0_149, %c0_150] : memref<8x8x384xf32, #tpu.memory_space<vmem>>, vector<1x8x384xf32>
    %425 = vector.shape_cast %424 : vector<1x8x384xf32> to vector<8x384xf32>
    %cst_151 = arith.constant dense<0.000000e+00> : vector<8x384xf32>
    %426 = tpu.matmul %422, %311, %cst_151 {dimension_numbers = #tpu.dot_dimension_numbers<[1], [0], [0], [1], [0, 0, 1, 1], [], []>} : vector<8x128xf32>, vector<128x384xf32>, vector<8x384xf32> -> vector<8x384xf32>
    %427 = vector.extract_strided_slice %425 {offsets = [0, 0], sizes = [8, 128], strides = [1, 1]} : vector<8x384xf32> to vector<8x128xf32>
    %428 = vector.extract_strided_slice %426 {offsets = [0, 0], sizes = [8, 128], strides = [1, 1]} : vector<8x384xf32> to vector<8x128xf32>
    %429 = arith.addf %427, %428 : vector<8x128xf32>
    %cst_152 = arith.constant 5.000000e-01 : f32
    %430 = vector.broadcast %cst_152 : f32 to vector<8x128xf32>
    %431 = arith.mulf %430, %429 : vector<8x128xf32>
    %432 = math.tanh %431 : vector<8x128xf32>
    %cst_153 = arith.constant 5.000000e-01 : f32
    %433 = vector.broadcast %cst_153 : f32 to vector<8x128xf32>
    %434 = arith.mulf %433, %432 : vector<8x128xf32>
    %cst_154 = arith.constant 5.000000e-01 : f32
    %435 = vector.broadcast %cst_154 : f32 to vector<8x128xf32>
    %436 = arith.addf %434, %435 : vector<8x128xf32>
    %437 = vector.extract_strided_slice %425 {offsets = [0, 128], sizes = [8, 128], strides = [1, 1]} : vector<8x384xf32> to vector<8x128xf32>
    %438 = vector.extract_strided_slice %426 {offsets = [0, 128], sizes = [8, 128], strides = [1, 1]} : vector<8x384xf32> to vector<8x128xf32>
    %439 = arith.addf %437, %438 : vector<8x128xf32>
    %cst_155 = arith.constant 5.000000e-01 : f32
    %440 = vector.broadcast %cst_155 : f32 to vector<8x128xf32>
    %441 = arith.mulf %440, %439 : vector<8x128xf32>
    %442 = math.tanh %441 : vector<8x128xf32>
    %cst_156 = arith.constant 5.000000e-01 : f32
    %443 = vector.broadcast %cst_156 : f32 to vector<8x128xf32>
    %444 = arith.mulf %443, %442 : vector<8x128xf32>
    %cst_157 = arith.constant 5.000000e-01 : f32
    %445 = vector.broadcast %cst_157 : f32 to vector<8x128xf32>
    %446 = arith.addf %444, %445 : vector<8x128xf32>
    %447 = vector.extract_strided_slice %425 {offsets = [0, 256], sizes = [8, 128], strides = [1, 1]} : vector<8x384xf32> to vector<8x128xf32>
    %448 = vector.extract_strided_slice %426 {offsets = [0, 256], sizes = [8, 128], strides = [1, 1]} : vector<8x384xf32> to vector<8x128xf32>
    %449 = arith.addf %448, %322 : vector<8x128xf32>
    %450 = arith.mulf %436, %449 : vector<8x128xf32>
    %451 = arith.addf %447, %450 : vector<8x128xf32>
    %452 = math.tanh %451 : vector<8x128xf32>
    %453 = arith.subf %422, %452 : vector<8x128xf32>
    %454 = arith.mulf %446, %453 : vector<8x128xf32>
    %455 = arith.addf %452, %454 : vector<8x128xf32>
    %c4_i32_158 = arith.constant 4 : i32
    %456 = arith.index_cast %c4_i32_158 : i32 to index
    %c0_159 = arith.constant 0 : index
    %c0_160 = arith.constant 0 : index
    %457 = vector.load %arg14[%456, %c0_159, %c0_160] : memref<8x8x384xf32, #tpu.memory_space<vmem>>, vector<1x8x384xf32>
    %458 = vector.shape_cast %457 : vector<1x8x384xf32> to vector<8x384xf32>
    %cst_161 = arith.constant dense<0.000000e+00> : vector<8x384xf32>
    %459 = tpu.matmul %455, %311, %cst_161 {dimension_numbers = #tpu.dot_dimension_numbers<[1], [0], [0], [1], [0, 0, 1, 1], [], []>} : vector<8x128xf32>, vector<128x384xf32>, vector<8x384xf32> -> vector<8x384xf32>
    %460 = vector.extract_strided_slice %458 {offsets = [0, 0], sizes = [8, 128], strides = [1, 1]} : vector<8x384xf32> to vector<8x128xf32>
    %461 = vector.extract_strided_slice %459 {offsets = [0, 0], sizes = [8, 128], strides = [1, 1]} : vector<8x384xf32> to vector<8x128xf32>
    %462 = arith.addf %460, %461 : vector<8x128xf32>
    %cst_162 = arith.constant 5.000000e-01 : f32
    %463 = vector.broadcast %cst_162 : f32 to vector<8x128xf32>
    %464 = arith.mulf %463, %462 : vector<8x128xf32>
    %465 = math.tanh %464 : vector<8x128xf32>
    %cst_163 = arith.constant 5.000000e-01 : f32
    %466 = vector.broadcast %cst_163 : f32 to vector<8x128xf32>
    %467 = arith.mulf %466, %465 : vector<8x128xf32>
    %cst_164 = arith.constant 5.000000e-01 : f32
    %468 = vector.broadcast %cst_164 : f32 to vector<8x128xf32>
    %469 = arith.addf %467, %468 : vector<8x128xf32>
    %470 = vector.extract_strided_slice %458 {offsets = [0, 128], sizes = [8, 128], strides = [1, 1]} : vector<8x384xf32> to vector<8x128xf32>
    %471 = vector.extract_strided_slice %459 {offsets = [0, 128], sizes = [8, 128], strides = [1, 1]} : vector<8x384xf32> to vector<8x128xf32>
    %472 = arith.addf %470, %471 : vector<8x128xf32>
    %cst_165 = arith.constant 5.000000e-01 : f32
    %473 = vector.broadcast %cst_165 : f32 to vector<8x128xf32>
    %474 = arith.mulf %473, %472 : vector<8x128xf32>
    %475 = math.tanh %474 : vector<8x128xf32>
    %cst_166 = arith.constant 5.000000e-01 : f32
    %476 = vector.broadcast %cst_166 : f32 to vector<8x128xf32>
    %477 = arith.mulf %476, %475 : vector<8x128xf32>
    %cst_167 = arith.constant 5.000000e-01 : f32
    %478 = vector.broadcast %cst_167 : f32 to vector<8x128xf32>
    %479 = arith.addf %477, %478 : vector<8x128xf32>
    %480 = vector.extract_strided_slice %458 {offsets = [0, 256], sizes = [8, 128], strides = [1, 1]} : vector<8x384xf32> to vector<8x128xf32>
    %481 = vector.extract_strided_slice %459 {offsets = [0, 256], sizes = [8, 128], strides = [1, 1]} : vector<8x384xf32> to vector<8x128xf32>
    %482 = arith.addf %481, %322 : vector<8x128xf32>
    %483 = arith.mulf %469, %482 : vector<8x128xf32>
    %484 = arith.addf %480, %483 : vector<8x128xf32>
    %485 = math.tanh %484 : vector<8x128xf32>
    %486 = arith.subf %455, %485 : vector<8x128xf32>
    %487 = arith.mulf %479, %486 : vector<8x128xf32>
    %488 = arith.addf %485, %487 : vector<8x128xf32>
    %c5_i32_168 = arith.constant 5 : i32
    %489 = arith.index_cast %c5_i32_168 : i32 to index
    %c0_169 = arith.constant 0 : index
    %c0_170 = arith.constant 0 : index
    %490 = vector.load %arg14[%489, %c0_169, %c0_170] : memref<8x8x384xf32, #tpu.memory_space<vmem>>, vector<1x8x384xf32>
    %491 = vector.shape_cast %490 : vector<1x8x384xf32> to vector<8x384xf32>
    %cst_171 = arith.constant dense<0.000000e+00> : vector<8x384xf32>
    %492 = tpu.matmul %488, %311, %cst_171 {dimension_numbers = #tpu.dot_dimension_numbers<[1], [0], [0], [1], [0, 0, 1, 1], [], []>} : vector<8x128xf32>, vector<128x384xf32>, vector<8x384xf32> -> vector<8x384xf32>
    %493 = vector.extract_strided_slice %491 {offsets = [0, 0], sizes = [8, 128], strides = [1, 1]} : vector<8x384xf32> to vector<8x128xf32>
    %494 = vector.extract_strided_slice %492 {offsets = [0, 0], sizes = [8, 128], strides = [1, 1]} : vector<8x384xf32> to vector<8x128xf32>
    %495 = arith.addf %493, %494 : vector<8x128xf32>
    %cst_172 = arith.constant 5.000000e-01 : f32
    %496 = vector.broadcast %cst_172 : f32 to vector<8x128xf32>
    %497 = arith.mulf %496, %495 : vector<8x128xf32>
    %498 = math.tanh %497 : vector<8x128xf32>
    %cst_173 = arith.constant 5.000000e-01 : f32
    %499 = vector.broadcast %cst_173 : f32 to vector<8x128xf32>
    %500 = arith.mulf %499, %498 : vector<8x128xf32>
    %cst_174 = arith.constant 5.000000e-01 : f32
    %501 = vector.broadcast %cst_174 : f32 to vector<8x128xf32>
    %502 = arith.addf %500, %501 : vector<8x128xf32>
    %503 = vector.extract_strided_slice %491 {offsets = [0, 128], sizes = [8, 128], strides = [1, 1]} : vector<8x384xf32> to vector<8x128xf32>
    %504 = vector.extract_strided_slice %492 {offsets = [0, 128], sizes = [8, 128], strides = [1, 1]} : vector<8x384xf32> to vector<8x128xf32>
    %505 = arith.addf %503, %504 : vector<8x128xf32>
    %cst_175 = arith.constant 5.000000e-01 : f32
    %506 = vector.broadcast %cst_175 : f32 to vector<8x128xf32>
    %507 = arith.mulf %506, %505 : vector<8x128xf32>
    %508 = math.tanh %507 : vector<8x128xf32>
    %cst_176 = arith.constant 5.000000e-01 : f32
    %509 = vector.broadcast %cst_176 : f32 to vector<8x128xf32>
    %510 = arith.mulf %509, %508 : vector<8x128xf32>
    %cst_177 = arith.constant 5.000000e-01 : f32
    %511 = vector.broadcast %cst_177 : f32 to vector<8x128xf32>
    %512 = arith.addf %510, %511 : vector<8x128xf32>
    %513 = vector.extract_strided_slice %491 {offsets = [0, 256], sizes = [8, 128], strides = [1, 1]} : vector<8x384xf32> to vector<8x128xf32>
    %514 = vector.extract_strided_slice %492 {offsets = [0, 256], sizes = [8, 128], strides = [1, 1]} : vector<8x384xf32> to vector<8x128xf32>
    %515 = arith.addf %514, %322 : vector<8x128xf32>
    %516 = arith.mulf %502, %515 : vector<8x128xf32>
    %517 = arith.addf %513, %516 : vector<8x128xf32>
    %518 = math.tanh %517 : vector<8x128xf32>
    %519 = arith.subf %488, %518 : vector<8x128xf32>
    %520 = arith.mulf %512, %519 : vector<8x128xf32>
    %521 = arith.addf %518, %520 : vector<8x128xf32>
    %c6_i32_178 = arith.constant 6 : i32
    %522 = arith.index_cast %c6_i32_178 : i32 to index
    %c0_179 = arith.constant 0 : index
    %c0_180 = arith.constant 0 : index
    %523 = vector.load %arg14[%522, %c0_179, %c0_180] : memref<8x8x384xf32, #tpu.memory_space<vmem>>, vector<1x8x384xf32>
    %524 = vector.shape_cast %523 : vector<1x8x384xf32> to vector<8x384xf32>
    %cst_181 = arith.constant dense<0.000000e+00> : vector<8x384xf32>
    %525 = tpu.matmul %521, %311, %cst_181 {dimension_numbers = #tpu.dot_dimension_numbers<[1], [0], [0], [1], [0, 0, 1, 1], [], []>} : vector<8x128xf32>, vector<128x384xf32>, vector<8x384xf32> -> vector<8x384xf32>
    %526 = vector.extract_strided_slice %524 {offsets = [0, 0], sizes = [8, 128], strides = [1, 1]} : vector<8x384xf32> to vector<8x128xf32>
    %527 = vector.extract_strided_slice %525 {offsets = [0, 0], sizes = [8, 128], strides = [1, 1]} : vector<8x384xf32> to vector<8x128xf32>
    %528 = arith.addf %526, %527 : vector<8x128xf32>
    %cst_182 = arith.constant 5.000000e-01 : f32
    %529 = vector.broadcast %cst_182 : f32 to vector<8x128xf32>
    %530 = arith.mulf %529, %528 : vector<8x128xf32>
    %531 = math.tanh %530 : vector<8x128xf32>
    %cst_183 = arith.constant 5.000000e-01 : f32
    %532 = vector.broadcast %cst_183 : f32 to vector<8x128xf32>
    %533 = arith.mulf %532, %531 : vector<8x128xf32>
    %cst_184 = arith.constant 5.000000e-01 : f32
    %534 = vector.broadcast %cst_184 : f32 to vector<8x128xf32>
    %535 = arith.addf %533, %534 : vector<8x128xf32>
    %536 = vector.extract_strided_slice %524 {offsets = [0, 128], sizes = [8, 128], strides = [1, 1]} : vector<8x384xf32> to vector<8x128xf32>
    %537 = vector.extract_strided_slice %525 {offsets = [0, 128], sizes = [8, 128], strides = [1, 1]} : vector<8x384xf32> to vector<8x128xf32>
    %538 = arith.addf %536, %537 : vector<8x128xf32>
    %cst_185 = arith.constant 5.000000e-01 : f32
    %539 = vector.broadcast %cst_185 : f32 to vector<8x128xf32>
    %540 = arith.mulf %539, %538 : vector<8x128xf32>
    %541 = math.tanh %540 : vector<8x128xf32>
    %cst_186 = arith.constant 5.000000e-01 : f32
    %542 = vector.broadcast %cst_186 : f32 to vector<8x128xf32>
    %543 = arith.mulf %542, %541 : vector<8x128xf32>
    %cst_187 = arith.constant 5.000000e-01 : f32
    %544 = vector.broadcast %cst_187 : f32 to vector<8x128xf32>
    %545 = arith.addf %543, %544 : vector<8x128xf32>
    %546 = vector.extract_strided_slice %524 {offsets = [0, 256], sizes = [8, 128], strides = [1, 1]} : vector<8x384xf32> to vector<8x128xf32>
    %547 = vector.extract_strided_slice %525 {offsets = [0, 256], sizes = [8, 128], strides = [1, 1]} : vector<8x384xf32> to vector<8x128xf32>
    %548 = arith.addf %547, %322 : vector<8x128xf32>
    %549 = arith.mulf %535, %548 : vector<8x128xf32>
    %550 = arith.addf %546, %549 : vector<8x128xf32>
    %551 = math.tanh %550 : vector<8x128xf32>
    %552 = arith.subf %521, %551 : vector<8x128xf32>
    %553 = arith.mulf %545, %552 : vector<8x128xf32>
    %554 = arith.addf %551, %553 : vector<8x128xf32>
    %c7_i32_188 = arith.constant 7 : i32
    %555 = arith.index_cast %c7_i32_188 : i32 to index
    %c0_189 = arith.constant 0 : index
    %c0_190 = arith.constant 0 : index
    %556 = vector.load %arg14[%555, %c0_189, %c0_190] : memref<8x8x384xf32, #tpu.memory_space<vmem>>, vector<1x8x384xf32>
    %557 = vector.shape_cast %556 : vector<1x8x384xf32> to vector<8x384xf32>
    %cst_191 = arith.constant dense<0.000000e+00> : vector<8x384xf32>
    %558 = tpu.matmul %554, %311, %cst_191 {dimension_numbers = #tpu.dot_dimension_numbers<[1], [0], [0], [1], [0, 0, 1, 1], [], []>} : vector<8x128xf32>, vector<128x384xf32>, vector<8x384xf32> -> vector<8x384xf32>
    %559 = vector.extract_strided_slice %557 {offsets = [0, 0], sizes = [8, 128], strides = [1, 1]} : vector<8x384xf32> to vector<8x128xf32>
    %560 = vector.extract_strided_slice %558 {offsets = [0, 0], sizes = [8, 128], strides = [1, 1]} : vector<8x384xf32> to vector<8x128xf32>
    %561 = arith.addf %559, %560 : vector<8x128xf32>
    %cst_192 = arith.constant 5.000000e-01 : f32
    %562 = vector.broadcast %cst_192 : f32 to vector<8x128xf32>
    %563 = arith.mulf %562, %561 : vector<8x128xf32>
    %564 = math.tanh %563 : vector<8x128xf32>
    %cst_193 = arith.constant 5.000000e-01 : f32
    %565 = vector.broadcast %cst_193 : f32 to vector<8x128xf32>
    %566 = arith.mulf %565, %564 : vector<8x128xf32>
    %cst_194 = arith.constant 5.000000e-01 : f32
    %567 = vector.broadcast %cst_194 : f32 to vector<8x128xf32>
    %568 = arith.addf %566, %567 : vector<8x128xf32>
    %569 = vector.extract_strided_slice %557 {offsets = [0, 128], sizes = [8, 128], strides = [1, 1]} : vector<8x384xf32> to vector<8x128xf32>
    %570 = vector.extract_strided_slice %558 {offsets = [0, 128], sizes = [8, 128], strides = [1, 1]} : vector<8x384xf32> to vector<8x128xf32>
    %571 = arith.addf %569, %570 : vector<8x128xf32>
    %cst_195 = arith.constant 5.000000e-01 : f32
    %572 = vector.broadcast %cst_195 : f32 to vector<8x128xf32>
    %573 = arith.mulf %572, %571 : vector<8x128xf32>
    %574 = math.tanh %573 : vector<8x128xf32>
    %cst_196 = arith.constant 5.000000e-01 : f32
    %575 = vector.broadcast %cst_196 : f32 to vector<8x128xf32>
    %576 = arith.mulf %575, %574 : vector<8x128xf32>
    %cst_197 = arith.constant 5.000000e-01 : f32
    %577 = vector.broadcast %cst_197 : f32 to vector<8x128xf32>
    %578 = arith.addf %576, %577 : vector<8x128xf32>
    %579 = vector.extract_strided_slice %557 {offsets = [0, 256], sizes = [8, 128], strides = [1, 1]} : vector<8x384xf32> to vector<8x128xf32>
    %580 = vector.extract_strided_slice %558 {offsets = [0, 256], sizes = [8, 128], strides = [1, 1]} : vector<8x384xf32> to vector<8x128xf32>
    %581 = arith.addf %580, %322 : vector<8x128xf32>
    %582 = arith.mulf %568, %581 : vector<8x128xf32>
    %583 = arith.addf %579, %582 : vector<8x128xf32>
    %584 = math.tanh %583 : vector<8x128xf32>
    %585 = arith.subf %554, %584 : vector<8x128xf32>
    %586 = arith.mulf %578, %585 : vector<8x128xf32>
    %587 = arith.addf %584, %586 : vector<8x128xf32>
    %c8_i32_198 = arith.constant 8 : i32
    %c0_199 = arith.constant 0 : index
    %c0_200 = arith.constant 0 : index
    %588 = vector.load %arg10[%c0_199, %c0_200] : memref<128x4xf32, #tpu.memory_space<vmem>>, vector<128x4xf32>
    %cst_201 = arith.constant dense<0.000000e+00> : vector<8x4xf32>
    %589 = tpu.matmul %587, %588, %cst_201 {dimension_numbers = #tpu.dot_dimension_numbers<[1], [0], [0], [1], [0, 0, 1, 1], [], []>} : vector<8x128xf32>, vector<128x4xf32>, vector<8x4xf32> -> vector<8x4xf32>
    %c0_202 = arith.constant 0 : index
    %c0_203 = arith.constant 0 : index
    %590 = vector.load %arg11[%c0_202, %c0_203] : memref<1x4xf32, #tpu.memory_space<vmem>>, vector<1x4xf32>
    %591 = vector.broadcast %590 : vector<1x4xf32> to vector<8x4xf32>
    %592 = arith.addf %589, %591 : vector<8x4xf32>
    %c0_204 = arith.constant 0 : index
    %c0_205 = arith.constant 0 : index
    %593 = vector.load %arg12[%c0_204, %c0_205] : memref<8x4xf32, #tpu.memory_space<vmem>>, vector<8x4xf32>
    tpu.vector_store %arg12[%c0_204, %c0_205], %592 {strides = array<i32>} : memref<8x4xf32, #tpu.memory_space<vmem>>, vector<8x4xf32>,
    return
  }
  func.func @transform_0(%arg0: i32) -> (i32, i32, i32) {
    %c0_i32 = arith.constant 0 : i32
    %c0_i32_0 = arith.constant 0 : i32
    %c0_i32_1 = arith.constant 0 : i32
    return %c0_i32, %arg0, %c0_i32_0 : i32, i32, i32
  }
  func.func @transform_1(%arg0: i32) -> (i32, i32) {
    %c0_i32 = arith.constant 0 : i32
    %c0_i32_0 = arith.constant 0 : i32
    %c0_i32_1 = arith.constant 0 : i32
    return %c0_i32, %c0_i32_0 : i32, i32
  }
  func.func @transform_2(%arg0: i32) -> (i32, i32) {
    %c0_i32 = arith.constant 0 : i32
    %c0_i32_0 = arith.constant 0 : i32
    %c0_i32_1 = arith.constant 0 : i32
    return %c0_i32, %c0_i32_0 : i32, i32
  }
  func.func @transform_3(%arg0: i32) -> (i32, i32) {
    %c0_i32 = arith.constant 0 : i32
    %c0_i32_0 = arith.constant 0 : i32
    %c0_i32_1 = arith.constant 0 : i32
    return %c0_i32, %c0_i32_0 : i32, i32
  }
  func.func @transform_4(%arg0: i32) -> (i32, i32) {
    %c0_i32 = arith.constant 0 : i32
    %c0_i32_0 = arith.constant 0 : i32
    %c0_i32_1 = arith.constant 0 : i32
    return %c0_i32, %c0_i32_0 : i32, i32
  }
  func.func @transform_5(%arg0: i32) -> (i32, i32) {
    %c0_i32 = arith.constant 0 : i32
    %c0_i32_0 = arith.constant 0 : i32
    %c0_i32_1 = arith.constant 0 : i32
    return %c0_i32, %c0_i32_0 : i32, i32
  }
  func.func @transform_6(%arg0: i32) -> (i32, i32) {
    %c0_i32 = arith.constant 0 : i32
    %c0_i32_0 = arith.constant 0 : i32
    %c0_i32_1 = arith.constant 0 : i32
    return %c0_i32, %c0_i32_0 : i32, i32
  }
  func.func @transform_7(%arg0: i32) -> (i32, i32) {
    %c0_i32 = arith.constant 0 : i32
    %c0_i32_0 = arith.constant 0 : i32
    %c0_i32_1 = arith.constant 0 : i32
    return %c0_i32, %c0_i32_0 : i32, i32
  }
  func.func @transform_8(%arg0: i32) -> (i32, i32) {
    %c0_i32 = arith.constant 0 : i32
    %c0_i32_0 = arith.constant 0 : i32
    %c0_i32_1 = arith.constant 0 : i32
    return %c0_i32, %c0_i32_0 : i32, i32
  }
  func.func @transform_9(%arg0: i32) -> (i32, i32) {
    %c0_i32 = arith.constant 0 : i32
    %c0_i32_0 = arith.constant 0 : i32
    %c0_i32_1 = arith.constant 0 : i32
    return %c0_i32, %c0_i32_0 : i32, i32
  }
  func.func @transform_10(%arg0: i32) -> (i32, i32) {
    %c0_i32 = arith.constant 0 : i32
    %c0_i32_0 = arith.constant 0 : i32
    %c0_i32_1 = arith.constant 0 : i32
    return %c0_i32, %c0_i32_0 : i32, i32
  }
  func.func @transform_11(%arg0: i32) -> (i32, i32) {
    %c0_i32 = arith.constant 0 : i32
    %c0_i32_0 = arith.constant 0 : i32
    return %arg0, %c0_i32 : i32, i32
  }
}

</mosaic_0001>

<llo_original>
// kernel: gru_network_forward.1
$region0: #{gru_network_forward.1}
  #allocation0 [shape = 'u32[]', space=smem, size = 0x4, offset = 0x4, fixed_abs, tag = 'smem constant byte address 0x4 - core index']
  #allocation1 [shape = 'u32[144,128]{1,0:T(1,128)}', space=vmem, size = 0x12000, scoped, tag = 'internal scratch']
  #allocation2 [shape = 'f32[8,8,128]{2,1,0:T(8,128)}', space=vmem, size = 0x8000, scoped, tag = 'scratch operand']
  #allocation3 [shape = 'f32[8,8,384]{2,1,0:T(8,128)}', space=vmem, size = 0x18000, scoped, tag = 'scratch operand']
  %s0 = inlined_call_operand.vmem [shape: f32[8,8,128], index: 0, kind: input, shape index: {}]
  %s1 = inlined_call_operand.vmem [shape: f32[128,384], index: 1, kind: input, shape index: {}]
  %s2 = inlined_call_operand.vmem [shape: f32[128,384], index: 2, kind: input, shape index: {}]
  %s3 = inlined_call_operand.vmem [shape: f32[1,384], index: 3, kind: input, shape index: {}]
  %s4 = inlined_call_operand.vmem [shape: f32[1,128], index: 4, kind: input, shape index: {}]
  %s5 = inlined_call_operand.vmem [shape: f32[128,384], index: 5, kind: input, shape index: {}]
  %s6 = inlined_call_operand.vmem [shape: f32[128,384], index: 6, kind: input, shape index: {}]
  %s7 = inlined_call_operand.vmem [shape: f32[1,384], index: 7, kind: input, shape index: {}]
  %s8 = inlined_call_operand.vmem [shape: f32[1,128], index: 8, kind: input, shape index: {}]
  %s9 = inlined_call_operand.vmem [shape: f32[128,4], index: 9, kind: input, shape index: {}]
  %s10 = inlined_call_operand.vmem [shape: f32[1,4], index: 10, kind: input, shape index: {}]
  %s11 = inlined_call_operand.vmem [shape: f32[8,4], index: 11, kind: output, shape index: {}]
  %s12 = sld [smem:[#allocation0]]
  $region54: #{gru_network_forward.1} parent=0
    _
  %s14 = ssub.s32 1, %s12
  %s15 = scalar_select 0, %s14, %s12
  // Predicated region
  $region2: #{gru_network_forward.1} parent=0 // pred_check
    _
  $region3: #{gru_network_forward.1} parent=0 // pred_check_branch
    %17 = sbr.rel (0) target = $region5
  $region4: #{gru_network_forward.1} parent=0 // pred_region
    _
  $region5: #{gru_network_forward.1} parent=0 // pred_fallthru
    _
  // Predicated region
  $region6: #{gru_network_forward.1} parent=0 // pred_check
    _
  $region7: #{gru_network_forward.1} parent=0 // pred_check_branch
    %19 = sbr.rel (0) target = $region9
  $region8: #{gru_network_forward.1} parent=0 // pred_region
    _
  $region9: #{gru_network_forward.1} parent=0 // pred_fallthru
    _
  // Predicated region
  $region10: #{gru_network_forward.1} parent=0 // pred_check
    _
  $region11: #{gru_network_forward.1} parent=0 // pred_check_branch
    %21 = sbr.rel (0) target = $region13
  $region12: #{gru_network_forward.1} parent=0 // pred_region
    _
  $region13: #{gru_network_forward.1} parent=0 // pred_fallthru
    _
  // Predicated region
  $region14: #{gru_network_forward.1} parent=0 // pred_check
    _
  $region15: #{gru_network_forward.1} parent=0 // pred_check_branch
    %23 = sbr.rel (0) target = $region17
  $region16: #{gru_network_forward.1} parent=0 // pred_region
    _
  $region17: #{gru_network_forward.1} parent=0 // pred_fallthru
    _
  // Predicated region
  $region18: #{gru_network_forward.1} parent=0 // pred_check
    _
  $region19: #{gru_network_forward.1} parent=0 // pred_check_branch
    %25 = sbr.rel (0) target = $region21
  $region20: #{gru_network_forward.1} parent=0 // pred_region
    _
  $region21: #{gru_network_forward.1} parent=0 // pred_fallthru
    _
  // Predicated region
  $region22: #{gru_network_forward.1} parent=0 // pred_check
    _
  $region23: #{gru_network_forward.1} parent=0 // pred_check_branch
    %27 = sbr.rel (0) target = $region25
  $region24: #{gru_network_forward.1} parent=0 // pred_region
    _
  $region25: #{gru_network_forward.1} parent=0 // pred_fallthru
    _
  // Predicated region
  $region26: #{gru_network_forward.1} parent=0 // pred_check
    _
  $region27: #{gru_network_forward.1} parent=0 // pred_check_branch
    %29 = sbr.rel (0) target = $region29
  $region28: #{gru_network_forward.1} parent=0 // pred_region
    _
  $region29: #{gru_network_forward.1} parent=0 // pred_fallthru
    _
  // Predicated region
  $region30: #{gru_network_forward.1} parent=0 // pred_check
    _
  $region31: #{gru_network_forward.1} parent=0 // pred_check_branch
    %31 = sbr.rel (0) target = $region33
  $region32: #{gru_network_forward.1} parent=0 // pred_region
    _
  $region33: #{gru_network_forward.1} parent=0 // pred_fallthru
    _
  // Predicated region
  $region34: #{gru_network_forward.1} parent=0 // pred_check
    _
  $region35: #{gru_network_forward.1} parent=0 // pred_check_branch
    %33 = sbr.rel (0) target = $region37
  $region36: #{gru_network_forward.1} parent=0 // pred_region
    _
  $region37: #{gru_network_forward.1} parent=0 // pred_fallthru
    _
  // Predicated region
  $region38: #{gru_network_forward.1} parent=0 // pred_check
    _
  $region39: #{gru_network_forward.1} parent=0 // pred_check_branch
    %35 = sbr.rel (0) target = $region41
  $region40: #{gru_network_forward.1} parent=0 // pred_region
    _
  $region41: #{gru_network_forward.1} parent=0 // pred_fallthru
    _
  // Predicated region
  $region42: #{gru_network_forward.1} parent=0 // pred_check
    _
  $region43: #{gru_network_forward.1} parent=0 // pred_check_branch
    %37 = sbr.rel (0) target = $region45
  $region44: #{gru_network_forward.1} parent=0 // pred_region
    _
  $region45: #{gru_network_forward.1} parent=0 // pred_fallthru
    _
  %v38 = vld [vmem:[%s1] sm:$0xff]
  %v39 = vld [vmem:[%s1 + $0x8] sm:$0xff]
  %v40 = vld [vmem:[%s1 + $0x10] sm:$0xff]
  %v41 = vld [vmem:[%s1 + $0x18] sm:$0xff]
  %v42 = vld [vmem:[%s1 + $0x20] sm:$0xff]
  %v43 = vld [vmem:[%s1 + $0x28] sm:$0xff]
  %v44 = vld [vmem:[%s1 + $0x30] sm:$0xff]
  %v45 = vld [vmem:[%s1 + $0x38] sm:$0xff]
  %v46 = vld [vmem:[%s1 + $0x40] sm:$0xff]
  %v47 = vld [vmem:[%s1 + $0x48] sm:$0xff]
  %v48 = vld [vmem:[%s1 + $0x50] sm:$0xff]
  %v49 = vld [vmem:[%s1 + $0x58] sm:$0xff]
  %v50 = vld [vmem:[%s1 + $0x60] sm:$0xff]
  %v51 = vld [vmem:[%s1 + $0x68] sm:$0xff]
  %v52 = vld [vmem:[%s1 + $0x70] sm:$0xff]
  %v53 = vld [vmem:[%s1 + $0x78] sm:$0xff]
  %v54 = vld [vmem:[%s1 + $0x80] sm:$0xff]
  %v55 = vld [vmem:[%s1 + $0x88] sm:$0xff]
  %v56 = vld [vmem:[%s1 + $0x90] sm:$0xff]
  %v57 = vld [vmem:[%s1 + $0x98] sm:$0xff]
  %v58 = vld [vmem:[%s1 + $0xa0] sm:$0xff]
  %v59 = vld [vmem:[%s1 + $0xa8] sm:$0xff]
  %v60 = vld [vmem:[%s1 + $0xb0] sm:$0xff]
  %v61 = vld [vmem:[%s1 + $0xb8] sm:$0xff]
  %v62 = vld [vmem:[%s1 + $0xc0] sm:$0xff]
  %v63 = vld [vmem:[%s1 + $0xc8] sm:$0xff]
  %v64 = vld [vmem:[%s1 + $0xd0] sm:$0xff]
  %v65 = vld [vmem:[%s1 + $0xd8] sm:$0xff]
  %v66 = vld [vmem:[%s1 + $0xe0] sm:$0xff]
  %v67 = vld [vmem:[%s1 + $0xe8] sm:$0xff]
  %v68 = vld [vmem:[%s1 + $0xf0] sm:$0xff]
  %v69 = vld [vmem:[%s1 + $0xf8] sm:$0xff]
  %v70 = vld [vmem:[%s1 + $0x100] sm:$0xff]
  %v71 = vld [vmem:[%s1 + $0x108] sm:$0xff]
  %v72 = vld [vmem:[%s1 + $0x110] sm:$0xff]
  %v73 = vld [vmem:[%s1 + $0x118] sm:$0xff]
  %v74 = vld [vmem:[%s1 + $0x120] sm:$0xff]
  %v75 = vld [vmem:[%s1 + $0x128] sm:$0xff]
  %v76 = vld [vmem:[%s1 + $0x130] sm:$0xff]
  %v77 = vld [vmem:[%s1 + $0x138] sm:$0xff]
  %v78 = vld [vmem:[%s1 + $0x140] sm:$0xff]
  %v79 = vld [vmem:[%s1 + $0x148] sm:$0xff]
  %v80 = vld [vmem:[%s1 + $0x150] sm:$0xff]
  %v81 = vld [vmem:[%s1 + $0x158] sm:$0xff]
  %v82 = vld [vmem:[%s1 + $0x160] sm:$0xff]
  %v83 = vld [vmem:[%s1 + $0x168] sm:$0xff]
  %v84 = vld [vmem:[%s1 + $0x170] sm:$0xff]
  %v85 = vld [vmem:[%s1 + $0x178] sm:$0xff]
  %v86 = vld [vmem:[%s2] sm:$0xff]
  %v87 = vld [vmem:[%s2 + $0x8] sm:$0xff]
  %v88 = vld [vmem:[%s2 + $0x10] sm:$0xff]
  %v89 = vld [vmem:[%s2 + $0x18] sm:$0xff]
  %v90 = vld [vmem:[%s2 + $0x20] sm:$0xff]
  %v91 = vld [vmem:[%s2 + $0x28] sm:$0xff]
  %v92 = vld [vmem:[%s2 + $0x30] sm:$0xff]
  %v93 = vld [vmem:[%s2 + $0x38] sm:$0xff]
  %v94 = vld [vmem:[%s2 + $0x40] sm:$0xff]
  %v95 = vld [vmem:[%s2 + $0x48] sm:$0xff]
  %v96 = vld [vmem:[%s2 + $0x50] sm:$0xff]
  %v97 = vld [vmem:[%s2 + $0x58] sm:$0xff]
  %v98 = vld [vmem:[%s2 + $0x60] sm:$0xff]
  %v99 = vld [vmem:[%s2 + $0x68] sm:$0xff]
  %v100 = vld [vmem:[%s2 + $0x70] sm:$0xff]
  %v101 = vld [vmem:[%s2 + $0x78] sm:$0xff]
  %v102 = vld [vmem:[%s2 + $0x80] sm:$0xff]
  %v103 = vld [vmem:[%s2 + $0x88] sm:$0xff]
  %v104 = vld [vmem:[%s2 + $0x90] sm:$0xff]
  %v105 = vld [vmem:[%s2 + $0x98] sm:$0xff]
  %v106 = vld [vmem:[%s2 + $0xa0] sm:$0xff]
  %v107 = vld [vmem:[%s2 + $0xa8] sm:$0xff]
  %v108 = vld [vmem:[%s2 + $0xb0] sm:$0xff]
  %v109 = vld [vmem:[%s2 + $0xb8] sm:$0xff]
  %v110 = vld [vmem:[%s2 + $0xc0] sm:$0xff]
  %v111 = vld [vmem:[%s2 + $0xc8] sm:$0xff]
  %v112 = vld [vmem:[%s2 + $0xd0] sm:$0xff]
  %v113 = vld [vmem:[%s2 + $0xd8] sm:$0xff]
  %v114 = vld [vmem:[%s2 + $0xe0] sm:$0xff]
  %v115 = vld [vmem:[%s2 + $0xe8] sm:$0xff]
  %v116 = vld [vmem:[%s2 + $0xf0] sm:$0xff]
  %v117 = vld [vmem:[%s2 + $0xf8] sm:$0xff]
  %v118 = vld [vmem:[%s2 + $0x100] sm:$0xff]
  %v119 = vld [vmem:[%s2 + $0x108] sm:$0xff]
  %v120 = vld [vmem:[%s2 + $0x110] sm:$0xff]
  %v121 = vld [vmem:[%s2 + $0x118] sm:$0xff]
  %v122 = vld [vmem:[%s2 + $0x120] sm:$0xff]
  %v123 = vld [vmem:[%s2 + $0x128] sm:$0xff]
  %v124 = vld [vmem:[%s2 + $0x130] sm:$0xff]
  %v125 = vld [vmem:[%s2 + $0x138] sm:$0xff]
  %v126 = vld [vmem:[%s2 + $0x140] sm:$0xff]
  %v127 = vld [vmem:[%s2 + $0x148] sm:$0xff]
  %v128 = vld [vmem:[%s2 + $0x150] sm:$0xff]
  %v129 = vld [vmem:[%s2 + $0x158] sm:$0xff]
  %v130 = vld [vmem:[%s2 + $0x160] sm:$0xff]
  %v131 = vld [vmem:[%s2 + $0x168] sm:$0xff]
  %v132 = vld [vmem:[%s2 + $0x170] sm:$0xff]
  %v133 = vld [vmem:[%s2 + $0x178] sm:$0xff]
  %v134 = vld [vmem:[%s3] sm:$0x7]
  %v135 = vld [vmem:[%s4] sm:$0x1]
  %v136 = vld [vmem:[%s0] sm:$0xff]
  %v137 = vld [vmem:[%s0 + $0x8] sm:$0xff]
  %v138 = vld [vmem:[%s0 + $0x10] sm:$0xff]
  %v139 = vld [vmem:[%s0 + $0x18] sm:$0xff]
  %v140 = vld [vmem:[%s0 + $0x20] sm:$0xff]
  %v141 = vld [vmem:[%s0 + $0x28] sm:$0xff]
  %v142 = vld [vmem:[%s0 + $0x30] sm:$0xff]
  %v143 = vld [vmem:[%s0 + $0x38] sm:$0xff]
  %v145 = vlaneseq
  %v146 = vshrl.u32 %v145, 7
  %v147 = vsub.s32 0, %v146
  %v148 = vrot.slane %v134, %v147
  %v149 = vlaneseq
  %v150 = vshrl.u32 %v149, 7
  %v151 = vsub.s32 1, %v150
  %v152 = vrot.slane %v134, %v151
  %v153 = vlaneseq
  %v154 = vshrl.u32 %v153, 7
  %v155 = vsub.s32 2, %v154
  %v156 = vrot.slane %v134, %v155
  %160 = vmatprep.subr.mxu0 %v84
  %161 = vmatpush1.msra.mxu0 %v83
  %162 = vmatprep.subr.mxu0 %v81
  %163 = vmatpush1.msra.mxu0 %v80
  %164 = vmatprep.subr.mxu0 %v78
  %165 = vmatpush1.msra.mxu0 %v77
  %166 = vmatprep.subr.mxu0 %v75
  %167 = vmatpush1.msra.mxu0 %v74
  %168 = vmatprep.subr.mxu0 %v72
  %169 = vmatpush1.msra.mxu0 %v71
  %170 = vmatprep.subr.mxu0 %v69
  %171 = vmatpush1.msra.mxu0 %v68
  %172 = vmatprep.subr.mxu0 %v66
  %173 = vmatpush1.msra.mxu0 %v65
  %174 = vmatprep.subr.mxu0 %v63
  %175 = vmatpush1.msra.mxu0 %v62
  %176 = vmatprep.subr.mxu0 %v60
  %177 = vmatpush1.msra.mxu0 %v59
  %178 = vmatprep.subr.mxu0 %v57
  %179 = vmatpush1.msra.mxu0 %v56
  %180 = vmatprep.subr.mxu0 %v54
  %181 = vmatpush1.msra.mxu0 %v53
  %182 = vmatprep.subr.mxu0 %v51
  %183 = vmatpush1.msra.mxu0 %v50
  %184 = vmatprep.subr.mxu0 %v48
  %185 = vmatpush1.msra.mxu0 %v47
  %186 = vmatprep.subr.mxu0 %v45
  %187 = vmatpush1.msra.mxu0 %v44
  %188 = vmatprep.subr.mxu0 %v42
  %189 = vmatpush1.msra.mxu0 %v41
  %190 = vmatprep.subr.mxu0 %v39
  %191 = vmatpush1.msra.mxu0 %v38
  %192 = vmatprep.subr.mxu0 0.0
  %193 = vmatpush2.msra.mxu0 0.0
  %194 = vmatprep.subr.mxu0 0.0
  %195 = vmatpush2.msra.mxu0 0.0
  %196 = vmatprep.subr.mxu0 0.0
  %197 = vmatpush2.msra.mxu0 0.0
  %198 = vmatprep.subr.mxu0 0.0
  %199 = vmatpush2.msra.mxu0 0.0
  %200 = vmatprep.subr.mxu0 0.0
  %201 = vmatpush2.msra.mxu0 0.0
  %202 = vmatprep.subr.mxu0 0.0
  %203 = vmatpush2.msra.mxu0 0.0
  %204 = vmatprep.subr.mxu0 0.0
  %205 = vmatpush2.msra.mxu0 0.0
  %206 = vmatprep.subr.mxu0 0.0
  %207 = vmatpush2.msra.mxu0 0.0
  %208 = vmatprep.subr.mxu0 0.0
  %209 = vmatpush2.msra.mxu0 0.0
  %210 = vmatprep.subr.mxu0 0.0
  %211 = vmatpush2.msra.mxu0 0.0
  %212 = vmatprep.subr.mxu0 0.0
  %213 = vmatpush2.msra.mxu0 0.0
  %214 = vmatprep.subr.mxu0 0.0
  %215 = vmatpush2.msra.mxu0 0.0
  %216 = vmatprep.subr.mxu0 0.0
  %217 = vmatpush2.msra.mxu0 0.0
  %218 = vmatprep.subr.mxu0 0.0
  %219 = vmatpush2.msra.mxu0 0.0
  %220 = vmatprep.subr.mxu0 0.0
  %221 = vmatpush2.msra.mxu0 0.0
  %222 = vmatprep.subr.mxu0 0.0
  %223 = vmatpush2.msra.mxu0 0.0
  %224 = vmatprep.mubr.f32.mxu0 0.0
  %225 = vmatmul.mubr.f32.gmra.mxu0 %v136
  %v226 = vpop.f32.mrf.mxu0
  %v227 = vadd.f32 %v148, %v226
  %v228 = vpop.f32.mrf.mxu0
  %v229 = vadd.f32 %v152, %v228
  %230 = vmatprep.mubr.f32.mxu0 0.0
  %231 = vmatmul.mubr.f32.gmra.mxu0 %v137
  %v232 = vpop.f32.mrf.mxu0
  %v233 = vadd.f32 %v148, %v232
  %v234 = vpop.f32.mrf.mxu0
  %v235 = vadd.f32 %v152, %v234
  %236 = vmatprep.mubr.f32.mxu0 0.0
  %237 = vmatmul.mubr.f32.gmra.mxu0 %v138
  %v238 = vpop.f32.mrf.mxu0
  %v239 = vadd.f32 %v148, %v238
  %v240 = vpop.f32.mrf.mxu0
  %v241 = vadd.f32 %v152, %v240
  %242 = vmatprep.mubr.f32.mxu0 0.0
  %243 = vmatmul.mubr.f32.gmra.mxu0 %v139
  %v244 = vpop.f32.mrf.mxu0
  %v245 = vadd.f32 %v148, %v244
  %v246 = vpop.f32.mrf.mxu0
  %v247 = vadd.f32 %v152, %v246
  %248 = vmatprep.mubr.f32.mxu0 0.0
  %249 = vmatmul.mubr.f32.gmra.mxu0 %v140
  %v250 = vpop.f32.mrf.mxu0
  %v251 = vadd.f32 %v148, %v250
  %v252 = vpop.f32.mrf.mxu0
  %v253 = vadd.f32 %v152, %v252
  %254 = vmatprep.mubr.f32.mxu0 0.0
  %255 = vmatmul.mubr.f32.gmra.mxu0 %v141
  %v256 = vpop.f32.mrf.mxu0
  %v257 = vadd.f32 %v148, %v256
  %v258 = vpop.f32.mrf.mxu0
  %v259 = vadd.f32 %v152, %v258
  %260 = vmatprep.mubr.f32.mxu0 0.0
  %261 = vmatmul.mubr.f32.gmra.mxu0 %v142
  %v262 = vpop.f32.mrf.mxu0
  %v263 = vadd.f32 %v148, %v262
  %v264 = vpop.f32.mrf.mxu0
  %v265 = vadd.f32 %v152, %v264
  %266 = vmatprep.mubr.f32.mxu0 0.0
  %267 = vmatmul.mubr.f32.gmra.mxu0 %v143
  %v268 = vpop.f32.mrf.mxu0
  %v269 = vadd.f32 %v148, %v268
  %v270 = vpop.f32.mrf.mxu0
  %v271 = vadd.f32 %v152, %v270
  %272 = vdwg.mxu0
  %273 = vmatprep.subr.mxu0 0.0
  %274 = vmatpush1.msra.mxu0 %v85
  %275 = vmatprep.subr.mxu0 0.0
  %276 = vmatpush1.msra.mxu0 %v82
  %277 = vmatprep.subr.mxu0 0.0
  %278 = vmatpush1.msra.mxu0 %v79
  %279 = vmatprep.subr.mxu0 0.0
  %280 = vmatpush1.msra.mxu0 %v76
  %281 = vmatprep.subr.mxu0 0.0
  %282 = vmatpush1.msra.mxu0 %v73
  %283 = vmatprep.subr.mxu0 0.0
  %284 = vmatpush1.msra.mxu0 %v70
  %285 = vmatprep.subr.mxu0 0.0
  %286 = vmatpush1.msra.mxu0 %v67
  %287 = vmatprep.subr.mxu0 0.0
  %288 = vmatpush1.msra.mxu0 %v64
  %289 = vmatprep.subr.mxu0 0.0
  %290 = vmatpush1.msra.mxu0 %v61
  %291 = vmatprep.subr.mxu0 0.0
  %292 = vmatpush1.msra.mxu0 %v58
  %293 = vmatprep.subr.mxu0 0.0
  %294 = vmatpush1.msra.mxu0 %v55
  %295 = vmatprep.subr.mxu0 0.0
  %296 = vmatpush1.msra.mxu0 %v52
  %297 = vmatprep.subr.mxu0 0.0
  %298 = vmatpush1.msra.mxu0 %v49
  %299 = vmatprep.subr.mxu0 0.0
  %300 = vmatpush1.msra.mxu0 %v46
  %301 = vmatprep.subr.mxu0 0.0
  %302 = vmatpush1.msra.mxu0 %v43
  %303 = vmatprep.subr.mxu0 0.0
  %304 = vmatpush1.msra.mxu0 %v40
  %305 = vmatprep.subr.mxu0 0.0
  %306 = vmatpush2.msra.mxu0 0.0
  %307 = vmatprep.subr.mxu0 0.0
  %308 = vmatpush2.msra.mxu0 0.0
  %309 = vmatprep.subr.mxu0 0.0
  %310 = vmatpush2.msra.mxu0 0.0
  %311 = vmatprep.subr.mxu0 0.0
  %312 = vmatpush2.msra.mxu0 0.0
  %313 = vmatprep.subr.mxu0 0.0
  %314 = vmatpush2.msra.mxu0 0.0
  %315 = vmatprep.subr.mxu0 0.0
  %316 = vmatpush2.msra.mxu0 0.0
  %317 = vmatprep.subr.mxu0 0.0
  %318 = vmatpush2.msra.mxu0 0.0
  %319 = vmatprep.subr.mxu0 0.0
  %320 = vmatpush2.msra.mxu0 0.0
  %321 = vmatprep.subr.mxu0 0.0
  %322 = vmatpush2.msra.mxu0 0.0
  %323 = vmatprep.subr.mxu0 0.0
  %324 = vmatpush2.msra.mxu0 0.0
  %325 = vmatprep.subr.mxu0 0.0
  %326 = vmatpush2.msra.mxu0 0.0
  %327 = vmatprep.subr.mxu0 0.0
  %328 = vmatpush2.msra.mxu0 0.0
  %329 = vmatprep.subr.mxu0 0.0
  %330 = vmatpush2.msra.mxu0 0.0
  %331 = vmatprep.subr.mxu0 0.0
  %332 = vmatpush2.msra.mxu0 0.0
  %333 = vmatprep.subr.mxu0 0.0
  %334 = vmatpush2.msra.mxu0 0.0
  %335 = vmatprep.subr.mxu0 0.0
  %336 = vmatpush2.msra.mxu0 0.0
  %337 = vmatprep.mubr.f32.mxu0 0.0
  %338 = vmatmul.mubr.f32.gmra.mxu0 %v136
  %v339 = vpop.f32.mrf.mxu0
  %v340 = vadd.f32 %v156, %v339
  %v341 = vpop.f32.mrf.mxu0
  %342 = vmatprep.mubr.f32.mxu0 0.0
  %343 = vmatmul.mubr.f32.gmra.mxu0 %v137
  %v344 = vpop.f32.mrf.mxu0
  %v345 = vadd.f32 %v156, %v344
  %v346 = vpop.f32.mrf.mxu0
  %347 = vmatprep.mubr.f32.mxu0 0.0
  %348 = vmatmul.mubr.f32.gmra.mxu0 %v138
  %v349 = vpop.f32.mrf.mxu0
  %v350 = vadd.f32 %v156, %v349
  %v351 = vpop.f32.mrf.mxu0
  %352 = vmatprep.mubr.f32.mxu0 0.0
  %353 = vmatmul.mubr.f32.gmra.mxu0 %v139
  %v354 = vpop.f32.mrf.mxu0
  %v355 = vadd.f32 %v156, %v354
  %v356 = vpop.f32.mrf.mxu0
  %357 = vmatprep.mubr.f32.mxu0 0.0
  %358 = vmatmul.mubr.f32.gmra.mxu0 %v140
  %v359 = vpop.f32.mrf.mxu0
  %v360 = vadd.f32 %v156, %v359
  %v361 = vpop.f32.mrf.mxu0
  %362 = vmatprep.mubr.f32.mxu0 0.0
  %363 = vmatmul.mubr.f32.gmra.mxu0 %v141
  %v364 = vpop.f32.mrf.mxu0
  %v365 = vadd.f32 %v156, %v364
  %v366 = vpop.f32.mrf.mxu0
  %367 = vmatprep.mubr.f32.mxu0 0.0
  %368 = vmatmul.mubr.f32.gmra.mxu0 %v142
  %v369 = vpop.f32.mrf.mxu0
  %v370 = vadd.f32 %v156, %v369
  %v371 = vpop.f32.mrf.mxu0
  %372 = vmatprep.mubr.f32.mxu0 0.0
  %373 = vmatmul.mubr.f32.gmra.mxu0 %v143
  %v374 = vpop.f32.mrf.mxu0
  %v375 = vadd.f32 %v156, %v374
  %v376 = vpop.f32.mrf.mxu0
  %377 = vdwg.mxu0
  %378 = vst [vmem:[#allocation3] sm:$0xff] %v227
  %379 = vst [vmem:[#allocation3 + $0x8] sm:$0xff] %v229
  %380 = vst [vmem:[#allocation3 + $0x10] sm:$0xff] %v340
  %381 = vst [vmem:[#allocation3 + $0x18] sm:$0xff] %v233
  %382 = vst [vmem:[#allocation3 + $0x20] sm:$0xff] %v235
  %383 = vst [vmem:[#allocation3 + $0x28] sm:$0xff] %v345
  %384 = vst [vmem:[#allocation3 + $0x30] sm:$0xff] %v239
  %385 = vst [vmem:[#allocation3 + $0x38] sm:$0xff] %v241
  %386 = vst [vmem:[#allocation3 + $0x40] sm:$0xff] %v350
  %387 = vst [vmem:[#allocation3 + $0x48] sm:$0xff] %v245
  %388 = vst [vmem:[#allocation3 + $0x50] sm:$0xff] %v247
  %389 = vst [vmem:[#allocation3 + $0x58] sm:$0xff] %v355
  %390 = vst [vmem:[#allocation3 + $0x60] sm:$0xff] %v251
  %391 = vst [vmem:[#allocation3 + $0x68] sm:$0xff] %v253
  %392 = vst [vmem:[#allocation3 + $0x70] sm:$0xff] %v360
  %393 = vst [vmem:[#allocation3 + $0x78] sm:$0xff] %v257
  %394 = vst [vmem:[#allocation3 + $0x80] sm:$0xff] %v259
  %395 = vst [vmem:[#allocation3 + $0x88] sm:$0xff] %v365
  %396 = vst [vmem:[#allocation3 + $0x90] sm:$0xff] %v263
  %397 = vst [vmem:[#allocation3 + $0x98] sm:$0xff] %v265
  %398 = vst [vmem:[#allocation3 + $0xa0] sm:$0xff] %v370
  %399 = vst [vmem:[#allocation3 + $0xa8] sm:$0xff] %v269
  %400 = vst [vmem:[#allocation3 + $0xb0] sm:$0xff] %v271
  %401 = vst [vmem:[#allocation3 + $0xb8] sm:$0xff] %v375
  %v403 = vlaneseq
  %v404 = vshrl.u32 %v403, 7
  %v405 = vsub.s32 0, %v404
  %v406 = vrot.slane %v135, %v405
  %v408 = vld [vmem:[#allocation3] sm:$0xff]
  %v409 = vld [vmem:[#allocation3 + $0x8] sm:$0xff]
  %v410 = vld [vmem:[#allocation3 + $0x10] sm:$0xff]
  %411 = vmatprep.subr.mxu0 %v132
  %412 = vmatpush1.msra.mxu0 %v131
  %413 = vmatprep.subr.mxu0 %v129
  %414 = vmatpush1.msra.mxu0 %v128
  %415 = vmatprep.subr.mxu0 %v126
  %416 = vmatpush1.msra.mxu0 %v125
  %417 = vmatprep.subr.mxu0 %v123
  %418 = vmatpush1.msra.mxu0 %v122
  %419 = vmatprep.subr.mxu0 %v120
  %420 = vmatpush1.msra.mxu0 %v119
  %421 = vmatprep.subr.mxu0 %v117
  %422 = vmatpush1.msra.mxu0 %v116
  %423 = vmatprep.subr.mxu0 %v114
  %424 = vmatpush1.msra.mxu0 %v113
  %425 = vmatprep.subr.mxu0 %v111
  %426 = vmatpush1.msra.mxu0 %v110
  %427 = vmatprep.subr.mxu0 %v108
  %428 = vmatpush1.msra.mxu0 %v107
  %429 = vmatprep.subr.mxu0 %v105
  %430 = vmatpush1.msra.mxu0 %v104
  %431 = vmatprep.subr.mxu0 %v102
  %432 = vmatpush1.msra.mxu0 %v101
  %433 = vmatprep.subr.mxu0 %v99
  %434 = vmatpush1.msra.mxu0 %v98
  %435 = vmatprep.subr.mxu0 %v96
  %436 = vmatpush1.msra.mxu0 %v95
  %437 = vmatprep.subr.mxu0 %v93
  %438 = vmatpush1.msra.mxu0 %v92
  %439 = vmatprep.subr.mxu0 %v90
  %440 = vmatpush1.msra.mxu0 %v89
  %441 = vmatprep.subr.mxu0 %v87
  %442 = vmatpush1.msra.mxu0 %v86
  %443 = vmatprep.subr.mxu0 0.0
  %444 = vmatpush2.msra.mxu0 0.0
  %445 = vmatprep.subr.mxu0 0.0
  %446 = vmatpush2.msra.mxu0 0.0
  %447 = vmatprep.subr.mxu0 0.0
  %448 = vmatpush2.msra.mxu0 0.0
  %449 = vmatprep.subr.mxu0 0.0
  %450 = vmatpush2.msra.mxu0 0.0
  %451 = vmatprep.subr.mxu0 0.0
  %452 = vmatpush2.msra.mxu0 0.0
  %453 = vmatprep.subr.mxu0 0.0
  %454 = vmatpush2.msra.mxu0 0.0
  %455 = vmatprep.subr.mxu0 0.0
  %456 = vmatpush2.msra.mxu0 0.0
  %457 = vmatprep.subr.mxu0 0.0
  %458 = vmatpush2.msra.mxu0 0.0
  %459 = vmatprep.subr.mxu0 0.0
  %460 = vmatpush2.msra.mxu0 0.0
  %461 = vmatprep.subr.mxu0 0.0
  %462 = vmatpush2.msra.mxu0 0.0
  %463 = vmatprep.subr.mxu0 0.0
  %464 = vmatpush2.msra.mxu0 0.0
  %465 = vmatprep.subr.mxu0 0.0
  %466 = vmatpush2.msra.mxu0 0.0
  %467 = vmatprep.subr.mxu0 0.0
  %468 = vmatpush2.msra.mxu0 0.0
  %469 = vmatprep.subr.mxu0 0.0
  %470 = vmatpush2.msra.mxu0 0.0
  %471 = vmatprep.subr.mxu0 0.0
  %472 = vmatpush2.msra.mxu0 0.0
  %473 = vmatprep.subr.mxu0 0.0
  %474 = vmatpush2.msra.mxu0 0.0
  %475 = vmatprep.mubr.f32.mxu0 0.0
  %476 = vmatmul.mubr.f32.gmra.mxu0 0.0
  %v477 = vpop.f32.mrf.mxu0
  %v478 = vadd.f32 0.0, %v477
  %v479 = vpop.f32.mrf.mxu0
  %v480 = vadd.f32 0.0, %v479
  %481 = vdwg.mxu0
  %482 = vmatprep.subr.mxu0 0.0
  %483 = vmatpush1.msra.mxu0 %v133
  %484 = vmatprep.subr.mxu0 0.0
  %485 = vmatpush1.msra.mxu0 %v130
  %486 = vmatprep.subr.mxu0 0.0
  %487 = vmatpush1.msra.mxu0 %v127
  %488 = vmatprep.subr.mxu0 0.0
  %489 = vmatpush1.msra.mxu0 %v124
  %490 = vmatprep.subr.mxu0 0.0
  %491 = vmatpush1.msra.mxu0 %v121
  %492 = vmatprep.subr.mxu0 0.0
  %493 = vmatpush1.msra.mxu0 %v118
  %494 = vmatprep.subr.mxu0 0.0
  %495 = vmatpush1.msra.mxu0 %v115
  %496 = vmatprep.subr.mxu0 0.0
  %497 = vmatpush1.msra.mxu0 %v112
  %498 = vmatprep.subr.mxu0 0.0
  %499 = vmatpush1.msra.mxu0 %v109
  %500 = vmatprep.subr.mxu0 0.0
  %501 = vmatpush1.msra.mxu0 %v106
  %502 = vmatprep.subr.mxu0 0.0
  %503 = vmatpush1.msra.mxu0 %v103
  %504 = vmatprep.subr.mxu0 0.0
  %505 = vmatpush1.msra.mxu0 %v100
  %506 = vmatprep.subr.mxu0 0.0
  %507 = vmatpush1.msra.mxu0 %v97
  %508 = vmatprep.subr.mxu0 0.0
  %509 = vmatpush1.msra.mxu0 %v94
  %510 = vmatprep.subr.mxu0 0.0
  %511 = vmatpush1.msra.mxu0 %v91
  %512 = vmatprep.subr.mxu0 0.0
  %513 = vmatpush1.msra.mxu0 %v88
  %514 = vmatprep.subr.mxu0 0.0
  %515 = vmatpush2.msra.mxu0 0.0
  %516 = vmatprep.subr.mxu0 0.0
  %517 = vmatpush2.msra.mxu0 0.0
  %518 = vmatprep.subr.mxu0 0.0
  %519 = vmatpush2.msra.mxu0 0.0
  %520 = vmatprep.subr.mxu0 0.0
  %521 = vmatpush2.msra.mxu0 0.0
  %522 = vmatprep.subr.mxu0 0.0
  %523 = vmatpush2.msra.mxu0 0.0
  %524 = vmatprep.subr.mxu0 0.0
  %525 = vmatpush2.msra.mxu0 0.0
  %526 = vmatprep.subr.mxu0 0.0
  %527 = vmatpush2.msra.mxu0 0.0
  %528 = vmatprep.subr.mxu0 0.0
  %529 = vmatpush2.msra.mxu0 0.0
  %530 = vmatprep.subr.mxu0 0.0
  %531 = vmatpush2.msra.mxu0 0.0
  %532 = vmatprep.subr.mxu0 0.0
  %533 = vmatpush2.msra.mxu0 0.0
  %534 = vmatprep.subr.mxu0 0.0
  %535 = vmatpush2.msra.mxu0 0.0
  %536 = vmatprep.subr.mxu0 0.0
  %537 = vmatpush2.msra.mxu0 0.0
  %538 = vmatprep.subr.mxu0 0.0
  %539 = vmatpush2.msra.mxu0 0.0
  %540 = vmatprep.subr.mxu0 0.0
  %541 = vmatpush2.msra.mxu0 0.0
  %542 = vmatprep.subr.mxu0 0.0
  %543 = vmatpush2.msra.mxu0 0.0
  %544 = vmatprep.subr.mxu0 0.0
  %545 = vmatpush2.msra.mxu0 0.0
  %546 = vmatprep.mubr.f32.mxu0 0.0
  %547 = vmatmul.mubr.f32.gmra.mxu0 0.0
  %v548 = vpop.f32.mrf.mxu0
  %v549 = vadd.f32 0.0, %v548
  %v550 = vpop.f32.mrf.mxu0
  %551 = vdwg.mxu0
  %v552 = vadd.f32 %v408, %v478
  %v553 = vmul.f32 %v552, 0.5
  %v554 = vtanh.pop %v553
  %v555 = vmul.f32 %v554, 0.5
  %v556 = vadd.f32 %v555, 0.5
  %v557 = vadd.f32 %v409, %v480
  %v558 = vmul.f32 %v557, 0.5
  %v559 = vtanh.pop %v558
  %v560 = vmul.f32 %v559, 0.5
  %v561 = vadd.f32 %v560, 0.5
  %v562 = vadd.f32 %v549, %v406
  %v563 = vmul.f32 %v556, %v562
  %v564 = vadd.f32 %v410, %v563
  %v565 = vtanh.pop %v564
  %v566 = vsub.f32 0.0, %v565
  %v567 = vmul.f32 %v561, %v566
  %v568 = vadd.f32 %v565, %v567
  %569 = vst [vmem:[#allocation2] sm:$0xff] %v568
  %s570 = scalar_lea.vmem [#allocation3], 24
  %v571 = vld [vmem:[%s570] sm:$0xff]
  %v572 = vld [vmem:[%s570 + $0x8] sm:$0xff]
  %v573 = vld [vmem:[%s570 + $0x10] sm:$0xff]
  %574 = vmatprep.subr.mxu0 %v132
  %575 = vmatpush1.msra.mxu0 %v131
  %576 = vmatprep.subr.mxu0 %v129
  %577 = vmatpush1.msra.mxu0 %v128
  %578 = vmatprep.subr.mxu0 %v126
  %579 = vmatpush1.msra.mxu0 %v125
  %580 = vmatprep.subr.mxu0 %v123
  %581 = vmatpush1.msra.mxu0 %v122
  %582 = vmatprep.subr.mxu0 %v120
  %583 = vmatpush1.msra.mxu0 %v119
  %584 = vmatprep.subr.mxu0 %v117
  %585 = vmatpush1.msra.mxu0 %v116
  %586 = vmatprep.subr.mxu0 %v114
  %587 = vmatpush1.msra.mxu0 %v113
  %588 = vmatprep.subr.mxu0 %v111
  %589 = vmatpush1.msra.mxu0 %v110
  %590 = vmatprep.subr.mxu0 %v108
  %591 = vmatpush1.msra.mxu0 %v107
  %592 = vmatprep.subr.mxu0 %v105
  %593 = vmatpush1.msra.mxu0 %v104
  %594 = vmatprep.subr.mxu0 %v102
  %595 = vmatpush1.msra.mxu0 %v101
  %596 = vmatprep.subr.mxu0 %v99
  %597 = vmatpush1.msra.mxu0 %v98
  %598 = vmatprep.subr.mxu0 %v96
  %599 = vmatpush1.msra.mxu0 %v95
  %600 = vmatprep.subr.mxu0 %v93
  %601 = vmatpush1.msra.mxu0 %v92
  %602 = vmatprep.subr.mxu0 %v90
  %603 = vmatpush1.msra.mxu0 %v89
  %604 = vmatprep.subr.mxu0 %v87
  %605 = vmatpush1.msra.mxu0 %v86
  %606 = vmatprep.subr.mxu0 0.0
  %607 = vmatpush2.msra.mxu0 0.0
  %608 = vmatprep.subr.mxu0 0.0
  %609 = vmatpush2.msra.mxu0 0.0
  %610 = vmatprep.subr.mxu0 0.0
  %611 = vmatpush2.msra.mxu0 0.0
  %612 = vmatprep.subr.mxu0 0.0
  %613 = vmatpush2.msra.mxu0 0.0
  %614 = vmatprep.subr.mxu0 0.0
  %615 = vmatpush2.msra.mxu0 0.0
  %616 = vmatprep.subr.mxu0 0.0
  %617 = vmatpush2.msra.mxu0 0.0
  %618 = vmatprep.subr.mxu0 0.0
  %619 = vmatpush2.msra.mxu0 0.0
  %620 = vmatprep.subr.mxu0 0.0
  %621 = vmatpush2.msra.mxu0 0.0
  %622 = vmatprep.subr.mxu0 0.0
  %623 = vmatpush2.msra.mxu0 0.0
  %624 = vmatprep.subr.mxu0 0.0
  %625 = vmatpush2.msra.mxu0 0.0
  %626 = vmatprep.subr.mxu0 0.0
  %627 = vmatpush2.msra.mxu0 0.0
  %628 = vmatprep.subr.mxu0 0.0
  %629 = vmatpush2.msra.mxu0 0.0
  %630 = vmatprep.subr.mxu0 0.0
  %631 = vmatpush2.msra.mxu0 0.0
  %632 = vmatprep.subr.mxu0 0.0
  %633 = vmatpush2.msra.mxu0 0.0
  %634 = vmatprep.subr.mxu0 0.0
  %635 = vmatpush2.msra.mxu0 0.0
  %636 = vmatprep.subr.mxu0 0.0
  %637 = vmatpush2.msra.mxu0 0.0
  %638 = vmatprep.mubr.f32.mxu0 0.0
  %639 = vmatmul.mubr.f32.gmra.mxu0 %v568
  %v640 = vpop.f32.mrf.mxu0
  %v641 = vadd.f32 0.0, %v640
  %v642 = vpop.f32.mrf.mxu0
  %v643 = vadd.f32 0.0, %v642
  %644 = vdwg.mxu0
  %645 = vmatprep.subr.mxu0 0.0
  %646 = vmatpush1.msra.mxu0 %v133
  %647 = vmatprep.subr.mxu0 0.0
  %648 = vmatpush1.msra.mxu0 %v130
  %649 = vmatprep.subr.mxu0 0.0
  %650 = vmatpush1.msra.mxu0 %v127
  %651 = vmatprep.subr.mxu0 0.0
  %652 = vmatpush1.msra.mxu0 %v124
  %653 = vmatprep.subr.mxu0 0.0
  %654 = vmatpush1.msra.mxu0 %v121
  %655 = vmatprep.subr.mxu0 0.0
  %656 = vmatpush1.msra.mxu0 %v118
  %657 = vmatprep.subr.mxu0 0.0
  %658 = vmatpush1.msra.mxu0 %v115
  %659 = vmatprep.subr.mxu0 0.0
  %660 = vmatpush1.msra.mxu0 %v112
  %661 = vmatprep.subr.mxu0 0.0
  %662 = vmatpush1.msra.mxu0 %v109
  %663 = vmatprep.subr.mxu0 0.0
  %664 = vmatpush1.msra.mxu0 %v106
  %665 = vmatprep.subr.mxu0 0.0
  %666 = vmatpush1.msra.mxu0 %v103
  %667 = vmatprep.subr.mxu0 0.0
  %668 = vmatpush1.msra.mxu0 %v100
  %669 = vmatprep.subr.mxu0 0.0
  %670 = vmatpush1.msra.mxu0 %v97
  %671 = vmatprep.subr.mxu0 0.0
  %672 = vmatpush1.msra.mxu0 %v94
  %673 = vmatprep.subr.mxu0 0.0
  %674 = vmatpush1.msra.mxu0 %v91
  %675 = vmatprep.subr.mxu0 0.0
  %676 = vmatpush1.msra.mxu0 %v88
  %677 = vmatprep.subr.mxu0 0.0
  %678 = vmatpush2.msra.mxu0 0.0
  %679 = vmatprep.subr.mxu0 0.0
  %680 = vmatpush2.msra.mxu0 0.0
  %681 = vmatprep.subr.mxu0 0.0
  %682 = vmatpush2.msra.mxu0 0.0
  %683 = vmatprep.subr.mxu0 0.0
  %684 = vmatpush2.msra.mxu0 0.0
  %685 = vmatprep.subr.mxu0 0.0
  %686 = vmatpush2.msra.mxu0 0.0
  %687 = vmatprep.subr.mxu0 0.0
  %688 = vmatpush2.msra.mxu0 0.0
  %689 = vmatprep.subr.mxu0 0.0
  %690 = vmatpush2.msra.mxu0 0.0
  %691 = vmatprep.subr.mxu0 0.0
  %692 = vmatpush2.msra.mxu0 0.0
  %693 = vmatprep.subr.mxu0 0.0
  %694 = vmatpush2.msra.mxu0 0.0
  %695 = vmatprep.subr.mxu0 0.0
  %696 = vmatpush2.msra.mxu0 0.0
  %697 = vmatprep.subr.mxu0 0.0
  %698 = vmatpush2.msra.mxu0 0.0
  %699 = vmatprep.subr.mxu0 0.0
  %700 = vmatpush2.msra.mxu0 0.0
  %701 = vmatprep.subr.mxu0 0.0
  %702 = vmatpush2.msra.mxu0 0.0
  %703 = vmatprep.subr.mxu0 0.0
  %704 = vmatpush2.msra.mxu0 0.0
  %705 = vmatprep.subr.mxu0 0.0
  %706 = vmatpush2.msra.mxu0 0.0
  %707 = vmatprep.subr.mxu0 0.0
  %708 = vmatpush2.msra.mxu0 0.0
  %709 = vmatprep.mubr.f32.mxu0 0.0
  %710 = vmatmul.mubr.f32.gmra.mxu0 %v568
  %v711 = vpop.f32.mrf.mxu0
  %v712 = vadd.f32 0.0, %v711
  %v713 = vpop.f32.mrf.mxu0
  %714 = vdwg.mxu0
  %v715 = vadd.f32 %v571, %v641
  %v716 = vmul.f32 %v715, 0.5
  %v717 = vtanh.pop %v716
  %v718 = vmul.f32 %v717, 0.5
  %v719 = vadd.f32 %v718, 0.5
  %v720 = vadd.f32 %v572, %v643
  %v721 = vmul.f32 %v720, 0.5
  %v722 = vtanh.pop %v721
  %v723 = vmul.f32 %v722, 0.5
  %v724 = vadd.f32 %v723, 0.5
  %v725 = vadd.f32 %v712, %v406
  %v726 = vmul.f32 %v719, %v725
  %v727 = vadd.f32 %v573, %v726
  %v728 = vtanh.pop %v727
  %v729 = vsub.f32 %v568, %v728
  %v730 = vmul.f32 %v724, %v729
  %v731 = vadd.f32 %v728, %v730
  %s732 = scalar_lea.vmem [#allocation2], 8
  %733 = vst [vmem:[%s732] sm:$0xff] %v731
  %s734 = scalar_lea.vmem [#allocation3], 48
  %v735 = vld [vmem:[%s734] sm:$0xff]
  %v736 = vld [vmem:[%s734 + $0x8] sm:$0xff]
  %v737 = vld [vmem:[%s734 + $0x10] sm:$0xff]
  %738 = vmatprep.subr.mxu0 %v132
  %739 = vmatpush1.msra.mxu0 %v131
  %740 = vmatprep.subr.mxu0 %v129
  %741 = vmatpush1.msra.mxu0 %v128
  %742 = vmatprep.subr.mxu0 %v126
  %743 = vmatpush1.msra.mxu0 %v125
  %744 = vmatprep.subr.mxu0 %v123
  %745 = vmatpush1.msra.mxu0 %v122
  %746 = vmatprep.subr.mxu0 %v120
  %747 = vmatpush1.msra.mxu0 %v119
  %748 = vmatprep.subr.mxu0 %v117
  %749 = vmatpush1.msra.mxu0 %v116
  %750 = vmatprep.subr.mxu0 %v114
  %751 = vmatpush1.msra.mxu0 %v113
  %752 = vmatprep.subr.mxu0 %v111
  %753 = vmatpush1.msra.mxu0 %v110
  %754 = vmatprep.subr.mxu0 %v108
  %755 = vmatpush1.msra.mxu0 %v107
  %756 = vmatprep.subr.mxu0 %v105
  %757 = vmatpush1.msra.mxu0 %v104
  %758 = vmatprep.subr.mxu0 %v102
  %759 = vmatpush1.msra.mxu0 %v101
  %760 = vmatprep.subr.mxu0 %v99
  %761 = vmatpush1.msra.mxu0 %v98
  %762 = vmatprep.subr.mxu0 %v96
  %763 = vmatpush1.msra.mxu0 %v95
  %764 = vmatprep.subr.mxu0 %v93
  %765 = vmatpush1.msra.mxu0 %v92
  %766 = vmatprep.subr.mxu0 %v90
  %767 = vmatpush1.msra.mxu0 %v89
  %768 = vmatprep.subr.mxu0 %v87
  %769 = vmatpush1.msra.mxu0 %v86
  %770 = vmatprep.subr.mxu0 0.0
  %771 = vmatpush2.msra.mxu0 0.0
  %772 = vmatprep.subr.mxu0 0.0
  %773 = vmatpush2.msra.mxu0 0.0
  %774 = vmatprep.subr.mxu0 0.0
  %775 = vmatpush2.msra.mxu0 0.0
  %776 = vmatprep.subr.mxu0 0.0
  %777 = vmatpush2.msra.mxu0 0.0
  %778 = vmatprep.subr.mxu0 0.0
  %779 = vmatpush2.msra.mxu0 0.0
  %780 = vmatprep.subr.mxu0 0.0
  %781 = vmatpush2.msra.mxu0 0.0
  %782 = vmatprep.subr.mxu0 0.0
  %783 = vmatpush2.msra.mxu0 0.0
  %784 = vmatprep.subr.mxu0 0.0
  %785 = vmatpush2.msra.mxu0 0.0
  %786 = vmatprep.subr.mxu0 0.0
  %787 = vmatpush2.msra.mxu0 0.0
  %788 = vmatprep.subr.mxu0 0.0
  %789 = vmatpush2.msra.mxu0 0.0
  %790 = vmatprep.subr.mxu0 0.0
  %791 = vmatpush2.msra.mxu0 0.0
  %792 = vmatprep.subr.mxu0 0.0
  %793 = vmatpush2.msra.mxu0 0.0
  %794 = vmatprep.subr.mxu0 0.0
  %795 = vmatpush2.msra.mxu0 0.0
  %796 = vmatprep.subr.mxu0 0.0
  %797 = vmatpush2.msra.mxu0 0.0
  %798 = vmatprep.subr.mxu0 0.0
  %799 = vmatpush2.msra.mxu0 0.0
  %800 = vmatprep.subr.mxu0 0.0
  %801 = vmatpush2.msra.mxu0 0.0
  %802 = vmatprep.mubr.f32.mxu0 0.0
  %803 = vmatmul.mubr.f32.gmra.mxu0 %v731
  %v804 = vpop.f32.mrf.mxu0
  %v805 = vadd.f32 0.0, %v804
  %v806 = vpop.f32.mrf.mxu0
  %v807 = vadd.f32 0.0, %v806
  %808 = vdwg.mxu0
  %809 = vmatprep.subr.mxu0 0.0
  %810 = vmatpush1.msra.mxu0 %v133
  %811 = vmatprep.subr.mxu0 0.0
  %812 = vmatpush1.msra.mxu0 %v130
  %813 = vmatprep.subr.mxu0 0.0
  %814 = vmatpush1.msra.mxu0 %v127
  %815 = vmatprep.subr.mxu0 0.0
  %816 = vmatpush1.msra.mxu0 %v124
  %817 = vmatprep.subr.mxu0 0.0
  %818 = vmatpush1.msra.mxu0 %v121
  %819 = vmatprep.subr.mxu0 0.0
  %820 = vmatpush1.msra.mxu0 %v118
  %821 = vmatprep.subr.mxu0 0.0
  %822 = vmatpush1.msra.mxu0 %v115
  %823 = vmatprep.subr.mxu0 0.0
  %824 = vmatpush1.msra.mxu0 %v112
  %825 = vmatprep.subr.mxu0 0.0
  %826 = vmatpush1.msra.mxu0 %v109
  %827 = vmatprep.subr.mxu0 0.0
  %828 = vmatpush1.msra.mxu0 %v106
  %829 = vmatprep.subr.mxu0 0.0
  %830 = vmatpush1.msra.mxu0 %v103
  %831 = vmatprep.subr.mxu0 0.0
  %832 = vmatpush1.msra.mxu0 %v100
  %833 = vmatprep.subr.mxu0 0.0
  %834 = vmatpush1.msra.mxu0 %v97
  %835 = vmatprep.subr.mxu0 0.0
  %836 = vmatpush1.msra.mxu0 %v94
  %837 = vmatprep.subr.mxu0 0.0
  %838 = vmatpush1.msra.mxu0 %v91
  %839 = vmatprep.subr.mxu0 0.0
  %840 = vmatpush1.msra.mxu0 %v88
  %841 = vmatprep.subr.mxu0 0.0
  %842 = vmatpush2.msra.mxu0 0.0
  %843 = vmatprep.subr.mxu0 0.0
  %844 = vmatpush2.msra.mxu0 0.0
  %845 = vmatprep.subr.mxu0 0.0
  %846 = vmatpush2.msra.mxu0 0.0
  %847 = vmatprep.subr.mxu0 0.0
  %848 = vmatpush2.msra.mxu0 0.0
  %849 = vmatprep.subr.mxu0 0.0
  %850 = vmatpush2.msra.mxu0 0.0
  %851 = vmatprep.subr.mxu0 0.0
  %852 = vmatpush2.msra.mxu0 0.0
  %853 = vmatprep.subr.mxu0 0.0
  %854 = vmatpush2.msra.mxu0 0.0
  %855 = vmatprep.subr.mxu0 0.0
  %856 = vmatpush2.msra.mxu0 0.0
  %857 = vmatprep.subr.mxu0 0.0
  %858 = vmatpush2.msra.mxu0 0.0
  %859 = vmatprep.subr.mxu0 0.0
  %860 = vmatpush2.msra.mxu0 0.0
  %861 = vmatprep.subr.mxu0 0.0
  %862 = vmatpush2.msra.mxu0 0.0
  %863 = vmatprep.subr.mxu0 0.0
  %864 = vmatpush2.msra.mxu0 0.0
  %865 = vmatprep.subr.mxu0 0.0
  %866 = vmatpush2.msra.mxu0 0.0
  %867 = vmatprep.subr.mxu0 0.0
  %868 = vmatpush2.msra.mxu0 0.0
  %869 = vmatprep.subr.mxu0 0.0
  %870 = vmatpush2.msra.mxu0 0.0
  %871 = vmatprep.subr.mxu0 0.0
  %872 = vmatpush2.msra.mxu0 0.0
  %873 = vmatprep.mubr.f32.mxu0 0.0
  %874 = vmatmul.mubr.f32.gmra.mxu0 %v731
  %v875 = vpop.f32.mrf.mxu0
  %v876 = vadd.f32 0.0, %v875
  %v877 = vpop.f32.mrf.mxu0
  %878 = vdwg.mxu0
  %v879 = vadd.f32 %v735, %v805
  %v880 = vmul.f32 %v879, 0.5
  %v881 = vtanh.pop %v880
  %v882 = vmul.f32 %v881, 0.5
  %v883 = vadd.f32 %v882, 0.5
  %v884 = vadd.f32 %v736, %v807
  %v885 = vmul.f32 %v884, 0.5
  %v886 = vtanh.pop %v885
  %v887 = vmul.f32 %v886, 0.5
  %v888 = vadd.f32 %v887, 0.5
  %v889 = vadd.f32 %v876, %v406
  %v890 = vmul.f32 %v883, %v889
  %v891 = vadd.f32 %v737, %v890
  %v892 = vtanh.pop %v891
  %v893 = vsub.f32 %v731, %v892
  %v894 = vmul.f32 %v888, %v893
  %v895 = vadd.f32 %v892, %v894
  %s896 = scalar_lea.vmem [#allocation2], 16
  %897 = vst [vmem:[%s896] sm:$0xff] %v895
  %s898 = scalar_lea.vmem [#allocation3], 72
  %v899 = vld [vmem:[%s898] sm:$0xff]
  %v900 = vld [vmem:[%s898 + $0x8] sm:$0xff]
  %v901 = vld [vmem:[%s898 + $0x10] sm:$0xff]
  %902 = vmatprep.subr.mxu0 %v132
  %903 = vmatpush1.msra.mxu0 %v131
  %904 = vmatprep.subr.mxu0 %v129
  %905 = vmatpush1.msra.mxu0 %v128
  %906 = vmatprep.subr.mxu0 %v126
  %907 = vmatpush1.msra.mxu0 %v125
  %908 = vmatprep.subr.mxu0 %v123
  %909 = vmatpush1.msra.mxu0 %v122
  %910 = vmatprep.subr.mxu0 %v120
  %911 = vmatpush1.msra.mxu0 %v119
  %912 = vmatprep.subr.mxu0 %v117
  %913 = vmatpush1.msra.mxu0 %v116
  %914 = vmatprep.subr.mxu0 %v114
  %915 = vmatpush1.msra.mxu0 %v113
  %916 = vmatprep.subr.mxu0 %v111
  %917 = vmatpush1.msra.mxu0 %v110
  %918 = vmatprep.subr.mxu0 %v108
  %919 = vmatpush1.msra.mxu0 %v107
  %920 = vmatprep.subr.mxu0 %v105
  %921 = vmatpush1.msra.mxu0 %v104
  %922 = vmatprep.subr.mxu0 %v102
  %923 = vmatpush1.msra.mxu0 %v101
  %924 = vmatprep.subr.mxu0 %v99
  %925 = vmatpush1.msra.mxu0 %v98
  %926 = vmatprep.subr.mxu0 %v96
  %927 = vmatpush1.msra.mxu0 %v95
  %928 = vmatprep.subr.mxu0 %v93
  %929 = vmatpush1.msra.mxu0 %v92
  %930 = vmatprep.subr.mxu0 %v90
  %931 = vmatpush1.msra.mxu0 %v89
  %932 = vmatprep.subr.mxu0 %v87
  %933 = vmatpush1.msra.mxu0 %v86
  %934 = vmatprep.subr.mxu0 0.0
  %935 = vmatpush2.msra.mxu0 0.0
  %936 = vmatprep.subr.mxu0 0.0
  %937 = vmatpush2.msra.mxu0 0.0
  %938 = vmatprep.subr.mxu0 0.0
  %939 = vmatpush2.msra.mxu0 0.0
  %940 = vmatprep.subr.mxu0 0.0
  %941 = vmatpush2.msra.mxu0 0.0
  %942 = vmatprep.subr.mxu0 0.0
  %943 = vmatpush2.msra.mxu0 0.0
  %944 = vmatprep.subr.mxu0 0.0
  %945 = vmatpush2.msra.mxu0 0.0
  %946 = vmatprep.subr.mxu0 0.0
  %947 = vmatpush2.msra.mxu0 0.0
  %948 = vmatprep.subr.mxu0 0.0
  %949 = vmatpush2.msra.mxu0 0.0
  %950 = vmatprep.subr.mxu0 0.0
  %951 = vmatpush2.msra.mxu0 0.0
  %952 = vmatprep.subr.mxu0 0.0
  %953 = vmatpush2.msra.mxu0 0.0
  %954 = vmatprep.subr.mxu0 0.0
  %955 = vmatpush2.msra.mxu0 0.0
  %956 = vmatprep.subr.mxu0 0.0
  %957 = vmatpush2.msra.mxu0 0.0
  %958 = vmatprep.subr.mxu0 0.0
  %959 = vmatpush2.msra.mxu0 0.0
  %960 = vmatprep.subr.mxu0 0.0
  %961 = vmatpush2.msra.mxu0 0.0
  %962 = vmatprep.subr.mxu0 0.0
  %963 = vmatpush2.msra.mxu0 0.0
  %964 = vmatprep.subr.mxu0 0.0
  %965 = vmatpush2.msra.mxu0 0.0
  %966 = vmatprep.mubr.f32.mxu0 0.0
  %967 = vmatmul.mubr.f32.gmra.mxu0 %v895
  %v968 = vpop.f32.mrf.mxu0
  %v969 = vadd.f32 0.0, %v968
  %v970 = vpop.f32.mrf.mxu0
  %v971 = vadd.f32 0.0, %v970
  %972 = vdwg.mxu0
  %973 = vmatprep.subr.mxu0 0.0
  %974 = vmatpush1.msra.mxu0 %v133
  %975 = vmatprep.subr.mxu0 0.0
  %976 = vmatpush1.msra.mxu0 %v130
  %977 = vmatprep.subr.mxu0 0.0
  %978 = vmatpush1.msra.mxu0 %v127
  %979 = vmatprep.subr.mxu0 0.0
  %980 = vmatpush1.msra.mxu0 %v124
  %981 = vmatprep.subr.mxu0 0.0
  %982 = vmatpush1.msra.mxu0 %v121
  %983 = vmatprep.subr.mxu0 0.0
  %984 = vmatpush1.msra.mxu0 %v118
  %985 = vmatprep.subr.mxu0 0.0
  %986 = vmatpush1.msra.mxu0 %v115
  %987 = vmatprep.subr.mxu0 0.0
  %988 = vmatpush1.msra.mxu0 %v112
  %989 = vmatprep.subr.mxu0 0.0
  %990 = vmatpush1.msra.mxu0 %v109
  %991 = vmatprep.subr.mxu0 0.0
  %992 = vmatpush1.msra.mxu0 %v106
  %993 = vmatprep.subr.mxu0 0.0
  %994 = vmatpush1.msra.mxu0 %v103
  %995 = vmatprep.subr.mxu0 0.0
  %996 = vmatpush1.msra.mxu0 %v100
  %997 = vmatprep.subr.mxu0 0.0
  %998 = vmatpush1.msra.mxu0 %v97
  %999 = vmatprep.subr.mxu0 0.0
  %1000 = vmatpush1.msra.mxu0 %v94
  %1001 = vmatprep.subr.mxu0 0.0
  %1002 = vmatpush1.msra.mxu0 %v91
  %1003 = vmatprep.subr.mxu0 0.0
  %1004 = vmatpush1.msra.mxu0 %v88
  %1005 = vmatprep.subr.mxu0 0.0
  %1006 = vmatpush2.msra.mxu0 0.0
  %1007 = vmatprep.subr.mxu0 0.0
  %1008 = vmatpush2.msra.mxu0 0.0
  %1009 = vmatprep.subr.mxu0 0.0
  %1010 = vmatpush2.msra.mxu0 0.0
  %1011 = vmatprep.subr.mxu0 0.0
  %1012 = vmatpush2.msra.mxu0 0.0
  %1013 = vmatprep.subr.mxu0 0.0
  %1014 = vmatpush2.msra.mxu0 0.0
  %1015 = vmatprep.subr.mxu0 0.0
  %1016 = vmatpush2.msra.mxu0 0.0
  %1017 = vmatprep.subr.mxu0 0.0
  %1018 = vmatpush2.msra.mxu0 0.0
  %1019 = vmatprep.subr.mxu0 0.0
  %1020 = vmatpush2.msra.mxu0 0.0
  %1021 = vmatprep.subr.mxu0 0.0
  %1022 = vmatpush2.msra.mxu0 0.0
  %1023 = vmatprep.subr.mxu0 0.0
  %1024 = vmatpush2.msra.mxu0 0.0
  %1025 = vmatprep.subr.mxu0 0.0
  %1026 = vmatpush2.msra.mxu0 0.0
  %1027 = vmatprep.subr.mxu0 0.0
  %1028 = vmatpush2.msra.mxu0 0.0
  %1029 = vmatprep.subr.mxu0 0.0
  %1030 = vmatpush2.msra.mxu0 0.0
  %1031 = vmatprep.subr.mxu0 0.0
  %1032 = vmatpush2.msra.mxu0 0.0
  %1033 = vmatprep.subr.mxu0 0.0
  %1034 = vmatpush2.msra.mxu0 0.0
  %1035 = vmatprep.subr.mxu0 0.0
  %1036 = vmatpush2.msra.mxu0 0.0
  %1037 = vmatprep.mubr.f32.mxu0 0.0
  %1038 = vmatmul.mubr.f32.gmra.mxu0 %v895
  %v1039 = vpop.f32.mrf.mxu0
  %v1040 = vadd.f32 0.0, %v1039
  %v1041 = vpop.f32.mrf.mxu0
  %1042 = vdwg.mxu0
  %v1043 = vadd.f32 %v899, %v969
  %v1044 = vmul.f32 %v1043, 0.5
  %v1045 = vtanh.pop %v1044
  %v1046 = vmul.f32 %v1045, 0.5
  %v1047 = vadd.f32 %v1046, 0.5
  %v1048 = vadd.f32 %v900, %v971
  %v1049 = vmul.f32 %v1048, 0.5
  %v1050 = vtanh.pop %v1049
  %v1051 = vmul.f32 %v1050, 0.5
  %v1052 = vadd.f32 %v1051, 0.5
  %v1053 = vadd.f32 %v1040, %v406
  %v1054 = vmul.f32 %v1047, %v1053
  %v1055 = vadd.f32 %v901, %v1054
  %v1056 = vtanh.pop %v1055
  %v1057 = vsub.f32 %v895, %v1056
  %v1058 = vmul.f32 %v1052, %v1057
  %v1059 = vadd.f32 %v1056, %v1058
  %s1060 = scalar_lea.vmem [#allocation2], 24
  %1061 = vst [vmem:[%s1060] sm:$0xff] %v1059
  %s1062 = scalar_lea.vmem [#allocation3], 96
  %v1063 = vld [vmem:[%s1062] sm:$0xff]
  %v1064 = vld [vmem:[%s1062 + $0x8] sm:$0xff]
  %v1065 = vld [vmem:[%s1062 + $0x10] sm:$0xff]
  %1066 = vmatprep.subr.mxu0 %v132
  %1067 = vmatpush1.msra.mxu0 %v131
  %1068 = vmatprep.subr.mxu0 %v129
  %1069 = vmatpush1.msra.mxu0 %v128
  %1070 = vmatprep.subr.mxu0 %v126
  %1071 = vmatpush1.msra.mxu0 %v125
  %1072 = vmatprep.subr.mxu0 %v123
  %1073 = vmatpush1.msra.mxu0 %v122
  %1074 = vmatprep.subr.mxu0 %v120
  %1075 = vmatpush1.msra.mxu0 %v119
  %1076 = vmatprep.subr.mxu0 %v117
  %1077 = vmatpush1.msra.mxu0 %v116
  %1078 = vmatprep.subr.mxu0 %v114
  %1079 = vmatpush1.msra.mxu0 %v113
  %1080 = vmatprep.subr.mxu0 %v111
  %1081 = vmatpush1.msra.mxu0 %v110
  %1082 = vmatprep.subr.mxu0 %v108
  %1083 = vmatpush1.msra.mxu0 %v107
  %1084 = vmatprep.subr.mxu0 %v105
  %1085 = vmatpush1.msra.mxu0 %v104
  %1086 = vmatprep.subr.mxu0 %v102
  %1087 = vmatpush1.msra.mxu0 %v101
  %1088 = vmatprep.subr.mxu0 %v99
  %1089 = vmatpush1.msra.mxu0 %v98
  %1090 = vmatprep.subr.mxu0 %v96
  %1091 = vmatpush1.msra.mxu0 %v95
  %1092 = vmatprep.subr.mxu0 %v93
  %1093 = vmatpush1.msra.mxu0 %v92
  %1094 = vmatprep.subr.mxu0 %v90
  %1095 = vmatpush1.msra.mxu0 %v89
  %1096 = vmatprep.subr.mxu0 %v87
  %1097 = vmatpush1.msra.mxu0 %v86
  %1098 = vmatprep.subr.mxu0 0.0
  %1099 = vmatpush2.msra.mxu0 0.0
  %1100 = vmatprep.subr.mxu0 0.0
  %1101 = vmatpush2.msra.mxu0 0.0
  %1102 = vmatprep.subr.mxu0 0.0
  %1103 = vmatpush2.msra.mxu0 0.0
  %1104 = vmatprep.subr.mxu0 0.0
  %1105 = vmatpush2.msra.mxu0 0.0
  %1106 = vmatprep.subr.mxu0 0.0
  %1107 = vmatpush2.msra.mxu0 0.0
  %1108 = vmatprep.subr.mxu0 0.0
  %1109 = vmatpush2.msra.mxu0 0.0
  %1110 = vmatprep.subr.mxu0 0.0
  %1111 = vmatpush2.msra.mxu0 0.0
  %1112 = vmatprep.subr.mxu0 0.0
  %1113 = vmatpush2.msra.mxu0 0.0
  %1114 = vmatprep.subr.mxu0 0.0
  %1115 = vmatpush2.msra.mxu0 0.0
  %1116 = vmatprep.subr.mxu0 0.0
  %1117 = vmatpush2.msra.mxu0 0.0
  %1118 = vmatprep.subr.mxu0 0.0
  %1119 = vmatpush2.msra.mxu0 0.0
  %1120 = vmatprep.subr.mxu0 0.0
  %1121 = vmatpush2.msra.mxu0 0.0
  %1122 = vmatprep.subr.mxu0 0.0
  %1123 = vmatpush2.msra.mxu0 0.0
  %1124 = vmatprep.subr.mxu0 0.0
  %1125 = vmatpush2.msra.mxu0 0.0
  %1126 = vmatprep.subr.mxu0 0.0
  %1127 = vmatpush2.msra.mxu0 0.0
  %1128 = vmatprep.subr.mxu0 0.0
  %1129 = vmatpush2.msra.mxu0 0.0
  %1130 = vmatprep.mubr.f32.mxu0 0.0
  %1131 = vmatmul.mubr.f32.gmra.mxu0 %v1059
  %v1132 = vpop.f32.mrf.mxu0
  %v1133 = vadd.f32 0.0, %v1132
  %v1134 = vpop.f32.mrf.mxu0
  %v1135 = vadd.f32 0.0, %v1134
  %1136 = vdwg.mxu0
  %1137 = vmatprep.subr.mxu0 0.0
  %1138 = vmatpush1.msra.mxu0 %v133
  %1139 = vmatprep.subr.mxu0 0.0
  %1140 = vmatpush1.msra.mxu0 %v130
  %1141 = vmatprep.subr.mxu0 0.0
  %1142 = vmatpush1.msra.mxu0 %v127
  %1143 = vmatprep.subr.mxu0 0.0
  %1144 = vmatpush1.msra.mxu0 %v124
  %1145 = vmatprep.subr.mxu0 0.0
  %1146 = vmatpush1.msra.mxu0 %v121
  %1147 = vmatprep.subr.mxu0 0.0
  %1148 = vmatpush1.msra.mxu0 %v118
  %1149 = vmatprep.subr.mxu0 0.0
  %1150 = vmatpush1.msra.mxu0 %v115
  %1151 = vmatprep.subr.mxu0 0.0
  %1152 = vmatpush1.msra.mxu0 %v112
  %1153 = vmatprep.subr.mxu0 0.0
  %1154 = vmatpush1.msra.mxu0 %v109
  %1155 = vmatprep.subr.mxu0 0.0
  %1156 = vmatpush1.msra.mxu0 %v106
  %1157 = vmatprep.subr.mxu0 0.0
  %1158 = vmatpush1.msra.mxu0 %v103
  %1159 = vmatprep.subr.mxu0 0.0
  %1160 = vmatpush1.msra.mxu0 %v100
  %1161 = vmatprep.subr.mxu0 0.0
  %1162 = vmatpush1.msra.mxu0 %v97
  %1163 = vmatprep.subr.mxu0 0.0
  %1164 = vmatpush1.msra.mxu0 %v94
  %1165 = vmatprep.subr.mxu0 0.0
  %1166 = vmatpush1.msra.mxu0 %v91
  %1167 = vmatprep.subr.mxu0 0.0
  %1168 = vmatpush1.msra.mxu0 %v88
  %1169 = vmatprep.subr.mxu0 0.0
  %1170 = vmatpush2.msra.mxu0 0.0
  %1171 = vmatprep.subr.mxu0 0.0
  %1172 = vmatpush2.msra.mxu0 0.0
  %1173 = vmatprep.subr.mxu0 0.0
  %1174 = vmatpush2.msra.mxu0 0.0
  %1175 = vmatprep.subr.mxu0 0.0
  %1176 = vmatpush2.msra.mxu0 0.0
  %1177 = vmatprep.subr.mxu0 0.0
  %1178 = vmatpush2.msra.mxu0 0.0
  %1179 = vmatprep.subr.mxu0 0.0
  %1180 = vmatpush2.msra.mxu0 0.0
  %1181 = vmatprep.subr.mxu0 0.0
  %1182 = vmatpush2.msra.mxu0 0.0
  %1183 = vmatprep.subr.mxu0 0.0
  %1184 = vmatpush2.msra.mxu0 0.0
  %1185 = vmatprep.subr.mxu0 0.0
  %1186 = vmatpush2.msra.mxu0 0.0
  %1187 = vmatprep.subr.mxu0 0.0
  %1188 = vmatpush2.msra.mxu0 0.0
  %1189 = vmatprep.subr.mxu0 0.0
  %1190 = vmatpush2.msra.mxu0 0.0
  %1191 = vmatprep.subr.mxu0 0.0
  %1192 = vmatpush2.msra.mxu0 0.0
  %1193 = vmatprep.subr.mxu0 0.0
  %1194 = vmatpush2.msra.mxu0 0.0
  %1195 = vmatprep.subr.mxu0 0.0
  %1196 = vmatpush2.msra.mxu0 0.0
  %1197 = vmatprep.subr.mxu0 0.0
  %1198 = vmatpush2.msra.mxu0 0.0
  %1199 = vmatprep.subr.mxu0 0.0
  %1200 = vmatpush2.msra.mxu0 0.0
  %1201 = vmatprep.mubr.f32.mxu0 0.0
  %1202 = vmatmul.mubr.f32.gmra.mxu0 %v1059
  %v1203 = vpop.f32.mrf.mxu0
  %v1204 = vadd.f32 0.0, %v1203
  %v1205 = vpop.f32.mrf.mxu0
  %1206 = vdwg.mxu0
  %v1207 = vadd.f32 %v1063, %v1133
  %v1208 = vmul.f32 %v1207, 0.5
  %v1209 = vtanh.pop %v1208
  %v1210 = vmul.f32 %v1209, 0.5
  %v1211 = vadd.f32 %v1210, 0.5
  %v1212 = vadd.f32 %v1064, %v1135
  %v1213 = vmul.f32 %v1212, 0.5
  %v1214 = vtanh.pop %v1213
  %v1215 = vmul.f32 %v1214, 0.5
  %v1216 = vadd.f32 %v1215, 0.5
  %v1217 = vadd.f32 %v1204, %v406
  %v1218 = vmul.f32 %v1211, %v1217
  %v1219 = vadd.f32 %v1065, %v1218
  %v1220 = vtanh.pop %v1219
  %v1221 = vsub.f32 %v1059, %v1220
  %v1222 = vmul.f32 %v1216, %v1221
  %v1223 = vadd.f32 %v1220, %v1222
  %s1224 = scalar_lea.vmem [#allocation2], 32
  %1225 = vst [vmem:[%s1224] sm:$0xff] %v1223
  %s1226 = scalar_lea.vmem [#allocation3], 120
  %v1227 = vld [vmem:[%s1226] sm:$0xff]
  %v1228 = vld [vmem:[%s1226 + $0x8] sm:$0xff]
  %v1229 = vld [vmem:[%s1226 + $0x10] sm:$0xff]
  %1230 = vmatprep.subr.mxu0 %v132
  %1231 = vmatpush1.msra.mxu0 %v131
  %1232 = vmatprep.subr.mxu0 %v129
  %1233 = vmatpush1.msra.mxu0 %v128
  %1234 = vmatprep.subr.mxu0 %v126
  %1235 = vmatpush1.msra.mxu0 %v125
  %1236 = vmatprep.subr.mxu0 %v123
  %1237 = vmatpush1.msra.mxu0 %v122
  %1238 = vmatprep.subr.mxu0 %v120
  %1239 = vmatpush1.msra.mxu0 %v119
  %1240 = vmatprep.subr.mxu0 %v117
  %1241 = vmatpush1.msra.mxu0 %v116
  %1242 = vmatprep.subr.mxu0 %v114
  %1243 = vmatpush1.msra.mxu0 %v113
  %1244 = vmatprep.subr.mxu0 %v111
  %1245 = vmatpush1.msra.mxu0 %v110
  %1246 = vmatprep.subr.mxu0 %v108
  %1247 = vmatpush1.msra.mxu0 %v107
  %1248 = vmatprep.subr.mxu0 %v105
  %1249 = vmatpush1.msra.mxu0 %v104
  %1250 = vmatprep.subr.mxu0 %v102
  %1251 = vmatpush1.msra.mxu0 %v101
  %1252 = vmatprep.subr.mxu0 %v99
  %1253 = vmatpush1.msra.mxu0 %v98
  %1254 = vmatprep.subr.mxu0 %v96
  %1255 = vmatpush1.msra.mxu0 %v95
  %1256 = vmatprep.subr.mxu0 %v93
  %1257 = vmatpush1.msra.mxu0 %v92
  %1258 = vmatprep.subr.mxu0 %v90
  %1259 = vmatpush1.msra.mxu0 %v89
  %1260 = vmatprep.subr.mxu0 %v87
  %1261 = vmatpush1.msra.mxu0 %v86
  %1262 = vmatprep.subr.mxu0 0.0
  %1263 = vmatpush2.msra.mxu0 0.0
  %1264 = vmatprep.subr.mxu0 0.0
  %1265 = vmatpush2.msra.mxu0 0.0
  %1266 = vmatprep.subr.mxu0 0.0
  %1267 = vmatpush2.msra.mxu0 0.0
  %1268 = vmatprep.subr.mxu0 0.0
  %1269 = vmatpush2.msra.mxu0 0.0
  %1270 = vmatprep.subr.mxu0 0.0
  %1271 = vmatpush2.msra.mxu0 0.0
  %1272 = vmatprep.subr.mxu0 0.0
  %1273 = vmatpush2.msra.mxu0 0.0
  %1274 = vmatprep.subr.mxu0 0.0
  %1275 = vmatpush2.msra.mxu0 0.0
  %1276 = vmatprep.subr.mxu0 0.0
  %1277 = vmatpush2.msra.mxu0 0.0
  %1278 = vmatprep.subr.mxu0 0.0
  %1279 = vmatpush2.msra.mxu0 0.0
  %1280 = vmatprep.subr.mxu0 0.0
  %1281 = vmatpush2.msra.mxu0 0.0
  %1282 = vmatprep.subr.mxu0 0.0
  %1283 = vmatpush2.msra.mxu0 0.0
  %1284 = vmatprep.subr.mxu0 0.0
  %1285 = vmatpush2.msra.mxu0 0.0
  %1286 = vmatprep.subr.mxu0 0.0
  %1287 = vmatpush2.msra.mxu0 0.0
  %1288 = vmatprep.subr.mxu0 0.0
  %1289 = vmatpush2.msra.mxu0 0.0
  %1290 = vmatprep.subr.mxu0 0.0
  %1291 = vmatpush2.msra.mxu0 0.0
  %1292 = vmatprep.subr.mxu0 0.0
  %1293 = vmatpush2.msra.mxu0 0.0
  %1294 = vmatprep.mubr.f32.mxu0 0.0
  %1295 = vmatmul.mubr.f32.gmra.mxu0 %v1223
  %v1296 = vpop.f32.mrf.mxu0
  %v1297 = vadd.f32 0.0, %v1296
  %v1298 = vpop.f32.mrf.mxu0
  %v1299 = vadd.f32 0.0, %v1298
  %1300 = vdwg.mxu0
  %1301 = vmatprep.subr.mxu0 0.0
  %1302 = vmatpush1.msra.mxu0 %v133
  %1303 = vmatprep.subr.mxu0 0.0
  %1304 = vmatpush1.msra.mxu0 %v130
  %1305 = vmatprep.subr.mxu0 0.0
  %1306 = vmatpush1.msra.mxu0 %v127
  %1307 = vmatprep.subr.mxu0 0.0
  %1308 = vmatpush1.msra.mxu0 %v124
  %1309 = vmatprep.subr.mxu0 0.0
  %1310 = vmatpush1.msra.mxu0 %v121
  %1311 = vmatprep.subr.mxu0 0.0
  %1312 = vmatpush1.msra.mxu0 %v118
  %1313 = vmatprep.subr.mxu0 0.0
  %1314 = vmatpush1.msra.mxu0 %v115
  %1315 = vmatprep.subr.mxu0 0.0
  %1316 = vmatpush1.msra.mxu0 %v112
  %1317 = vmatprep.subr.mxu0 0.0
  %1318 = vmatpush1.msra.mxu0 %v109
  %1319 = vmatprep.subr.mxu0 0.0
  %1320 = vmatpush1.msra.mxu0 %v106
  %1321 = vmatprep.subr.mxu0 0.0
  %1322 = vmatpush1.msra.mxu0 %v103
  %1323 = vmatprep.subr.mxu0 0.0
  %1324 = vmatpush1.msra.mxu0 %v100
  %1325 = vmatprep.subr.mxu0 0.0
  %1326 = vmatpush1.msra.mxu0 %v97
  %1327 = vmatprep.subr.mxu0 0.0
  %1328 = vmatpush1.msra.mxu0 %v94
  %1329 = vmatprep.subr.mxu0 0.0
  %1330 = vmatpush1.msra.mxu0 %v91
  %1331 = vmatprep.subr.mxu0 0.0
  %1332 = vmatpush1.msra.mxu0 %v88
  %1333 = vmatprep.subr.mxu0 0.0
  %1334 = vmatpush2.msra.mxu0 0.0
  %1335 = vmatprep.subr.mxu0 0.0
  %1336 = vmatpush2.msra.mxu0 0.0
  %1337 = vmatprep.subr.mxu0 0.0
  %1338 = vmatpush2.msra.mxu0 0.0
  %1339 = vmatprep.subr.mxu0 0.0
  %1340 = vmatpush2.msra.mxu0 0.0
  %1341 = vmatprep.subr.mxu0 0.0
  %1342 = vmatpush2.msra.mxu0 0.0
  %1343 = vmatprep.subr.mxu0 0.0
  %1344 = vmatpush2.msra.mxu0 0.0
  %1345 = vmatprep.subr.mxu0 0.0
  %1346 = vmatpush2.msra.mxu0 0.0
  %1347 = vmatprep.subr.mxu0 0.0
  %1348 = vmatpush2.msra.mxu0 0.0
  %1349 = vmatprep.subr.mxu0 0.0
  %1350 = vmatpush2.msra.mxu0 0.0
  %1351 = vmatprep.subr.mxu0 0.0
  %1352 = vmatpush2.msra.mxu0 0.0
  %1353 = vmatprep.subr.mxu0 0.0
  %1354 = vmatpush2.msra.mxu0 0.0
  %1355 = vmatprep.subr.mxu0 0.0
  %1356 = vmatpush2.msra.mxu0 0.0
  %1357 = vmatprep.subr.mxu0 0.0
  %1358 = vmatpush2.msra.mxu0 0.0
  %1359 = vmatprep.subr.mxu0 0.0
  %1360 = vmatpush2.msra.mxu0 0.0
  %1361 = vmatprep.subr.mxu0 0.0
  %1362 = vmatpush2.msra.mxu0 0.0
  %1363 = vmatprep.subr.mxu0 0.0
  %1364 = vmatpush2.msra.mxu0 0.0
  %1365 = vmatprep.mubr.f32.mxu0 0.0
  %1366 = vmatmul.mubr.f32.gmra.mxu0 %v1223
  %v1367 = vpop.f32.mrf.mxu0
  %v1368 = vadd.f32 0.0, %v1367
  %v1369 = vpop.f32.mrf.mxu0
  %1370 = vdwg.mxu0
  %v1371 = vadd.f32 %v1227, %v1297
  %v1372 = vmul.f32 %v1371, 0.5
  %v1373 = vtanh.pop %v1372
  %v1374 = vmul.f32 %v1373, 0.5
  %v1375 = vadd.f32 %v1374, 0.5
  %v1376 = vadd.f32 %v1228, %v1299
  %v1377 = vmul.f32 %v1376, 0.5
  %v1378 = vtanh.pop %v1377
  %v1379 = vmul.f32 %v1378, 0.5
  %v1380 = vadd.f32 %v1379, 0.5
  %v1381 = vadd.f32 %v1368, %v406
  %v1382 = vmul.f32 %v1375, %v1381
  %v1383 = vadd.f32 %v1229, %v1382
  %v1384 = vtanh.pop %v1383
  %v1385 = vsub.f32 %v1223, %v1384
  %v1386 = vmul.f32 %v1380, %v1385
  %v1387 = vadd.f32 %v1384, %v1386
  %s1388 = scalar_lea.vmem [#allocation2], 40
  %1389 = vst [vmem:[%s1388] sm:$0xff] %v1387
  %s1390 = scalar_lea.vmem [#allocation3], 144
  %v1391 = vld [vmem:[%s1390] sm:$0xff]
  %v1392 = vld [vmem:[%s1390 + $0x8] sm:$0xff]
  %v1393 = vld [vmem:[%s1390 + $0x10] sm:$0xff]
  %1394 = vmatprep.subr.mxu0 %v132
  %1395 = vmatpush1.msra.mxu0 %v131
  %1396 = vmatprep.subr.mxu0 %v129
  %1397 = vmatpush1.msra.mxu0 %v128
  %1398 = vmatprep.subr.mxu0 %v126
  %1399 = vmatpush1.msra.mxu0 %v125
  %1400 = vmatprep.subr.mxu0 %v123
  %1401 = vmatpush1.msra.mxu0 %v122
  %1402 = vmatprep.subr.mxu0 %v120
  %1403 = vmatpush1.msra.mxu0 %v119
  %1404 = vmatprep.subr.mxu0 %v117
  %1405 = vmatpush1.msra.mxu0 %v116
  %1406 = vmatprep.subr.mxu0 %v114
  %1407 = vmatpush1.msra.mxu0 %v113
  %1408 = vmatprep.subr.mxu0 %v111
  %1409 = vmatpush1.msra.mxu0 %v110
  %1410 = vmatprep.subr.mxu0 %v108
  %1411 = vmatpush1.msra.mxu0 %v107
  %1412 = vmatprep.subr.mxu0 %v105
  %1413 = vmatpush1.msra.mxu0 %v104
  %1414 = vmatprep.subr.mxu0 %v102
  %1415 = vmatpush1.msra.mxu0 %v101
  %1416 = vmatprep.subr.mxu0 %v99
  %1417 = vmatpush1.msra.mxu0 %v98
  %1418 = vmatprep.subr.mxu0 %v96
  %1419 = vmatpush1.msra.mxu0 %v95
  %1420 = vmatprep.subr.mxu0 %v93
  %1421 = vmatpush1.msra.mxu0 %v92
  %1422 = vmatprep.subr.mxu0 %v90
  %1423 = vmatpush1.msra.mxu0 %v89
  %1424 = vmatprep.subr.mxu0 %v87
  %1425 = vmatpush1.msra.mxu0 %v86
  %1426 = vmatprep.subr.mxu0 0.0
  %1427 = vmatpush2.msra.mxu0 0.0
  %1428 = vmatprep.subr.mxu0 0.0
  %1429 = vmatpush2.msra.mxu0 0.0
  %1430 = vmatprep.subr.mxu0 0.0
  %1431 = vmatpush2.msra.mxu0 0.0
  %1432 = vmatprep.subr.mxu0 0.0
  %1433 = vmatpush2.msra.mxu0 0.0
  %1434 = vmatprep.subr.mxu0 0.0
  %1435 = vmatpush2.msra.mxu0 0.0
  %1436 = vmatprep.subr.mxu0 0.0
  %1437 = vmatpush2.msra.mxu0 0.0
  %1438 = vmatprep.subr.mxu0 0.0
  %1439 = vmatpush2.msra.mxu0 0.0
  %1440 = vmatprep.subr.mxu0 0.0
  %1441 = vmatpush2.msra.mxu0 0.0
  %1442 = vmatprep.subr.mxu0 0.0
  %1443 = vmatpush2.msra.mxu0 0.0
  %1444 = vmatprep.subr.mxu0 0.0
  %1445 = vmatpush2.msra.mxu0 0.0
  %1446 = vmatprep.subr.mxu0 0.0
  %1447 = vmatpush2.msra.mxu0 0.0
  %1448 = vmatprep.subr.mxu0 0.0
  %1449 = vmatpush2.msra.mxu0 0.0
  %1450 = vmatprep.subr.mxu0 0.0
  %1451 = vmatpush2.msra.mxu0 0.0
  %1452 = vmatprep.subr.mxu0 0.0
  %1453 = vmatpush2.msra.mxu0 0.0
  %1454 = vmatprep.subr.mxu0 0.0
  %1455 = vmatpush2.msra.mxu0 0.0
  %1456 = vmatprep.subr.mxu0 0.0
  %1457 = vmatpush2.msra.mxu0 0.0
  %1458 = vmatprep.mubr.f32.mxu0 0.0
  %1459 = vmatmul.mubr.f32.gmra.mxu0 %v1387
  %v1460 = vpop.f32.mrf.mxu0
  %v1461 = vadd.f32 0.0, %v1460
  %v1462 = vpop.f32.mrf.mxu0
  %v1463 = vadd.f32 0.0, %v1462
  %1464 = vdwg.mxu0
  %1465 = vmatprep.subr.mxu0 0.0
  %1466 = vmatpush1.msra.mxu0 %v133
  %1467 = vmatprep.subr.mxu0 0.0
  %1468 = vmatpush1.msra.mxu0 %v130
  %1469 = vmatprep.subr.mxu0 0.0
  %1470 = vmatpush1.msra.mxu0 %v127
  %1471 = vmatprep.subr.mxu0 0.0
  %1472 = vmatpush1.msra.mxu0 %v124
  %1473 = vmatprep.subr.mxu0 0.0
  %1474 = vmatpush1.msra.mxu0 %v121
  %1475 = vmatprep.subr.mxu0 0.0
  %1476 = vmatpush1.msra.mxu0 %v118
  %1477 = vmatprep.subr.mxu0 0.0
  %1478 = vmatpush1.msra.mxu0 %v115
  %1479 = vmatprep.subr.mxu0 0.0
  %1480 = vmatpush1.msra.mxu0 %v112
  %1481 = vmatprep.subr.mxu0 0.0
  %1482 = vmatpush1.msra.mxu0 %v109
  %1483 = vmatprep.subr.mxu0 0.0
  %1484 = vmatpush1.msra.mxu0 %v106
  %1485 = vmatprep.subr.mxu0 0.0
  %1486 = vmatpush1.msra.mxu0 %v103
  %1487 = vmatprep.subr.mxu0 0.0
  %1488 = vmatpush1.msra.mxu0 %v100
  %1489 = vmatprep.subr.mxu0 0.0
  %1490 = vmatpush1.msra.mxu0 %v97
  %1491 = vmatprep.subr.mxu0 0.0
  %1492 = vmatpush1.msra.mxu0 %v94
  %1493 = vmatprep.subr.mxu0 0.0
  %1494 = vmatpush1.msra.mxu0 %v91
  %1495 = vmatprep.subr.mxu0 0.0
  %1496 = vmatpush1.msra.mxu0 %v88
  %1497 = vmatprep.subr.mxu0 0.0
  %1498 = vmatpush2.msra.mxu0 0.0
  %1499 = vmatprep.subr.mxu0 0.0
  %1500 = vmatpush2.msra.mxu0 0.0
  %1501 = vmatprep.subr.mxu0 0.0
  %1502 = vmatpush2.msra.mxu0 0.0
  %1503 = vmatprep.subr.mxu0 0.0
  %1504 = vmatpush2.msra.mxu0 0.0
  %1505 = vmatprep.subr.mxu0 0.0
  %1506 = vmatpush2.msra.mxu0 0.0
  %1507 = vmatprep.subr.mxu0 0.0
  %1508 = vmatpush2.msra.mxu0 0.0
  %1509 = vmatprep.subr.mxu0 0.0
  %1510 = vmatpush2.msra.mxu0 0.0
  %1511 = vmatprep.subr.mxu0 0.0
  %1512 = vmatpush2.msra.mxu0 0.0
  %1513 = vmatprep.subr.mxu0 0.0
  %1514 = vmatpush2.msra.mxu0 0.0
  %1515 = vmatprep.subr.mxu0 0.0
  %1516 = vmatpush2.msra.mxu0 0.0
  %1517 = vmatprep.subr.mxu0 0.0
  %1518 = vmatpush2.msra.mxu0 0.0
  %1519 = vmatprep.subr.mxu0 0.0
  %1520 = vmatpush2.msra.mxu0 0.0
  %1521 = vmatprep.subr.mxu0 0.0
  %1522 = vmatpush2.msra.mxu0 0.0
  %1523 = vmatprep.subr.mxu0 0.0
  %1524 = vmatpush2.msra.mxu0 0.0
  %1525 = vmatprep.subr.mxu0 0.0
  %1526 = vmatpush2.msra.mxu0 0.0
  %1527 = vmatprep.subr.mxu0 0.0
  %1528 = vmatpush2.msra.mxu0 0.0
  %1529 = vmatprep.mubr.f32.mxu0 0.0
  %1530 = vmatmul.mubr.f32.gmra.mxu0 %v1387
  %v1531 = vpop.f32.mrf.mxu0
  %v1532 = vadd.f32 0.0, %v1531
  %v1533 = vpop.f32.mrf.mxu0
  %1534 = vdwg.mxu0
  %v1535 = vadd.f32 %v1391, %v1461
  %v1536 = vmul.f32 %v1535, 0.5
  %v1537 = vtanh.pop %v1536
  %v1538 = vmul.f32 %v1537, 0.5
  %v1539 = vadd.f32 %v1538, 0.5
  %v1540 = vadd.f32 %v1392, %v1463
  %v1541 = vmul.f32 %v1540, 0.5
  %v1542 = vtanh.pop %v1541
  %v1543 = vmul.f32 %v1542, 0.5
  %v1544 = vadd.f32 %v1543, 0.5
  %v1545 = vadd.f32 %v1532, %v406
  %v1546 = vmul.f32 %v1539, %v1545
  %v1547 = vadd.f32 %v1393, %v1546
  %v1548 = vtanh.pop %v1547
  %v1549 = vsub.f32 %v1387, %v1548
  %v1550 = vmul.f32 %v1544, %v1549
  %v1551 = vadd.f32 %v1548, %v1550
  %s1552 = scalar_lea.vmem [#allocation2], 48
  %1553 = vst [vmem:[%s1552] sm:$0xff] %v1551
  %s1554 = scalar_lea.vmem [#allocation3], 168
  %v1555 = vld [vmem:[%s1554] sm:$0xff]
  %v1556 = vld [vmem:[%s1554 + $0x8] sm:$0xff]
  %v1557 = vld [vmem:[%s1554 + $0x10] sm:$0xff]
  %1558 = vmatprep.subr.mxu0 %v132
  %1559 = vmatpush1.msra.mxu0 %v131
  %1560 = vmatprep.subr.mxu0 %v129
  %1561 = vmatpush1.msra.mxu0 %v128
  %1562 = vmatprep.subr.mxu0 %v126
  %1563 = vmatpush1.msra.mxu0 %v125
  %1564 = vmatprep.subr.mxu0 %v123
  %1565 = vmatpush1.msra.mxu0 %v122
  %1566 = vmatprep.subr.mxu0 %v120
  %1567 = vmatpush1.msra.mxu0 %v119
  %1568 = vmatprep.subr.mxu0 %v117
  %1569 = vmatpush1.msra.mxu0 %v116
  %1570 = vmatprep.subr.mxu0 %v114
  %1571 = vmatpush1.msra.mxu0 %v113
  %1572 = vmatprep.subr.mxu0 %v111
  %1573 = vmatpush1.msra.mxu0 %v110
  %1574 = vmatprep.subr.mxu0 %v108
  %1575 = vmatpush1.msra.mxu0 %v107
  %1576 = vmatprep.subr.mxu0 %v105
  %1577 = vmatpush1.msra.mxu0 %v104
  %1578 = vmatprep.subr.mxu0 %v102
  %1579 = vmatpush1.msra.mxu0 %v101
  %1580 = vmatprep.subr.mxu0 %v99
  %1581 = vmatpush1.msra.mxu0 %v98
  %1582 = vmatprep.subr.mxu0 %v96
  %1583 = vmatpush1.msra.mxu0 %v95
  %1584 = vmatprep.subr.mxu0 %v93
  %1585 = vmatpush1.msra.mxu0 %v92
  %1586 = vmatprep.subr.mxu0 %v90
  %1587 = vmatpush1.msra.mxu0 %v89
  %1588 = vmatprep.subr.mxu0 %v87
  %1589 = vmatpush1.msra.mxu0 %v86
  %1590 = vmatprep.subr.mxu0 0.0
  %1591 = vmatpush2.msra.mxu0 0.0
  %1592 = vmatprep.subr.mxu0 0.0
  %1593 = vmatpush2.msra.mxu0 0.0
  %1594 = vmatprep.subr.mxu0 0.0
  %1595 = vmatpush2.msra.mxu0 0.0
  %1596 = vmatprep.subr.mxu0 0.0
  %1597 = vmatpush2.msra.mxu0 0.0
  %1598 = vmatprep.subr.mxu0 0.0
  %1599 = vmatpush2.msra.mxu0 0.0
  %1600 = vmatprep.subr.mxu0 0.0
  %1601 = vmatpush2.msra.mxu0 0.0
  %1602 = vmatprep.subr.mxu0 0.0
  %1603 = vmatpush2.msra.mxu0 0.0
  %1604 = vmatprep.subr.mxu0 0.0
  %1605 = vmatpush2.msra.mxu0 0.0
  %1606 = vmatprep.subr.mxu0 0.0
  %1607 = vmatpush2.msra.mxu0 0.0
  %1608 = vmatprep.subr.mxu0 0.0
  %1609 = vmatpush2.msra.mxu0 0.0
  %1610 = vmatprep.subr.mxu0 0.0
  %1611 = vmatpush2.msra.mxu0 0.0
  %1612 = vmatprep.subr.mxu0 0.0
  %1613 = vmatpush2.msra.mxu0 0.0
  %1614 = vmatprep.subr.mxu0 0.0
  %1615 = vmatpush2.msra.mxu0 0.0
  %1616 = vmatprep.subr.mxu0 0.0
  %1617 = vmatpush2.msra.mxu0 0.0
  %1618 = vmatprep.subr.mxu0 0.0
  %1619 = vmatpush2.msra.mxu0 0.0
  %1620 = vmatprep.subr.mxu0 0.0
  %1621 = vmatpush2.msra.mxu0 0.0
  %1622 = vmatprep.mubr.f32.mxu0 0.0
  %1623 = vmatmul.mubr.f32.gmra.mxu0 %v1551
  %v1624 = vpop.f32.mrf.mxu0
  %v1625 = vadd.f32 0.0, %v1624
  %v1626 = vpop.f32.mrf.mxu0
  %v1627 = vadd.f32 0.0, %v1626
  %1628 = vdwg.mxu0
  %1629 = vmatprep.subr.mxu0 0.0
  %1630 = vmatpush1.msra.mxu0 %v133
  %1631 = vmatprep.subr.mxu0 0.0
  %1632 = vmatpush1.msra.mxu0 %v130
  %1633 = vmatprep.subr.mxu0 0.0
  %1634 = vmatpush1.msra.mxu0 %v127
  %1635 = vmatprep.subr.mxu0 0.0
  %1636 = vmatpush1.msra.mxu0 %v124
  %1637 = vmatprep.subr.mxu0 0.0
  %1638 = vmatpush1.msra.mxu0 %v121
  %1639 = vmatprep.subr.mxu0 0.0
  %1640 = vmatpush1.msra.mxu0 %v118
  %1641 = vmatprep.subr.mxu0 0.0
  %1642 = vmatpush1.msra.mxu0 %v115
  %1643 = vmatprep.subr.mxu0 0.0
  %1644 = vmatpush1.msra.mxu0 %v112
  %1645 = vmatprep.subr.mxu0 0.0
  %1646 = vmatpush1.msra.mxu0 %v109
  %1647 = vmatprep.subr.mxu0 0.0
  %1648 = vmatpush1.msra.mxu0 %v106
  %1649 = vmatprep.subr.mxu0 0.0
  %1650 = vmatpush1.msra.mxu0 %v103
  %1651 = vmatprep.subr.mxu0 0.0
  %1652 = vmatpush1.msra.mxu0 %v100
  %1653 = vmatprep.subr.mxu0 0.0
  %1654 = vmatpush1.msra.mxu0 %v97
  %1655 = vmatprep.subr.mxu0 0.0
  %1656 = vmatpush1.msra.mxu0 %v94
  %1657 = vmatprep.subr.mxu0 0.0
  %1658 = vmatpush1.msra.mxu0 %v91
  %1659 = vmatprep.subr.mxu0 0.0
  %1660 = vmatpush1.msra.mxu0 %v88
  %1661 = vmatprep.subr.mxu0 0.0
  %1662 = vmatpush2.msra.mxu0 0.0
  %1663 = vmatprep.subr.mxu0 0.0
  %1664 = vmatpush2.msra.mxu0 0.0
  %1665 = vmatprep.subr.mxu0 0.0
  %1666 = vmatpush2.msra.mxu0 0.0
  %1667 = vmatprep.subr.mxu0 0.0
  %1668 = vmatpush2.msra.mxu0 0.0
  %1669 = vmatprep.subr.mxu0 0.0
  %1670 = vmatpush2.msra.mxu0 0.0
  %1671 = vmatprep.subr.mxu0 0.0
  %1672 = vmatpush2.msra.mxu0 0.0
  %1673 = vmatprep.subr.mxu0 0.0
  %1674 = vmatpush2.msra.mxu0 0.0
  %1675 = vmatprep.subr.mxu0 0.0
  %1676 = vmatpush2.msra.mxu0 0.0
  %1677 = vmatprep.subr.mxu0 0.0
  %1678 = vmatpush2.msra.mxu0 0.0
  %1679 = vmatprep.subr.mxu0 0.0
  %1680 = vmatpush2.msra.mxu0 0.0
  %1681 = vmatprep.subr.mxu0 0.0
  %1682 = vmatpush2.msra.mxu0 0.0
  %1683 = vmatprep.subr.mxu0 0.0
  %1684 = vmatpush2.msra.mxu0 0.0
  %1685 = vmatprep.subr.mxu0 0.0
  %1686 = vmatpush2.msra.mxu0 0.0
  %1687 = vmatprep.subr.mxu0 0.0
  %1688 = vmatpush2.msra.mxu0 0.0
  %1689 = vmatprep.subr.mxu0 0.0
  %1690 = vmatpush2.msra.mxu0 0.0
  %1691 = vmatprep.subr.mxu0 0.0
  %1692 = vmatpush2.msra.mxu0 0.0
  %1693 = vmatprep.mubr.f32.mxu0 0.0
  %1694 = vmatmul.mubr.f32.gmra.mxu0 %v1551
  %v1695 = vpop.f32.mrf.mxu0
  %v1696 = vadd.f32 0.0, %v1695
  %v1697 = vpop.f32.mrf.mxu0
  %1698 = vdwg.mxu0
  %v1699 = vadd.f32 %v1555, %v1625
  %v1700 = vmul.f32 %v1699, 0.5
  %v1701 = vtanh.pop %v1700
  %v1702 = vmul.f32 %v1701, 0.5
  %v1703 = vadd.f32 %v1702, 0.5
  %v1704 = vadd.f32 %v1556, %v1627
  %v1705 = vmul.f32 %v1704, 0.5
  %v1706 = vtanh.pop %v1705
  %v1707 = vmul.f32 %v1706, 0.5
  %v1708 = vadd.f32 %v1707, 0.5
  %v1709 = vadd.f32 %v1696, %v406
  %v1710 = vmul.f32 %v1703, %v1709
  %v1711 = vadd.f32 %v1557, %v1710
  %v1712 = vtanh.pop %v1711
  %v1713 = vsub.f32 %v1551, %v1712
  %v1714 = vmul.f32 %v1708, %v1713
  %v1715 = vadd.f32 %v1712, %v1714
  %s1716 = scalar_lea.vmem [#allocation2], 56
  %1717 = vst [vmem:[%s1716] sm:$0xff] %v1715
  %v1718 = vld [vmem:[%s5] sm:$0xff]
  %v1719 = vld [vmem:[%s5 + $0x8] sm:$0xff]
  %v1720 = vld [vmem:[%s5 + $0x10] sm:$0xff]
  %v1721 = vld [vmem:[%s5 + $0x18] sm:$0xff]
  %v1722 = vld [vmem:[%s5 + $0x20] sm:$0xff]
  %v1723 = vld [vmem:[%s5 + $0x28] sm:$0xff]
  %v1724 = vld [vmem:[%s5 + $0x30] sm:$0xff]
  %v1725 = vld [vmem:[%s5 + $0x38] sm:$0xff]
  %v1726 = vld [vmem:[%s5 + $0x40] sm:$0xff]
  %v1727 = vld [vmem:[%s5 + $0x48] sm:$0xff]
  %v1728 = vld [vmem:[%s5 + $0x50] sm:$0xff]
  %v1729 = vld [vmem:[%s5 + $0x58] sm:$0xff]
  %v1730 = vld [vmem:[%s5 + $0x60] sm:$0xff]
  %v1731 = vld [vmem:[%s5 + $0x68] sm:$0xff]
  %v1732 = vld [vmem:[%s5 + $0x70] sm:$0xff]
  %v1733 = vld [vmem:[%s5 + $0x78] sm:$0xff]
  %v1734 = vld [vmem:[%s5 + $0x80] sm:$0xff]
  %v1735 = vld [vmem:[%s5 + $0x88] sm:$0xff]
  %v1736 = vld [vmem:[%s5 + $0x90] sm:$0xff]
  %v1737 = vld [vmem:[%s5 + $0x98] sm:$0xff]
  %v1738 = vld [vmem:[%s5 + $0xa0] sm:$0xff]
  %v1739 = vld [vmem:[%s5 + $0xa8] sm:$0xff]
  %v1740 = vld [vmem:[%s5 + $0xb0] sm:$0xff]
  %v1741 = vld [vmem:[%s5 + $0xb8] sm:$0xff]
  %v1742 = vld [vmem:[%s5 + $0xc0] sm:$0xff]
  %v1743 = vld [vmem:[%s5 + $0xc8] sm:$0xff]
  %v1744 = vld [vmem:[%s5 + $0xd0] sm:$0xff]
  %v1745 = vld [vmem:[%s5 + $0xd8] sm:$0xff]
  %v1746 = vld [vmem:[%s5 + $0xe0] sm:$0xff]
  %v1747 = vld [vmem:[%s5 + $0xe8] sm:$0xff]
  %v1748 = vld [vmem:[%s5 + $0xf0] sm:$0xff]
  %v1749 = vld [vmem:[%s5 + $0xf8] sm:$0xff]
  %v1750 = vld [vmem:[%s5 + $0x100] sm:$0xff]
  %v1751 = vld [vmem:[%s5 + $0x108] sm:$0xff]
  %v1752 = vld [vmem:[%s5 + $0x110] sm:$0xff]
  %v1753 = vld [vmem:[%s5 + $0x118] sm:$0xff]
  %v1754 = vld [vmem:[%s5 + $0x120] sm:$0xff]
  %v1755 = vld [vmem:[%s5 + $0x128] sm:$0xff]
  %v1756 = vld [vmem:[%s5 + $0x130] sm:$0xff]
  %v1757 = vld [vmem:[%s5 + $0x138] sm:$0xff]
  %v1758 = vld [vmem:[%s5 + $0x140] sm:$0xff]
  %v1759 = vld [vmem:[%s5 + $0x148] sm:$0xff]
  %v1760 = vld [vmem:[%s5 + $0x150] sm:$0xff]
  %v1761 = vld [vmem:[%s5 + $0x158] sm:$0xff]
  %v1762 = vld [vmem:[%s5 + $0x160] sm:$0xff]
  %v1763 = vld [vmem:[%s5 + $0x168] sm:$0xff]
  %v1764 = vld [vmem:[%s5 + $0x170] sm:$0xff]
  %v1765 = vld [vmem:[%s5 + $0x178] sm:$0xff]
  %v1766 = vld [vmem:[%s6] sm:$0xff]
  %v1767 = vld [vmem:[%s6 + $0x8] sm:$0xff]
  %v1768 = vld [vmem:[%s6 + $0x10] sm:$0xff]
  %v1769 = vld [vmem:[%s6 + $0x18] sm:$0xff]
  %v1770 = vld [vmem:[%s6 + $0x20] sm:$0xff]
  %v1771 = vld [vmem:[%s6 + $0x28] sm:$0xff]
  %v1772 = vld [vmem:[%s6 + $0x30] sm:$0xff]
  %v1773 = vld [vmem:[%s6 + $0x38] sm:$0xff]
  %v1774 = vld [vmem:[%s6 + $0x40] sm:$0xff]
  %v1775 = vld [vmem:[%s6 + $0x48] sm:$0xff]
  %v1776 = vld [vmem:[%s6 + $0x50] sm:$0xff]
  %v1777 = vld [vmem:[%s6 + $0x58] sm:$0xff]
  %v1778 = vld [vmem:[%s6 + $0x60] sm:$0xff]
  %v1779 = vld [vmem:[%s6 + $0x68] sm:$0xff]
  %v1780 = vld [vmem:[%s6 + $0x70] sm:$0xff]
  %v1781 = vld [vmem:[%s6 + $0x78] sm:$0xff]
  %v1782 = vld [vmem:[%s6 + $0x80] sm:$0xff]
  %v1783 = vld [vmem:[%s6 + $0x88] sm:$0xff]
  %v1784 = vld [vmem:[%s6 + $0x90] sm:$0xff]
  %v1785 = vld [vmem:[%s6 + $0x98] sm:$0xff]
  %v1786 = vld [vmem:[%s6 + $0xa0] sm:$0xff]
  %v1787 = vld [vmem:[%s6 + $0xa8] sm:$0xff]
  %v1788 = vld [vmem:[%s6 + $0xb0] sm:$0xff]
  %v1789 = vld [vmem:[%s6 + $0xb8] sm:$0xff]
  %v1790 = vld [vmem:[%s6 + $0xc0] sm:$0xff]
  %v1791 = vld [vmem:[%s6 + $0xc8] sm:$0xff]
  %v1792 = vld [vmem:[%s6 + $0xd0] sm:$0xff]
  %v1793 = vld [vmem:[%s6 + $0xd8] sm:$0xff]
  %v1794 = vld [vmem:[%s6 + $0xe0] sm:$0xff]
  %v1795 = vld [vmem:[%s6 + $0xe8] sm:$0xff]
  %v1796 = vld [vmem:[%s6 + $0xf0] sm:$0xff]
  %v1797 = vld [vmem:[%s6 + $0xf8] sm:$0xff]
  %v1798 = vld [vmem:[%s6 + $0x100] sm:$0xff]
  %v1799 = vld [vmem:[%s6 + $0x108] sm:$0xff]
  %v1800 = vld [vmem:[%s6 + $0x110] sm:$0xff]
  %v1801 = vld [vmem:[%s6 + $0x118] sm:$0xff]
  %v1802 = vld [vmem:[%s6 + $0x120] sm:$0xff]
  %v1803 = vld [vmem:[%s6 + $0x128] sm:$0xff]
  %v1804 = vld [vmem:[%s6 + $0x130] sm:$0xff]
  %v1805 = vld [vmem:[%s6 + $0x138] sm:$0xff]
  %v1806 = vld [vmem:[%s6 + $0x140] sm:$0xff]
  %v1807 = vld [vmem:[%s6 + $0x148] sm:$0xff]
  %v1808 = vld [vmem:[%s6 + $0x150] sm:$0xff]
  %v1809 = vld [vmem:[%s6 + $0x158] sm:$0xff]
  %v1810 = vld [vmem:[%s6 + $0x160] sm:$0xff]
  %v1811 = vld [vmem:[%s6 + $0x168] sm:$0xff]
  %v1812 = vld [vmem:[%s6 + $0x170] sm:$0xff]
  %v1813 = vld [vmem:[%s6 + $0x178] sm:$0xff]
  %v1814 = vld [vmem:[%s7] sm:$0x7]
  %v1815 = vld [vmem:[%s8] sm:$0x1]
  %v1816 = vld [vmem:[#allocation2] sm:$0xff]
  %v1817 = vld [vmem:[#allocation2 + $0x8] sm:$0xff]
  %v1818 = vld [vmem:[#allocation2 + $0x10] sm:$0xff]
  %v1819 = vld [vmem:[#allocation2 + $0x18] sm:$0xff]
  %v1820 = vld [vmem:[#allocation2 + $0x20] sm:$0xff]
  %v1821 = vld [vmem:[#allocation2 + $0x28] sm:$0xff]
  %v1822 = vld [vmem:[#allocation2 + $0x30] sm:$0xff]
  %v1823 = vld [vmem:[#allocation2 + $0x38] sm:$0xff]
  %v1825 = vlaneseq
  %v1826 = vshrl.u32 %v1825, 7
  %v1827 = vsub.s32 0, %v1826
  %v1828 = vrot.slane %v1814, %v1827
  %v1829 = vlaneseq
  %v1830 = vshrl.u32 %v1829, 7
  %v1831 = vsub.s32 1, %v1830
  %v1832 = vrot.slane %v1814, %v1831
  %v1833 = vlaneseq
  %v1834 = vshrl.u32 %v1833, 7
  %v1835 = vsub.s32 2, %v1834
  %v1836 = vrot.slane %v1814, %v1835
  %1840 = vmatprep.subr.mxu0 %v1764
  %1841 = vmatpush1.msra.mxu0 %v1763
  %1842 = vmatprep.subr.mxu0 %v1761
  %1843 = vmatpush1.msra.mxu0 %v1760
  %1844 = vmatprep.subr.mxu0 %v1758
  %1845 = vmatpush1.msra.mxu0 %v1757
  %1846 = vmatprep.subr.mxu0 %v1755
  %1847 = vmatpush1.msra.mxu0 %v1754
  %1848 = vmatprep.subr.mxu0 %v1752
  %1849 = vmatpush1.msra.mxu0 %v1751
  %1850 = vmatprep.subr.mxu0 %v1749
  %1851 = vmatpush1.msra.mxu0 %v1748
  %1852 = vmatprep.subr.mxu0 %v1746
  %1853 = vmatpush1.msra.mxu0 %v1745
  %1854 = vmatprep.subr.mxu0 %v1743
  %1855 = vmatpush1.msra.mxu0 %v1742
  %1856 = vmatprep.subr.mxu0 %v1740
  %1857 = vmatpush1.msra.mxu0 %v1739
  %1858 = vmatprep.subr.mxu0 %v1737
  %1859 = vmatpush1.msra.mxu0 %v1736
  %1860 = vmatprep.subr.mxu0 %v1734
  %1861 = vmatpush1.msra.mxu0 %v1733
  %1862 = vmatprep.subr.mxu0 %v1731
  %1863 = vmatpush1.msra.mxu0 %v1730
  %1864 = vmatprep.subr.mxu0 %v1728
  %1865 = vmatpush1.msra.mxu0 %v1727
  %1866 = vmatprep.subr.mxu0 %v1725
  %1867 = vmatpush1.msra.mxu0 %v1724
  %1868 = vmatprep.subr.mxu0 %v1722
  %1869 = vmatpush1.msra.mxu0 %v1721
  %1870 = vmatprep.subr.mxu0 %v1719
  %1871 = vmatpush1.msra.mxu0 %v1718
  %1872 = vmatprep.subr.mxu0 0.0
  %1873 = vmatpush2.msra.mxu0 0.0
  %1874 = vmatprep.subr.mxu0 0.0
  %1875 = vmatpush2.msra.mxu0 0.0
  %1876 = vmatprep.subr.mxu0 0.0
  %1877 = vmatpush2.msra.mxu0 0.0
  %1878 = vmatprep.subr.mxu0 0.0
  %1879 = vmatpush2.msra.mxu0 0.0
  %1880 = vmatprep.subr.mxu0 0.0
  %1881 = vmatpush2.msra.mxu0 0.0
  %1882 = vmatprep.subr.mxu0 0.0
  %1883 = vmatpush2.msra.mxu0 0.0
  %1884 = vmatprep.subr.mxu0 0.0
  %1885 = vmatpush2.msra.mxu0 0.0
  %1886 = vmatprep.subr.mxu0 0.0
  %1887 = vmatpush2.msra.mxu0 0.0
  %1888 = vmatprep.subr.mxu0 0.0
  %1889 = vmatpush2.msra.mxu0 0.0
  %1890 = vmatprep.subr.mxu0 0.0
  %1891 = vmatpush2.msra.mxu0 0.0
  %1892 = vmatprep.subr.mxu0 0.0
  %1893 = vmatpush2.msra.mxu0 0.0
  %1894 = vmatprep.subr.mxu0 0.0
  %1895 = vmatpush2.msra.mxu0 0.0
  %1896 = vmatprep.subr.mxu0 0.0
  %1897 = vmatpush2.msra.mxu0 0.0
  %1898 = vmatprep.subr.mxu0 0.0
  %1899 = vmatpush2.msra.mxu0 0.0
  %1900 = vmatprep.subr.mxu0 0.0
  %1901 = vmatpush2.msra.mxu0 0.0
  %1902 = vmatprep.subr.mxu0 0.0
  %1903 = vmatpush2.msra.mxu0 0.0
  %1904 = vmatprep.mubr.f32.mxu0 0.0
  %1905 = vmatmul.mubr.f32.gmra.mxu0 %v1816
  %v1906 = vpop.f32.mrf.mxu0
  %v1907 = vadd.f32 %v1828, %v1906
  %v1908 = vpop.f32.mrf.mxu0
  %v1909 = vadd.f32 %v1832, %v1908
  %1910 = vmatprep.mubr.f32.mxu0 0.0
  %1911 = vmatmul.mubr.f32.gmra.mxu0 %v1817
  %v1912 = vpop.f32.mrf.mxu0
  %v1913 = vadd.f32 %v1828, %v1912
  %v1914 = vpop.f32.mrf.mxu0
  %v1915 = vadd.f32 %v1832, %v1914
  %1916 = vmatprep.mubr.f32.mxu0 0.0
  %1917 = vmatmul.mubr.f32.gmra.mxu0 %v1818
  %v1918 = vpop.f32.mrf.mxu0
  %v1919 = vadd.f32 %v1828, %v1918
  %v1920 = vpop.f32.mrf.mxu0
  %v1921 = vadd.f32 %v1832, %v1920
  %1922 = vmatprep.mubr.f32.mxu0 0.0
  %1923 = vmatmul.mubr.f32.gmra.mxu0 %v1819
  %v1924 = vpop.f32.mrf.mxu0
  %v1925 = vadd.f32 %v1828, %v1924
  %v1926 = vpop.f32.mrf.mxu0
  %v1927 = vadd.f32 %v1832, %v1926
  %1928 = vmatprep.mubr.f32.mxu0 0.0
  %1929 = vmatmul.mubr.f32.gmra.mxu0 %v1820
  %v1930 = vpop.f32.mrf.mxu0
  %v1931 = vadd.f32 %v1828, %v1930
  %v1932 = vpop.f32.mrf.mxu0
  %v1933 = vadd.f32 %v1832, %v1932
  %1934 = vmatprep.mubr.f32.mxu0 0.0
  %1935 = vmatmul.mubr.f32.gmra.mxu0 %v1821
  %v1936 = vpop.f32.mrf.mxu0
  %v1937 = vadd.f32 %v1828, %v1936
  %v1938 = vpop.f32.mrf.mxu0
  %v1939 = vadd.f32 %v1832, %v1938
  %1940 = vmatprep.mubr.f32.mxu0 0.0
  %1941 = vmatmul.mubr.f32.gmra.mxu0 %v1822
  %v1942 = vpop.f32.mrf.mxu0
  %v1943 = vadd.f32 %v1828, %v1942
  %v1944 = vpop.f32.mrf.mxu0
  %v1945 = vadd.f32 %v1832, %v1944
  %1946 = vmatprep.mubr.f32.mxu0 0.0
  %1947 = vmatmul.mubr.f32.gmra.mxu0 %v1823
  %v1948 = vpop.f32.mrf.mxu0
  %v1949 = vadd.f32 %v1828, %v1948
  %v1950 = vpop.f32.mrf.mxu0
  %v1951 = vadd.f32 %v1832, %v1950
  %1952 = vdwg.mxu0
  %1953 = vmatprep.subr.mxu0 0.0
  %1954 = vmatpush1.msra.mxu0 %v1765
  %1955 = vmatprep.subr.mxu0 0.0
  %1956 = vmatpush1.msra.mxu0 %v1762
  %1957 = vmatprep.subr.mxu0 0.0
  %1958 = vmatpush1.msra.mxu0 %v1759
  %1959 = vmatprep.subr.mxu0 0.0
  %1960 = vmatpush1.msra.mxu0 %v1756
  %1961 = vmatprep.subr.mxu0 0.0
  %1962 = vmatpush1.msra.mxu0 %v1753
  %1963 = vmatprep.subr.mxu0 0.0
  %1964 = vmatpush1.msra.mxu0 %v1750
  %1965 = vmatprep.subr.mxu0 0.0
  %1966 = vmatpush1.msra.mxu0 %v1747
  %1967 = vmatprep.subr.mxu0 0.0
  %1968 = vmatpush1.msra.mxu0 %v1744
  %1969 = vmatprep.subr.mxu0 0.0
  %1970 = vmatpush1.msra.mxu0 %v1741
  %1971 = vmatprep.subr.mxu0 0.0
  %1972 = vmatpush1.msra.mxu0 %v1738
  %1973 = vmatprep.subr.mxu0 0.0
  %1974 = vmatpush1.msra.mxu0 %v1735
  %1975 = vmatprep.subr.mxu0 0.0
  %1976 = vmatpush1.msra.mxu0 %v1732
  %1977 = vmatprep.subr.mxu0 0.0
  %1978 = vmatpush1.msra.mxu0 %v1729
  %1979 = vmatprep.subr.mxu0 0.0
  %1980 = vmatpush1.msra.mxu0 %v1726
  %1981 = vmatprep.subr.mxu0 0.0
  %1982 = vmatpush1.msra.mxu0 %v1723
  %1983 = vmatprep.subr.mxu0 0.0
  %1984 = vmatpush1.msra.mxu0 %v1720
  %1985 = vmatprep.subr.mxu0 0.0
  %1986 = vmatpush2.msra.mxu0 0.0
  %1987 = vmatprep.subr.mxu0 0.0
  %1988 = vmatpush2.msra.mxu0 0.0
  %1989 = vmatprep.subr.mxu0 0.0
  %1990 = vmatpush2.msra.mxu0 0.0
  %1991 = vmatprep.subr.mxu0 0.0
  %1992 = vmatpush2.msra.mxu0 0.0
  %1993 = vmatprep.subr.mxu0 0.0
  %1994 = vmatpush2.msra.mxu0 0.0
  %1995 = vmatprep.subr.mxu0 0.0
  %1996 = vmatpush2.msra.mxu0 0.0
  %1997 = vmatprep.subr.mxu0 0.0
  %1998 = vmatpush2.msra.mxu0 0.0
  %1999 = vmatprep.subr.mxu0 0.0
  %2000 = vmatpush2.msra.mxu0 0.0
  %2001 = vmatprep.subr.mxu0 0.0
  %2002 = vmatpush2.msra.mxu0 0.0
  %2003 = vmatprep.subr.mxu0 0.0
  %2004 = vmatpush2.msra.mxu0 0.0
  %2005 = vmatprep.subr.mxu0 0.0
  %2006 = vmatpush2.msra.mxu0 0.0
  %2007 = vmatprep.subr.mxu0 0.0
  %2008 = vmatpush2.msra.mxu0 0.0
  %2009 = vmatprep.subr.mxu0 0.0
  %2010 = vmatpush2.msra.mxu0 0.0
  %2011 = vmatprep.subr.mxu0 0.0
  %2012 = vmatpush2.msra.mxu0 0.0
  %2013 = vmatprep.subr.mxu0 0.0
  %2014 = vmatpush2.msra.mxu0 0.0
  %2015 = vmatprep.subr.mxu0 0.0
  %2016 = vmatpush2.msra.mxu0 0.0
  %2017 = vmatprep.mubr.f32.mxu0 0.0
  %2018 = vmatmul.mubr.f32.gmra.mxu0 %v1816
  %v2019 = vpop.f32.mrf.mxu0
  %v2020 = vadd.f32 %v1836, %v2019
  %v2021 = vpop.f32.mrf.mxu0
  %2022 = vmatprep.mubr.f32.mxu0 0.0
  %2023 = vmatmul.mubr.f32.gmra.mxu0 %v1817
  %v2024 = vpop.f32.mrf.mxu0
  %v2025 = vadd.f32 %v1836, %v2024
  %v2026 = vpop.f32.mrf.mxu0
  %2027 = vmatprep.mubr.f32.mxu0 0.0
  %2028 = vmatmul.mubr.f32.gmra.mxu0 %v1818
  %v2029 = vpop.f32.mrf.mxu0
  %v2030 = vadd.f32 %v1836, %v2029
  %v2031 = vpop.f32.mrf.mxu0
  %2032 = vmatprep.mubr.f32.mxu0 0.0
  %2033 = vmatmul.mubr.f32.gmra.mxu0 %v1819
  %v2034 = vpop.f32.mrf.mxu0
  %v2035 = vadd.f32 %v1836, %v2034
  %v2036 = vpop.f32.mrf.mxu0
  %2037 = vmatprep.mubr.f32.mxu0 0.0
  %2038 = vmatmul.mubr.f32.gmra.mxu0 %v1820
  %v2039 = vpop.f32.mrf.mxu0
  %v2040 = vadd.f32 %v1836, %v2039
  %v2041 = vpop.f32.mrf.mxu0
  %2042 = vmatprep.mubr.f32.mxu0 0.0
  %2043 = vmatmul.mubr.f32.gmra.mxu0 %v1821
  %v2044 = vpop.f32.mrf.mxu0
  %v2045 = vadd.f32 %v1836, %v2044
  %v2046 = vpop.f32.mrf.mxu0
  %2047 = vmatprep.mubr.f32.mxu0 0.0
  %2048 = vmatmul.mubr.f32.gmra.mxu0 %v1822
  %v2049 = vpop.f32.mrf.mxu0
  %v2050 = vadd.f32 %v1836, %v2049
  %v2051 = vpop.f32.mrf.mxu0
  %2052 = vmatprep.mubr.f32.mxu0 0.0
  %2053 = vmatmul.mubr.f32.gmra.mxu0 %v1823
  %v2054 = vpop.f32.mrf.mxu0
  %v2055 = vadd.f32 %v1836, %v2054
  %v2056 = vpop.f32.mrf.mxu0
  %2057 = vdwg.mxu0
  %2058 = vst [vmem:[#allocation3] sm:$0xff] %v1907
  %2059 = vst [vmem:[#allocation3 + $0x8] sm:$0xff] %v1909
  %2060 = vst [vmem:[#allocation3 + $0x10] sm:$0xff] %v2020
  %2061 = vst [vmem:[#allocation3 + $0x18] sm:$0xff] %v1913
  %2062 = vst [vmem:[#allocation3 + $0x20] sm:$0xff] %v1915
  %2063 = vst [vmem:[#allocation3 + $0x28] sm:$0xff] %v2025
  %2064 = vst [vmem:[#allocation3 + $0x30] sm:$0xff] %v1919
  %2065 = vst [vmem:[#allocation3 + $0x38] sm:$0xff] %v1921
  %2066 = vst [vmem:[#allocation3 + $0x40] sm:$0xff] %v2030
  %2067 = vst [vmem:[#allocation3 + $0x48] sm:$0xff] %v1925
  %2068 = vst [vmem:[#allocation3 + $0x50] sm:$0xff] %v1927
  %2069 = vst [vmem:[#allocation3 + $0x58] sm:$0xff] %v2035
  %2070 = vst [vmem:[#allocation3 + $0x60] sm:$0xff] %v1931
  %2071 = vst [vmem:[#allocation3 + $0x68] sm:$0xff] %v1933
  %2072 = vst [vmem:[#allocation3 + $0x70] sm:$0xff] %v2040
  %2073 = vst [vmem:[#allocation3 + $0x78] sm:$0xff] %v1937
  %2074 = vst [vmem:[#allocation3 + $0x80] sm:$0xff] %v1939
  %2075 = vst [vmem:[#allocation3 + $0x88] sm:$0xff] %v2045
  %2076 = vst [vmem:[#allocation3 + $0x90] sm:$0xff] %v1943
  %2077 = vst [vmem:[#allocation3 + $0x98] sm:$0xff] %v1945
  %2078 = vst [vmem:[#allocation3 + $0xa0] sm:$0xff] %v2050
  %2079 = vst [vmem:[#allocation3 + $0xa8] sm:$0xff] %v1949
  %2080 = vst [vmem:[#allocation3 + $0xb0] sm:$0xff] %v1951
  %2081 = vst [vmem:[#allocation3 + $0xb8] sm:$0xff] %v2055
  %v2083 = vlaneseq
  %v2084 = vshrl.u32 %v2083, 7
  %v2085 = vsub.s32 0, %v2084
  %v2086 = vrot.slane %v1815, %v2085
  %v2088 = vld [vmem:[#allocation3] sm:$0xff]
  %v2089 = vld [vmem:[#allocation3 + $0x8] sm:$0xff]
  %v2090 = vld [vmem:[#allocation3 + $0x10] sm:$0xff]
  %2091 = vmatprep.subr.mxu0 %v1812
  %2092 = vmatpush1.msra.mxu0 %v1811
  %2093 = vmatprep.subr.mxu0 %v1809
  %2094 = vmatpush1.msra.mxu0 %v1808
  %2095 = vmatprep.subr.mxu0 %v1806
  %2096 = vmatpush1.msra.mxu0 %v1805
  %2097 = vmatprep.subr.mxu0 %v1803
  %2098 = vmatpush1.msra.mxu0 %v1802
  %2099 = vmatprep.subr.mxu0 %v1800
  %2100 = vmatpush1.msra.mxu0 %v1799
  %2101 = vmatprep.subr.mxu0 %v1797
  %2102 = vmatpush1.msra.mxu0 %v1796
  %2103 = vmatprep.subr.mxu0 %v1794
  %2104 = vmatpush1.msra.mxu0 %v1793
  %2105 = vmatprep.subr.mxu0 %v1791
  %2106 = vmatpush1.msra.mxu0 %v1790
  %2107 = vmatprep.subr.mxu0 %v1788
  %2108 = vmatpush1.msra.mxu0 %v1787
  %2109 = vmatprep.subr.mxu0 %v1785
  %2110 = vmatpush1.msra.mxu0 %v1784
  %2111 = vmatprep.subr.mxu0 %v1782
  %2112 = vmatpush1.msra.mxu0 %v1781
  %2113 = vmatprep.subr.mxu0 %v1779
  %2114 = vmatpush1.msra.mxu0 %v1778
  %2115 = vmatprep.subr.mxu0 %v1776
  %2116 = vmatpush1.msra.mxu0 %v1775
  %2117 = vmatprep.subr.mxu0 %v1773
  %2118 = vmatpush1.msra.mxu0 %v1772
  %2119 = vmatprep.subr.mxu0 %v1770
  %2120 = vmatpush1.msra.mxu0 %v1769
  %2121 = vmatprep.subr.mxu0 %v1767
  %2122 = vmatpush1.msra.mxu0 %v1766
  %2123 = vmatprep.subr.mxu0 0.0
  %2124 = vmatpush2.msra.mxu0 0.0
  %2125 = vmatprep.subr.mxu0 0.0
  %2126 = vmatpush2.msra.mxu0 0.0
  %2127 = vmatprep.subr.mxu0 0.0
  %2128 = vmatpush2.msra.mxu0 0.0
  %2129 = vmatprep.subr.mxu0 0.0
  %2130 = vmatpush2.msra.mxu0 0.0
  %2131 = vmatprep.subr.mxu0 0.0
  %2132 = vmatpush2.msra.mxu0 0.0
  %2133 = vmatprep.subr.mxu0 0.0
  %2134 = vmatpush2.msra.mxu0 0.0
  %2135 = vmatprep.subr.mxu0 0.0
  %2136 = vmatpush2.msra.mxu0 0.0
  %2137 = vmatprep.subr.mxu0 0.0
  %2138 = vmatpush2.msra.mxu0 0.0
  %2139 = vmatprep.subr.mxu0 0.0
  %2140 = vmatpush2.msra.mxu0 0.0
  %2141 = vmatprep.subr.mxu0 0.0
  %2142 = vmatpush2.msra.mxu0 0.0
  %2143 = vmatprep.subr.mxu0 0.0
  %2144 = vmatpush2.msra.mxu0 0.0
  %2145 = vmatprep.subr.mxu0 0.0
  %2146 = vmatpush2.msra.mxu0 0.0
  %2147 = vmatprep.subr.mxu0 0.0
  %2148 = vmatpush2.msra.mxu0 0.0
  %2149 = vmatprep.subr.mxu0 0.0
  %2150 = vmatpush2.msra.mxu0 0.0
  %2151 = vmatprep.subr.mxu0 0.0
  %2152 = vmatpush2.msra.mxu0 0.0
  %2153 = vmatprep.subr.mxu0 0.0
  %2154 = vmatpush2.msra.mxu0 0.0
  %2155 = vmatprep.mubr.f32.mxu0 0.0
  %2156 = vmatmul.mubr.f32.gmra.mxu0 0.0
  %v2157 = vpop.f32.mrf.mxu0
  %v2158 = vadd.f32 0.0, %v2157
  %v2159 = vpop.f32.mrf.mxu0
  %v2160 = vadd.f32 0.0, %v2159
  %2161 = vdwg.mxu0
  %2162 = vmatprep.subr.mxu0 0.0
  %2163 = vmatpush1.msra.mxu0 %v1813
  %2164 = vmatprep.subr.mxu0 0.0
  %2165 = vmatpush1.msra.mxu0 %v1810
  %2166 = vmatprep.subr.mxu0 0.0
  %2167 = vmatpush1.msra.mxu0 %v1807
  %2168 = vmatprep.subr.mxu0 0.0
  %2169 = vmatpush1.msra.mxu0 %v1804
  %2170 = vmatprep.subr.mxu0 0.0
  %2171 = vmatpush1.msra.mxu0 %v1801
  %2172 = vmatprep.subr.mxu0 0.0
  %2173 = vmatpush1.msra.mxu0 %v1798
  %2174 = vmatprep.subr.mxu0 0.0
  %2175 = vmatpush1.msra.mxu0 %v1795
  %2176 = vmatprep.subr.mxu0 0.0
  %2177 = vmatpush1.msra.mxu0 %v1792
  %2178 = vmatprep.subr.mxu0 0.0
  %2179 = vmatpush1.msra.mxu0 %v1789
  %2180 = vmatprep.subr.mxu0 0.0
  %2181 = vmatpush1.msra.mxu0 %v1786
  %2182 = vmatprep.subr.mxu0 0.0
  %2183 = vmatpush1.msra.mxu0 %v1783
  %2184 = vmatprep.subr.mxu0 0.0
  %2185 = vmatpush1.msra.mxu0 %v1780
  %2186 = vmatprep.subr.mxu0 0.0
  %2187 = vmatpush1.msra.mxu0 %v1777
  %2188 = vmatprep.subr.mxu0 0.0
  %2189 = vmatpush1.msra.mxu0 %v1774
  %2190 = vmatprep.subr.mxu0 0.0
  %2191 = vmatpush1.msra.mxu0 %v1771
  %2192 = vmatprep.subr.mxu0 0.0
  %2193 = vmatpush1.msra.mxu0 %v1768
  %2194 = vmatprep.subr.mxu0 0.0
  %2195 = vmatpush2.msra.mxu0 0.0
  %2196 = vmatprep.subr.mxu0 0.0
  %2197 = vmatpush2.msra.mxu0 0.0
  %2198 = vmatprep.subr.mxu0 0.0
  %2199 = vmatpush2.msra.mxu0 0.0
  %2200 = vmatprep.subr.mxu0 0.0
  %2201 = vmatpush2.msra.mxu0 0.0
  %2202 = vmatprep.subr.mxu0 0.0
  %2203 = vmatpush2.msra.mxu0 0.0
  %2204 = vmatprep.subr.mxu0 0.0
  %2205 = vmatpush2.msra.mxu0 0.0
  %2206 = vmatprep.subr.mxu0 0.0
  %2207 = vmatpush2.msra.mxu0 0.0
  %2208 = vmatprep.subr.mxu0 0.0
  %2209 = vmatpush2.msra.mxu0 0.0
  %2210 = vmatprep.subr.mxu0 0.0
  %2211 = vmatpush2.msra.mxu0 0.0
  %2212 = vmatprep.subr.mxu0 0.0
  %2213 = vmatpush2.msra.mxu0 0.0
  %2214 = vmatprep.subr.mxu0 0.0
  %2215 = vmatpush2.msra.mxu0 0.0
  %2216 = vmatprep.subr.mxu0 0.0
  %2217 = vmatpush2.msra.mxu0 0.0
  %2218 = vmatprep.subr.mxu0 0.0
  %2219 = vmatpush2.msra.mxu0 0.0
  %2220 = vmatprep.subr.mxu0 0.0
  %2221 = vmatpush2.msra.mxu0 0.0
  %2222 = vmatprep.subr.mxu0 0.0
  %2223 = vmatpush2.msra.mxu0 0.0
  %2224 = vmatprep.subr.mxu0 0.0
  %2225 = vmatpush2.msra.mxu0 0.0
  %2226 = vmatprep.mubr.f32.mxu0 0.0
  %2227 = vmatmul.mubr.f32.gmra.mxu0 0.0
  %v2228 = vpop.f32.mrf.mxu0
  %v2229 = vadd.f32 0.0, %v2228
  %v2230 = vpop.f32.mrf.mxu0
  %2231 = vdwg.mxu0
  %v2232 = vadd.f32 %v2088, %v2158
  %v2233 = vmul.f32 %v2232, 0.5
  %v2234 = vtanh.pop %v2233
  %v2235 = vmul.f32 %v2234, 0.5
  %v2236 = vadd.f32 %v2235, 0.5
  %v2237 = vadd.f32 %v2089, %v2160
  %v2238 = vmul.f32 %v2237, 0.5
  %v2239 = vtanh.pop %v2238
  %v2240 = vmul.f32 %v2239, 0.5
  %v2241 = vadd.f32 %v2240, 0.5
  %v2242 = vadd.f32 %v2229, %v2086
  %v2243 = vmul.f32 %v2236, %v2242
  %v2244 = vadd.f32 %v2090, %v2243
  %v2245 = vtanh.pop %v2244
  %v2246 = vsub.f32 0.0, %v2245
  %v2247 = vmul.f32 %v2241, %v2246
  %v2248 = vadd.f32 %v2245, %v2247
  %v2249 = vld [vmem:[%s570] sm:$0xff]
  %v2250 = vld [vmem:[%s570 + $0x8] sm:$0xff]
  %v2251 = vld [vmem:[%s570 + $0x10] sm:$0xff]
  %2252 = vmatprep.subr.mxu0 %v1812
  %2253 = vmatpush1.msra.mxu0 %v1811
  %2254 = vmatprep.subr.mxu0 %v1809
  %2255 = vmatpush1.msra.mxu0 %v1808
  %2256 = vmatprep.subr.mxu0 %v1806
  %2257 = vmatpush1.msra.mxu0 %v1805
  %2258 = vmatprep.subr.mxu0 %v1803
  %2259 = vmatpush1.msra.mxu0 %v1802
  %2260 = vmatprep.subr.mxu0 %v1800
  %2261 = vmatpush1.msra.mxu0 %v1799
  %2262 = vmatprep.subr.mxu0 %v1797
  %2263 = vmatpush1.msra.mxu0 %v1796
  %2264 = vmatprep.subr.mxu0 %v1794
  %2265 = vmatpush1.msra.mxu0 %v1793
  %2266 = vmatprep.subr.mxu0 %v1791
  %2267 = vmatpush1.msra.mxu0 %v1790
  %2268 = vmatprep.subr.mxu0 %v1788
  %2269 = vmatpush1.msra.mxu0 %v1787
  %2270 = vmatprep.subr.mxu0 %v1785
  %2271 = vmatpush1.msra.mxu0 %v1784
  %2272 = vmatprep.subr.mxu0 %v1782
  %2273 = vmatpush1.msra.mxu0 %v1781
  %2274 = vmatprep.subr.mxu0 %v1779
  %2275 = vmatpush1.msra.mxu0 %v1778
  %2276 = vmatprep.subr.mxu0 %v1776
  %2277 = vmatpush1.msra.mxu0 %v1775
  %2278 = vmatprep.subr.mxu0 %v1773
  %2279 = vmatpush1.msra.mxu0 %v1772
  %2280 = vmatprep.subr.mxu0 %v1770
  %2281 = vmatpush1.msra.mxu0 %v1769
  %2282 = vmatprep.subr.mxu0 %v1767
  %2283 = vmatpush1.msra.mxu0 %v1766
  %2284 = vmatprep.subr.mxu0 0.0
  %2285 = vmatpush2.msra.mxu0 0.0
  %2286 = vmatprep.subr.mxu0 0.0
  %2287 = vmatpush2.msra.mxu0 0.0
  %2288 = vmatprep.subr.mxu0 0.0
  %2289 = vmatpush2.msra.mxu0 0.0
  %2290 = vmatprep.subr.mxu0 0.0
  %2291 = vmatpush2.msra.mxu0 0.0
  %2292 = vmatprep.subr.mxu0 0.0
  %2293 = vmatpush2.msra.mxu0 0.0
  %2294 = vmatprep.subr.mxu0 0.0
  %2295 = vmatpush2.msra.mxu0 0.0
  %2296 = vmatprep.subr.mxu0 0.0
  %2297 = vmatpush2.msra.mxu0 0.0
  %2298 = vmatprep.subr.mxu0 0.0
  %2299 = vmatpush2.msra.mxu0 0.0
  %2300 = vmatprep.subr.mxu0 0.0
  %2301 = vmatpush2.msra.mxu0 0.0
  %2302 = vmatprep.subr.mxu0 0.0
  %2303 = vmatpush2.msra.mxu0 0.0
  %2304 = vmatprep.subr.mxu0 0.0
  %2305 = vmatpush2.msra.mxu0 0.0
  %2306 = vmatprep.subr.mxu0 0.0
  %2307 = vmatpush2.msra.mxu0 0.0
  %2308 = vmatprep.subr.mxu0 0.0
  %2309 = vmatpush2.msra.mxu0 0.0
  %2310 = vmatprep.subr.mxu0 0.0
  %2311 = vmatpush2.msra.mxu0 0.0
  %2312 = vmatprep.subr.mxu0 0.0
  %2313 = vmatpush2.msra.mxu0 0.0
  %2314 = vmatprep.subr.mxu0 0.0
  %2315 = vmatpush2.msra.mxu0 0.0
  %2316 = vmatprep.mubr.f32.mxu0 0.0
  %2317 = vmatmul.mubr.f32.gmra.mxu0 %v2248
  %v2318 = vpop.f32.mrf.mxu0
  %v2319 = vadd.f32 0.0, %v2318
  %v2320 = vpop.f32.mrf.mxu0
  %v2321 = vadd.f32 0.0, %v2320
  %2322 = vdwg.mxu0
  %2323 = vmatprep.subr.mxu0 0.0
  %2324 = vmatpush1.msra.mxu0 %v1813
  %2325 = vmatprep.subr.mxu0 0.0
  %2326 = vmatpush1.msra.mxu0 %v1810
  %2327 = vmatprep.subr.mxu0 0.0
  %2328 = vmatpush1.msra.mxu0 %v1807
  %2329 = vmatprep.subr.mxu0 0.0
  %2330 = vmatpush1.msra.mxu0 %v1804
  %2331 = vmatprep.subr.mxu0 0.0
  %2332 = vmatpush1.msra.mxu0 %v1801
  %2333 = vmatprep.subr.mxu0 0.0
  %2334 = vmatpush1.msra.mxu0 %v1798
  %2335 = vmatprep.subr.mxu0 0.0
  %2336 = vmatpush1.msra.mxu0 %v1795
  %2337 = vmatprep.subr.mxu0 0.0
  %2338 = vmatpush1.msra.mxu0 %v1792
  %2339 = vmatprep.subr.mxu0 0.0
  %2340 = vmatpush1.msra.mxu0 %v1789
  %2341 = vmatprep.subr.mxu0 0.0
  %2342 = vmatpush1.msra.mxu0 %v1786
  %2343 = vmatprep.subr.mxu0 0.0
  %2344 = vmatpush1.msra.mxu0 %v1783
  %2345 = vmatprep.subr.mxu0 0.0
  %2346 = vmatpush1.msra.mxu0 %v1780
  %2347 = vmatprep.subr.mxu0 0.0
  %2348 = vmatpush1.msra.mxu0 %v1777
  %2349 = vmatprep.subr.mxu0 0.0
  %2350 = vmatpush1.msra.mxu0 %v1774
  %2351 = vmatprep.subr.mxu0 0.0
  %2352 = vmatpush1.msra.mxu0 %v1771
  %2353 = vmatprep.subr.mxu0 0.0
  %2354 = vmatpush1.msra.mxu0 %v1768
  %2355 = vmatprep.subr.mxu0 0.0
  %2356 = vmatpush2.msra.mxu0 0.0
  %2357 = vmatprep.subr.mxu0 0.0
  %2358 = vmatpush2.msra.mxu0 0.0
  %2359 = vmatprep.subr.mxu0 0.0
  %2360 = vmatpush2.msra.mxu0 0.0
  %2361 = vmatprep.subr.mxu0 0.0
  %2362 = vmatpush2.msra.mxu0 0.0
  %2363 = vmatprep.subr.mxu0 0.0
  %2364 = vmatpush2.msra.mxu0 0.0
  %2365 = vmatprep.subr.mxu0 0.0
  %2366 = vmatpush2.msra.mxu0 0.0
  %2367 = vmatprep.subr.mxu0 0.0
  %2368 = vmatpush2.msra.mxu0 0.0
  %2369 = vmatprep.subr.mxu0 0.0
  %2370 = vmatpush2.msra.mxu0 0.0
  %2371 = vmatprep.subr.mxu0 0.0
  %2372 = vmatpush2.msra.mxu0 0.0
  %2373 = vmatprep.subr.mxu0 0.0
  %2374 = vmatpush2.msra.mxu0 0.0
  %2375 = vmatprep.subr.mxu0 0.0
  %2376 = vmatpush2.msra.mxu0 0.0
  %2377 = vmatprep.subr.mxu0 0.0
  %2378 = vmatpush2.msra.mxu0 0.0
  %2379 = vmatprep.subr.mxu0 0.0
  %2380 = vmatpush2.msra.mxu0 0.0
  %2381 = vmatprep.subr.mxu0 0.0
  %2382 = vmatpush2.msra.mxu0 0.0
  %2383 = vmatprep.subr.mxu0 0.0
  %2384 = vmatpush2.msra.mxu0 0.0
  %2385 = vmatprep.subr.mxu0 0.0
  %2386 = vmatpush2.msra.mxu0 0.0
  %2387 = vmatprep.mubr.f32.mxu0 0.0
  %2388 = vmatmul.mubr.f32.gmra.mxu0 %v2248
  %v2389 = vpop.f32.mrf.mxu0
  %v2390 = vadd.f32 0.0, %v2389
  %v2391 = vpop.f32.mrf.mxu0
  %2392 = vdwg.mxu0
  %v2393 = vadd.f32 %v2249, %v2319
  %v2394 = vmul.f32 %v2393, 0.5
  %v2395 = vtanh.pop %v2394
  %v2396 = vmul.f32 %v2395, 0.5
  %v2397 = vadd.f32 %v2396, 0.5
  %v2398 = vadd.f32 %v2250, %v2321
  %v2399 = vmul.f32 %v2398, 0.5
  %v2400 = vtanh.pop %v2399
  %v2401 = vmul.f32 %v2400, 0.5
  %v2402 = vadd.f32 %v2401, 0.5
  %v2403 = vadd.f32 %v2390, %v2086
  %v2404 = vmul.f32 %v2397, %v2403
  %v2405 = vadd.f32 %v2251, %v2404
  %v2406 = vtanh.pop %v2405
  %v2407 = vsub.f32 %v2248, %v2406
  %v2408 = vmul.f32 %v2402, %v2407
  %v2409 = vadd.f32 %v2406, %v2408
  %v2410 = vld [vmem:[%s734] sm:$0xff]
  %v2411 = vld [vmem:[%s734 + $0x8] sm:$0xff]
  %v2412 = vld [vmem:[%s734 + $0x10] sm:$0xff]
  %2413 = vmatprep.subr.mxu0 %v1812
  %2414 = vmatpush1.msra.mxu0 %v1811
  %2415 = vmatprep.subr.mxu0 %v1809
  %2416 = vmatpush1.msra.mxu0 %v1808
  %2417 = vmatprep.subr.mxu0 %v1806
  %2418 = vmatpush1.msra.mxu0 %v1805
  %2419 = vmatprep.subr.mxu0 %v1803
  %2420 = vmatpush1.msra.mxu0 %v1802
  %2421 = vmatprep.subr.mxu0 %v1800
  %2422 = vmatpush1.msra.mxu0 %v1799
  %2423 = vmatprep.subr.mxu0 %v1797
  %2424 = vmatpush1.msra.mxu0 %v1796
  %2425 = vmatprep.subr.mxu0 %v1794
  %2426 = vmatpush1.msra.mxu0 %v1793
  %2427 = vmatprep.subr.mxu0 %v1791
  %2428 = vmatpush1.msra.mxu0 %v1790
  %2429 = vmatprep.subr.mxu0 %v1788
  %2430 = vmatpush1.msra.mxu0 %v1787
  %2431 = vmatprep.subr.mxu0 %v1785
  %2432 = vmatpush1.msra.mxu0 %v1784
  %2433 = vmatprep.subr.mxu0 %v1782
  %2434 = vmatpush1.msra.mxu0 %v1781
  %2435 = vmatprep.subr.mxu0 %v1779
  %2436 = vmatpush1.msra.mxu0 %v1778
  %2437 = vmatprep.subr.mxu0 %v1776
  %2438 = vmatpush1.msra.mxu0 %v1775
  %2439 = vmatprep.subr.mxu0 %v1773
  %2440 = vmatpush1.msra.mxu0 %v1772
  %2441 = vmatprep.subr.mxu0 %v1770
  %2442 = vmatpush1.msra.mxu0 %v1769
  %2443 = vmatprep.subr.mxu0 %v1767
  %2444 = vmatpush1.msra.mxu0 %v1766
  %2445 = vmatprep.subr.mxu0 0.0
  %2446 = vmatpush2.msra.mxu0 0.0
  %2447 = vmatprep.subr.mxu0 0.0
  %2448 = vmatpush2.msra.mxu0 0.0
  %2449 = vmatprep.subr.mxu0 0.0
  %2450 = vmatpush2.msra.mxu0 0.0
  %2451 = vmatprep.subr.mxu0 0.0
  %2452 = vmatpush2.msra.mxu0 0.0
  %2453 = vmatprep.subr.mxu0 0.0
  %2454 = vmatpush2.msra.mxu0 0.0
  %2455 = vmatprep.subr.mxu0 0.0
  %2456 = vmatpush2.msra.mxu0 0.0
  %2457 = vmatprep.subr.mxu0 0.0
  %2458 = vmatpush2.msra.mxu0 0.0
  %2459 = vmatprep.subr.mxu0 0.0
  %2460 = vmatpush2.msra.mxu0 0.0
  %2461 = vmatprep.subr.mxu0 0.0
  %2462 = vmatpush2.msra.mxu0 0.0
  %2463 = vmatprep.subr.mxu0 0.0
  %2464 = vmatpush2.msra.mxu0 0.0
  %2465 = vmatprep.subr.mxu0 0.0
  %2466 = vmatpush2.msra.mxu0 0.0
  %2467 = vmatprep.subr.mxu0 0.0
  %2468 = vmatpush2.msra.mxu0 0.0
  %2469 = vmatprep.subr.mxu0 0.0
  %2470 = vmatpush2.msra.mxu0 0.0
  %2471 = vmatprep.subr.mxu0 0.0
  %2472 = vmatpush2.msra.mxu0 0.0
  %2473 = vmatprep.subr.mxu0 0.0
  %2474 = vmatpush2.msra.mxu0 0.0
  %2475 = vmatprep.subr.mxu0 0.0
  %2476 = vmatpush2.msra.mxu0 0.0
  %2477 = vmatprep.mubr.f32.mxu0 0.0
  %2478 = vmatmul.mubr.f32.gmra.mxu0 %v2409
  %v2479 = vpop.f32.mrf.mxu0
  %v2480 = vadd.f32 0.0, %v2479
  %v2481 = vpop.f32.mrf.mxu0
  %v2482 = vadd.f32 0.0, %v2481
  %2483 = vdwg.mxu0
  %2484 = vmatprep.subr.mxu0 0.0
  %2485 = vmatpush1.msra.mxu0 %v1813
  %2486 = vmatprep.subr.mxu0 0.0
  %2487 = vmatpush1.msra.mxu0 %v1810
  %2488 = vmatprep.subr.mxu0 0.0
  %2489 = vmatpush1.msra.mxu0 %v1807
  %2490 = vmatprep.subr.mxu0 0.0
  %2491 = vmatpush1.msra.mxu0 %v1804
  %2492 = vmatprep.subr.mxu0 0.0
  %2493 = vmatpush1.msra.mxu0 %v1801
  %2494 = vmatprep.subr.mxu0 0.0
  %2495 = vmatpush1.msra.mxu0 %v1798
  %2496 = vmatprep.subr.mxu0 0.0
  %2497 = vmatpush1.msra.mxu0 %v1795
  %2498 = vmatprep.subr.mxu0 0.0
  %2499 = vmatpush1.msra.mxu0 %v1792
  %2500 = vmatprep.subr.mxu0 0.0
  %2501 = vmatpush1.msra.mxu0 %v1789
  %2502 = vmatprep.subr.mxu0 0.0
  %2503 = vmatpush1.msra.mxu0 %v1786
  %2504 = vmatprep.subr.mxu0 0.0
  %2505 = vmatpush1.msra.mxu0 %v1783
  %2506 = vmatprep.subr.mxu0 0.0
  %2507 = vmatpush1.msra.mxu0 %v1780
  %2508 = vmatprep.subr.mxu0 0.0
  %2509 = vmatpush1.msra.mxu0 %v1777
  %2510 = vmatprep.subr.mxu0 0.0
  %2511 = vmatpush1.msra.mxu0 %v1774
  %2512 = vmatprep.subr.mxu0 0.0
  %2513 = vmatpush1.msra.mxu0 %v1771
  %2514 = vmatprep.subr.mxu0 0.0
  %2515 = vmatpush1.msra.mxu0 %v1768
  %2516 = vmatprep.subr.mxu0 0.0
  %2517 = vmatpush2.msra.mxu0 0.0
  %2518 = vmatprep.subr.mxu0 0.0
  %2519 = vmatpush2.msra.mxu0 0.0
  %2520 = vmatprep.subr.mxu0 0.0
  %2521 = vmatpush2.msra.mxu0 0.0
  %2522 = vmatprep.subr.mxu0 0.0
  %2523 = vmatpush2.msra.mxu0 0.0
  %2524 = vmatprep.subr.mxu0 0.0
  %2525 = vmatpush2.msra.mxu0 0.0
  %2526 = vmatprep.subr.mxu0 0.0
  %2527 = vmatpush2.msra.mxu0 0.0
  %2528 = vmatprep.subr.mxu0 0.0
  %2529 = vmatpush2.msra.mxu0 0.0
  %2530 = vmatprep.subr.mxu0 0.0
  %2531 = vmatpush2.msra.mxu0 0.0
  %2532 = vmatprep.subr.mxu0 0.0
  %2533 = vmatpush2.msra.mxu0 0.0
  %2534 = vmatprep.subr.mxu0 0.0
  %2535 = vmatpush2.msra.mxu0 0.0
  %2536 = vmatprep.subr.mxu0 0.0
  %2537 = vmatpush2.msra.mxu0 0.0
  %2538 = vmatprep.subr.mxu0 0.0
  %2539 = vmatpush2.msra.mxu0 0.0
  %2540 = vmatprep.subr.mxu0 0.0
  %2541 = vmatpush2.msra.mxu0 0.0
  %2542 = vmatprep.subr.mxu0 0.0
  %2543 = vmatpush2.msra.mxu0 0.0
  %2544 = vmatprep.subr.mxu0 0.0
  %2545 = vmatpush2.msra.mxu0 0.0
  %2546 = vmatprep.subr.mxu0 0.0
  %2547 = vmatpush2.msra.mxu0 0.0
  %2548 = vmatprep.mubr.f32.mxu0 0.0
  %2549 = vmatmul.mubr.f32.gmra.mxu0 %v2409
  %v2550 = vpop.f32.mrf.mxu0
  %v2551 = vadd.f32 0.0, %v2550
  %v2552 = vpop.f32.mrf.mxu0
  %2553 = vdwg.mxu0
  %v2554 = vadd.f32 %v2410, %v2480
  %v2555 = vmul.f32 %v2554, 0.5
  %v2556 = vtanh.pop %v2555
  %v2557 = vmul.f32 %v2556, 0.5
  %v2558 = vadd.f32 %v2557, 0.5
  %v2559 = vadd.f32 %v2411, %v2482
  %v2560 = vmul.f32 %v2559, 0.5
  %v2561 = vtanh.pop %v2560
  %v2562 = vmul.f32 %v2561, 0.5
  %v2563 = vadd.f32 %v2562, 0.5
  %v2564 = vadd.f32 %v2551, %v2086
  %v2565 = vmul.f32 %v2558, %v2564
  %v2566 = vadd.f32 %v2412, %v2565
  %v2567 = vtanh.pop %v2566
  %v2568 = vsub.f32 %v2409, %v2567
  %v2569 = vmul.f32 %v2563, %v2568
  %v2570 = vadd.f32 %v2567, %v2569
  %v2571 = vld [vmem:[%s898] sm:$0xff]
  %v2572 = vld [vmem:[%s898 + $0x8] sm:$0xff]
  %v2573 = vld [vmem:[%s898 + $0x10] sm:$0xff]
  %2574 = vmatprep.subr.mxu0 %v1812
  %2575 = vmatpush1.msra.mxu0 %v1811
  %2576 = vmatprep.subr.mxu0 %v1809
  %2577 = vmatpush1.msra.mxu0 %v1808
  %2578 = vmatprep.subr.mxu0 %v1806
  %2579 = vmatpush1.msra.mxu0 %v1805
  %2580 = vmatprep.subr.mxu0 %v1803
  %2581 = vmatpush1.msra.mxu0 %v1802
  %2582 = vmatprep.subr.mxu0 %v1800
  %2583 = vmatpush1.msra.mxu0 %v1799
  %2584 = vmatprep.subr.mxu0 %v1797
  %2585 = vmatpush1.msra.mxu0 %v1796
  %2586 = vmatprep.subr.mxu0 %v1794
  %2587 = vmatpush1.msra.mxu0 %v1793
  %2588 = vmatprep.subr.mxu0 %v1791
  %2589 = vmatpush1.msra.mxu0 %v1790
  %2590 = vmatprep.subr.mxu0 %v1788
  %2591 = vmatpush1.msra.mxu0 %v1787
  %2592 = vmatprep.subr.mxu0 %v1785
  %2593 = vmatpush1.msra.mxu0 %v1784
  %2594 = vmatprep.subr.mxu0 %v1782
  %2595 = vmatpush1.msra.mxu0 %v1781
  %2596 = vmatprep.subr.mxu0 %v1779
  %2597 = vmatpush1.msra.mxu0 %v1778
  %2598 = vmatprep.subr.mxu0 %v1776
  %2599 = vmatpush1.msra.mxu0 %v1775
  %2600 = vmatprep.subr.mxu0 %v1773
  %2601 = vmatpush1.msra.mxu0 %v1772
  %2602 = vmatprep.subr.mxu0 %v1770
  %2603 = vmatpush1.msra.mxu0 %v1769
  %2604 = vmatprep.subr.mxu0 %v1767
  %2605 = vmatpush1.msra.mxu0 %v1766
  %2606 = vmatprep.subr.mxu0 0.0
  %2607 = vmatpush2.msra.mxu0 0.0
  %2608 = vmatprep.subr.mxu0 0.0
  %2609 = vmatpush2.msra.mxu0 0.0
  %2610 = vmatprep.subr.mxu0 0.0
  %2611 = vmatpush2.msra.mxu0 0.0
  %2612 = vmatprep.subr.mxu0 0.0
  %2613 = vmatpush2.msra.mxu0 0.0
  %2614 = vmatprep.subr.mxu0 0.0
  %2615 = vmatpush2.msra.mxu0 0.0
  %2616 = vmatprep.subr.mxu0 0.0
  %2617 = vmatpush2.msra.mxu0 0.0
  %2618 = vmatprep.subr.mxu0 0.0
  %2619 = vmatpush2.msra.mxu0 0.0
  %2620 = vmatprep.subr.mxu0 0.0
  %2621 = vmatpush2.msra.mxu0 0.0
  %2622 = vmatprep.subr.mxu0 0.0
  %2623 = vmatpush2.msra.mxu0 0.0
  %2624 = vmatprep.subr.mxu0 0.0
  %2625 = vmatpush2.msra.mxu0 0.0
  %2626 = vmatprep.subr.mxu0 0.0
  %2627 = vmatpush2.msra.mxu0 0.0
  %2628 = vmatprep.subr.mxu0 0.0
  %2629 = vmatpush2.msra.mxu0 0.0
  %2630 = vmatprep.subr.mxu0 0.0
  %2631 = vmatpush2.msra.mxu0 0.0
  %2632 = vmatprep.subr.mxu0 0.0
  %2633 = vmatpush2.msra.mxu0 0.0
  %2634 = vmatprep.subr.mxu0 0.0
  %2635 = vmatpush2.msra.mxu0 0.0
  %2636 = vmatprep.subr.mxu0 0.0
  %2637 = vmatpush2.msra.mxu0 0.0
  %2638 = vmatprep.mubr.f32.mxu0 0.0
  %2639 = vmatmul.mubr.f32.gmra.mxu0 %v2570
  %v2640 = vpop.f32.mrf.mxu0
  %v2641 = vadd.f32 0.0, %v2640
  %v2642 = vpop.f32.mrf.mxu0
  %v2643 = vadd.f32 0.0, %v2642
  %2644 = vdwg.mxu0
  %2645 = vmatprep.subr.mxu0 0.0
  %2646 = vmatpush1.msra.mxu0 %v1813
  %2647 = vmatprep.subr.mxu0 0.0
  %2648 = vmatpush1.msra.mxu0 %v1810
  %2649 = vmatprep.subr.mxu0 0.0
  %2650 = vmatpush1.msra.mxu0 %v1807
  %2651 = vmatprep.subr.mxu0 0.0
  %2652 = vmatpush1.msra.mxu0 %v1804
  %2653 = vmatprep.subr.mxu0 0.0
  %2654 = vmatpush1.msra.mxu0 %v1801
  %2655 = vmatprep.subr.mxu0 0.0
  %2656 = vmatpush1.msra.mxu0 %v1798
  %2657 = vmatprep.subr.mxu0 0.0
  %2658 = vmatpush1.msra.mxu0 %v1795
  %2659 = vmatprep.subr.mxu0 0.0
  %2660 = vmatpush1.msra.mxu0 %v1792
  %2661 = vmatprep.subr.mxu0 0.0
  %2662 = vmatpush1.msra.mxu0 %v1789
  %2663 = vmatprep.subr.mxu0 0.0
  %2664 = vmatpush1.msra.mxu0 %v1786
  %2665 = vmatprep.subr.mxu0 0.0
  %2666 = vmatpush1.msra.mxu0 %v1783
  %2667 = vmatprep.subr.mxu0 0.0
  %2668 = vmatpush1.msra.mxu0 %v1780
  %2669 = vmatprep.subr.mxu0 0.0
  %2670 = vmatpush1.msra.mxu0 %v1777
  %2671 = vmatprep.subr.mxu0 0.0
  %2672 = vmatpush1.msra.mxu0 %v1774
  %2673 = vmatprep.subr.mxu0 0.0
  %2674 = vmatpush1.msra.mxu0 %v1771
  %2675 = vmatprep.subr.mxu0 0.0
  %2676 = vmatpush1.msra.mxu0 %v1768
  %2677 = vmatprep.subr.mxu0 0.0
  %2678 = vmatpush2.msra.mxu0 0.0
  %2679 = vmatprep.subr.mxu0 0.0
  %2680 = vmatpush2.msra.mxu0 0.0
  %2681 = vmatprep.subr.mxu0 0.0
  %2682 = vmatpush2.msra.mxu0 0.0
  %2683 = vmatprep.subr.mxu0 0.0
  %2684 = vmatpush2.msra.mxu0 0.0
  %2685 = vmatprep.subr.mxu0 0.0
  %2686 = vmatpush2.msra.mxu0 0.0
  %2687 = vmatprep.subr.mxu0 0.0
  %2688 = vmatpush2.msra.mxu0 0.0
  %2689 = vmatprep.subr.mxu0 0.0
  %2690 = vmatpush2.msra.mxu0 0.0
  %2691 = vmatprep.subr.mxu0 0.0
  %2692 = vmatpush2.msra.mxu0 0.0
  %2693 = vmatprep.subr.mxu0 0.0
  %2694 = vmatpush2.msra.mxu0 0.0
  %2695 = vmatprep.subr.mxu0 0.0
  %2696 = vmatpush2.msra.mxu0 0.0
  %2697 = vmatprep.subr.mxu0 0.0
  %2698 = vmatpush2.msra.mxu0 0.0
  %2699 = vmatprep.subr.mxu0 0.0
  %2700 = vmatpush2.msra.mxu0 0.0
  %2701 = vmatprep.subr.mxu0 0.0
  %2702 = vmatpush2.msra.mxu0 0.0
  %2703 = vmatprep.subr.mxu0 0.0
  %2704 = vmatpush2.msra.mxu0 0.0
  %2705 = vmatprep.subr.mxu0 0.0
  %2706 = vmatpush2.msra.mxu0 0.0
  %2707 = vmatprep.subr.mxu0 0.0
  %2708 = vmatpush2.msra.mxu0 0.0
  %2709 = vmatprep.mubr.f32.mxu0 0.0
  %2710 = vmatmul.mubr.f32.gmra.mxu0 %v2570
  %v2711 = vpop.f32.mrf.mxu0
  %v2712 = vadd.f32 0.0, %v2711
  %v2713 = vpop.f32.mrf.mxu0
  %2714 = vdwg.mxu0
  %v2715 = vadd.f32 %v2571, %v2641
  %v2716 = vmul.f32 %v2715, 0.5
  %v2717 = vtanh.pop %v2716
  %v2718 = vmul.f32 %v2717, 0.5
  %v2719 = vadd.f32 %v2718, 0.5
  %v2720 = vadd.f32 %v2572, %v2643
  %v2721 = vmul.f32 %v2720, 0.5
  %v2722 = vtanh.pop %v2721
  %v2723 = vmul.f32 %v2722, 0.5
  %v2724 = vadd.f32 %v2723, 0.5
  %v2725 = vadd.f32 %v2712, %v2086
  %v2726 = vmul.f32 %v2719, %v2725
  %v2727 = vadd.f32 %v2573, %v2726
  %v2728 = vtanh.pop %v2727
  %v2729 = vsub.f32 %v2570, %v2728
  %v2730 = vmul.f32 %v2724, %v2729
  %v2731 = vadd.f32 %v2728, %v2730
  %v2732 = vld [vmem:[%s1062] sm:$0xff]
  %v2733 = vld [vmem:[%s1062 + $0x8] sm:$0xff]
  %v2734 = vld [vmem:[%s1062 + $0x10] sm:$0xff]
  %2735 = vmatprep.subr.mxu0 %v1812
  %2736 = vmatpush1.msra.mxu0 %v1811
  %2737 = vmatprep.subr.mxu0 %v1809
  %2738 = vmatpush1.msra.mxu0 %v1808
  %2739 = vmatprep.subr.mxu0 %v1806
  %2740 = vmatpush1.msra.mxu0 %v1805
  %2741 = vmatprep.subr.mxu0 %v1803
  %2742 = vmatpush1.msra.mxu0 %v1802
  %2743 = vmatprep.subr.mxu0 %v1800
  %2744 = vmatpush1.msra.mxu0 %v1799
  %2745 = vmatprep.subr.mxu0 %v1797
  %2746 = vmatpush1.msra.mxu0 %v1796
  %2747 = vmatprep.subr.mxu0 %v1794
  %2748 = vmatpush1.msra.mxu0 %v1793
  %2749 = vmatprep.subr.mxu0 %v1791
  %2750 = vmatpush1.msra.mxu0 %v1790
  %2751 = vmatprep.subr.mxu0 %v1788
  %2752 = vmatpush1.msra.mxu0 %v1787
  %2753 = vmatprep.subr.mxu0 %v1785
  %2754 = vmatpush1.msra.mxu0 %v1784
  %2755 = vmatprep.subr.mxu0 %v1782
  %2756 = vmatpush1.msra.mxu0 %v1781
  %2757 = vmatprep.subr.mxu0 %v1779
  %2758 = vmatpush1.msra.mxu0 %v1778
  %2759 = vmatprep.subr.mxu0 %v1776
  %2760 = vmatpush1.msra.mxu0 %v1775
  %2761 = vmatprep.subr.mxu0 %v1773
  %2762 = vmatpush1.msra.mxu0 %v1772
  %2763 = vmatprep.subr.mxu0 %v1770
  %2764 = vmatpush1.msra.mxu0 %v1769
  %2765 = vmatprep.subr.mxu0 %v1767
  %2766 = vmatpush1.msra.mxu0 %v1766
  %2767 = vmatprep.subr.mxu0 0.0
  %2768 = vmatpush2.msra.mxu0 0.0
  %2769 = vmatprep.subr.mxu0 0.0
  %2770 = vmatpush2.msra.mxu0 0.0
  %2771 = vmatprep.subr.mxu0 0.0
  %2772 = vmatpush2.msra.mxu0 0.0
  %2773 = vmatprep.subr.mxu0 0.0
  %2774 = vmatpush2.msra.mxu0 0.0
  %2775 = vmatprep.subr.mxu0 0.0
  %2776 = vmatpush2.msra.mxu0 0.0
  %2777 = vmatprep.subr.mxu0 0.0
  %2778 = vmatpush2.msra.mxu0 0.0
  %2779 = vmatprep.subr.mxu0 0.0
  %2780 = vmatpush2.msra.mxu0 0.0
  %2781 = vmatprep.subr.mxu0 0.0
  %2782 = vmatpush2.msra.mxu0 0.0
  %2783 = vmatprep.subr.mxu0 0.0
  %2784 = vmatpush2.msra.mxu0 0.0
  %2785 = vmatprep.subr.mxu0 0.0
  %2786 = vmatpush2.msra.mxu0 0.0
  %2787 = vmatprep.subr.mxu0 0.0
  %2788 = vmatpush2.msra.mxu0 0.0
  %2789 = vmatprep.subr.mxu0 0.0
  %2790 = vmatpush2.msra.mxu0 0.0
  %2791 = vmatprep.subr.mxu0 0.0
  %2792 = vmatpush2.msra.mxu0 0.0
  %2793 = vmatprep.subr.mxu0 0.0
  %2794 = vmatpush2.msra.mxu0 0.0
  %2795 = vmatprep.subr.mxu0 0.0
  %2796 = vmatpush2.msra.mxu0 0.0
  %2797 = vmatprep.subr.mxu0 0.0
  %2798 = vmatpush2.msra.mxu0 0.0
  %2799 = vmatprep.mubr.f32.mxu0 0.0
  %2800 = vmatmul.mubr.f32.gmra.mxu0 %v2731
  %v2801 = vpop.f32.mrf.mxu0
  %v2802 = vadd.f32 0.0, %v2801
  %v2803 = vpop.f32.mrf.mxu0
  %v2804 = vadd.f32 0.0, %v2803
  %2805 = vdwg.mxu0
  %2806 = vmatprep.subr.mxu0 0.0
  %2807 = vmatpush1.msra.mxu0 %v1813
  %2808 = vmatprep.subr.mxu0 0.0
  %2809 = vmatpush1.msra.mxu0 %v1810
  %2810 = vmatprep.subr.mxu0 0.0
  %2811 = vmatpush1.msra.mxu0 %v1807
  %2812 = vmatprep.subr.mxu0 0.0
  %2813 = vmatpush1.msra.mxu0 %v1804
  %2814 = vmatprep.subr.mxu0 0.0
  %2815 = vmatpush1.msra.mxu0 %v1801
  %2816 = vmatprep.subr.mxu0 0.0
  %2817 = vmatpush1.msra.mxu0 %v1798
  %2818 = vmatprep.subr.mxu0 0.0
  %2819 = vmatpush1.msra.mxu0 %v1795
  %2820 = vmatprep.subr.mxu0 0.0
  %2821 = vmatpush1.msra.mxu0 %v1792
  %2822 = vmatprep.subr.mxu0 0.0
  %2823 = vmatpush1.msra.mxu0 %v1789
  %2824 = vmatprep.subr.mxu0 0.0
  %2825 = vmatpush1.msra.mxu0 %v1786
  %2826 = vmatprep.subr.mxu0 0.0
  %2827 = vmatpush1.msra.mxu0 %v1783
  %2828 = vmatprep.subr.mxu0 0.0
  %2829 = vmatpush1.msra.mxu0 %v1780
  %2830 = vmatprep.subr.mxu0 0.0
  %2831 = vmatpush1.msra.mxu0 %v1777
  %2832 = vmatprep.subr.mxu0 0.0
  %2833 = vmatpush1.msra.mxu0 %v1774
  %2834 = vmatprep.subr.mxu0 0.0
  %2835 = vmatpush1.msra.mxu0 %v1771
  %2836 = vmatprep.subr.mxu0 0.0
  %2837 = vmatpush1.msra.mxu0 %v1768
  %2838 = vmatprep.subr.mxu0 0.0
  %2839 = vmatpush2.msra.mxu0 0.0
  %2840 = vmatprep.subr.mxu0 0.0
  %2841 = vmatpush2.msra.mxu0 0.0
  %2842 = vmatprep.subr.mxu0 0.0
  %2843 = vmatpush2.msra.mxu0 0.0
  %2844 = vmatprep.subr.mxu0 0.0
  %2845 = vmatpush2.msra.mxu0 0.0
  %2846 = vmatprep.subr.mxu0 0.0
  %2847 = vmatpush2.msra.mxu0 0.0
  %2848 = vmatprep.subr.mxu0 0.0
  %2849 = vmatpush2.msra.mxu0 0.0
  %2850 = vmatprep.subr.mxu0 0.0
  %2851 = vmatpush2.msra.mxu0 0.0
  %2852 = vmatprep.subr.mxu0 0.0
  %2853 = vmatpush2.msra.mxu0 0.0
  %2854 = vmatprep.subr.mxu0 0.0
  %2855 = vmatpush2.msra.mxu0 0.0
  %2856 = vmatprep.subr.mxu0 0.0
  %2857 = vmatpush2.msra.mxu0 0.0
  %2858 = vmatprep.subr.mxu0 0.0
  %2859 = vmatpush2.msra.mxu0 0.0
  %2860 = vmatprep.subr.mxu0 0.0
  %2861 = vmatpush2.msra.mxu0 0.0
  %2862 = vmatprep.subr.mxu0 0.0
  %2863 = vmatpush2.msra.mxu0 0.0
  %2864 = vmatprep.subr.mxu0 0.0
  %2865 = vmatpush2.msra.mxu0 0.0
  %2866 = vmatprep.subr.mxu0 0.0
  %2867 = vmatpush2.msra.mxu0 0.0
  %2868 = vmatprep.subr.mxu0 0.0
  %2869 = vmatpush2.msra.mxu0 0.0
  %2870 = vmatprep.mubr.f32.mxu0 0.0
  %2871 = vmatmul.mubr.f32.gmra.mxu0 %v2731
  %v2872 = vpop.f32.mrf.mxu0
  %v2873 = vadd.f32 0.0, %v2872
  %v2874 = vpop.f32.mrf.mxu0
  %2875 = vdwg.mxu0
  %v2876 = vadd.f32 %v2732, %v2802
  %v2877 = vmul.f32 %v2876, 0.5
  %v2878 = vtanh.pop %v2877
  %v2879 = vmul.f32 %v2878, 0.5
  %v2880 = vadd.f32 %v2879, 0.5
  %v2881 = vadd.f32 %v2733, %v2804
  %v2882 = vmul.f32 %v2881, 0.5
  %v2883 = vtanh.pop %v2882
  %v2884 = vmul.f32 %v2883, 0.5
  %v2885 = vadd.f32 %v2884, 0.5
  %v2886 = vadd.f32 %v2873, %v2086
  %v2887 = vmul.f32 %v2880, %v2886
  %v2888 = vadd.f32 %v2734, %v2887
  %v2889 = vtanh.pop %v2888
  %v2890 = vsub.f32 %v2731, %v2889
  %v2891 = vmul.f32 %v2885, %v2890
  %v2892 = vadd.f32 %v2889, %v2891
  %v2893 = vld [vmem:[%s1226] sm:$0xff]
  %v2894 = vld [vmem:[%s1226 + $0x8] sm:$0xff]
  %v2895 = vld [vmem:[%s1226 + $0x10] sm:$0xff]
  %2896 = vmatprep.subr.mxu0 %v1812
  %2897 = vmatpush1.msra.mxu0 %v1811
  %2898 = vmatprep.subr.mxu0 %v1809
  %2899 = vmatpush1.msra.mxu0 %v1808
  %2900 = vmatprep.subr.mxu0 %v1806
  %2901 = vmatpush1.msra.mxu0 %v1805
  %2902 = vmatprep.subr.mxu0 %v1803
  %2903 = vmatpush1.msra.mxu0 %v1802
  %2904 = vmatprep.subr.mxu0 %v1800
  %2905 = vmatpush1.msra.mxu0 %v1799
  %2906 = vmatprep.subr.mxu0 %v1797
  %2907 = vmatpush1.msra.mxu0 %v1796
  %2908 = vmatprep.subr.mxu0 %v1794
  %2909 = vmatpush1.msra.mxu0 %v1793
  %2910 = vmatprep.subr.mxu0 %v1791
  %2911 = vmatpush1.msra.mxu0 %v1790
  %2912 = vmatprep.subr.mxu0 %v1788
  %2913 = vmatpush1.msra.mxu0 %v1787
  %2914 = vmatprep.subr.mxu0 %v1785
  %2915 = vmatpush1.msra.mxu0 %v1784
  %2916 = vmatprep.subr.mxu0 %v1782
  %2917 = vmatpush1.msra.mxu0 %v1781
  %2918 = vmatprep.subr.mxu0 %v1779
  %2919 = vmatpush1.msra.mxu0 %v1778
  %2920 = vmatprep.subr.mxu0 %v1776
  %2921 = vmatpush1.msra.mxu0 %v1775
  %2922 = vmatprep.subr.mxu0 %v1773
  %2923 = vmatpush1.msra.mxu0 %v1772
  %2924 = vmatprep.subr.mxu0 %v1770
  %2925 = vmatpush1.msra.mxu0 %v1769
  %2926 = vmatprep.subr.mxu0 %v1767
  %2927 = vmatpush1.msra.mxu0 %v1766
  %2928 = vmatprep.subr.mxu0 0.0
  %2929 = vmatpush2.msra.mxu0 0.0
  %2930 = vmatprep.subr.mxu0 0.0
  %2931 = vmatpush2.msra.mxu0 0.0
  %2932 = vmatprep.subr.mxu0 0.0
  %2933 = vmatpush2.msra.mxu0 0.0
  %2934 = vmatprep.subr.mxu0 0.0
  %2935 = vmatpush2.msra.mxu0 0.0
  %2936 = vmatprep.subr.mxu0 0.0
  %2937 = vmatpush2.msra.mxu0 0.0
  %2938 = vmatprep.subr.mxu0 0.0
  %2939 = vmatpush2.msra.mxu0 0.0
  %2940 = vmatprep.subr.mxu0 0.0
  %2941 = vmatpush2.msra.mxu0 0.0
  %2942 = vmatprep.subr.mxu0 0.0
  %2943 = vmatpush2.msra.mxu0 0.0
  %2944 = vmatprep.subr.mxu0 0.0
  %2945 = vmatpush2.msra.mxu0 0.0
  %2946 = vmatprep.subr.mxu0 0.0
  %2947 = vmatpush2.msra.mxu0 0.0
  %2948 = vmatprep.subr.mxu0 0.0
  %2949 = vmatpush2.msra.mxu0 0.0
  %2950 = vmatprep.subr.mxu0 0.0
  %2951 = vmatpush2.msra.mxu0 0.0
  %2952 = vmatprep.subr.mxu0 0.0
  %2953 = vmatpush2.msra.mxu0 0.0
  %2954 = vmatprep.subr.mxu0 0.0
  %2955 = vmatpush2.msra.mxu0 0.0
  %2956 = vmatprep.subr.mxu0 0.0
  %2957 = vmatpush2.msra.mxu0 0.0
  %2958 = vmatprep.subr.mxu0 0.0
  %2959 = vmatpush2.msra.mxu0 0.0
  %2960 = vmatprep.mubr.f32.mxu0 0.0
  %2961 = vmatmul.mubr.f32.gmra.mxu0 %v2892
  %v2962 = vpop.f32.mrf.mxu0
  %v2963 = vadd.f32 0.0, %v2962
  %v2964 = vpop.f32.mrf.mxu0
  %v2965 = vadd.f32 0.0, %v2964
  %2966 = vdwg.mxu0
  %2967 = vmatprep.subr.mxu0 0.0
  %2968 = vmatpush1.msra.mxu0 %v1813
  %2969 = vmatprep.subr.mxu0 0.0
  %2970 = vmatpush1.msra.mxu0 %v1810
  %2971 = vmatprep.subr.mxu0 0.0
  %2972 = vmatpush1.msra.mxu0 %v1807
  %2973 = vmatprep.subr.mxu0 0.0
  %2974 = vmatpush1.msra.mxu0 %v1804
  %2975 = vmatprep.subr.mxu0 0.0
  %2976 = vmatpush1.msra.mxu0 %v1801
  %2977 = vmatprep.subr.mxu0 0.0
  %2978 = vmatpush1.msra.mxu0 %v1798
  %2979 = vmatprep.subr.mxu0 0.0
  %2980 = vmatpush1.msra.mxu0 %v1795
  %2981 = vmatprep.subr.mxu0 0.0
  %2982 = vmatpush1.msra.mxu0 %v1792
  %2983 = vmatprep.subr.mxu0 0.0
  %2984 = vmatpush1.msra.mxu0 %v1789
  %2985 = vmatprep.subr.mxu0 0.0
  %2986 = vmatpush1.msra.mxu0 %v1786
  %2987 = vmatprep.subr.mxu0 0.0
  %2988 = vmatpush1.msra.mxu0 %v1783
  %2989 = vmatprep.subr.mxu0 0.0
  %2990 = vmatpush1.msra.mxu0 %v1780
  %2991 = vmatprep.subr.mxu0 0.0
  %2992 = vmatpush1.msra.mxu0 %v1777
  %2993 = vmatprep.subr.mxu0 0.0
  %2994 = vmatpush1.msra.mxu0 %v1774
  %2995 = vmatprep.subr.mxu0 0.0
  %2996 = vmatpush1.msra.mxu0 %v1771
  %2997 = vmatprep.subr.mxu0 0.0
  %2998 = vmatpush1.msra.mxu0 %v1768
  %2999 = vmatprep.subr.mxu0 0.0
  %3000 = vmatpush2.msra.mxu0 0.0
  %3001 = vmatprep.subr.mxu0 0.0
  %3002 = vmatpush2.msra.mxu0 0.0
  %3003 = vmatprep.subr.mxu0 0.0
  %3004 = vmatpush2.msra.mxu0 0.0
  %3005 = vmatprep.subr.mxu0 0.0
  %3006 = vmatpush2.msra.mxu0 0.0
  %3007 = vmatprep.subr.mxu0 0.0
  %3008 = vmatpush2.msra.mxu0 0.0
  %3009 = vmatprep.subr.mxu0 0.0
  %3010 = vmatpush2.msra.mxu0 0.0
  %3011 = vmatprep.subr.mxu0 0.0
  %3012 = vmatpush2.msra.mxu0 0.0
  %3013 = vmatprep.subr.mxu0 0.0
  %3014 = vmatpush2.msra.mxu0 0.0
  %3015 = vmatprep.subr.mxu0 0.0
  %3016 = vmatpush2.msra.mxu0 0.0
  %3017 = vmatprep.subr.mxu0 0.0
  %3018 = vmatpush2.msra.mxu0 0.0
  %3019 = vmatprep.subr.mxu0 0.0
  %3020 = vmatpush2.msra.mxu0 0.0
  %3021 = vmatprep.subr.mxu0 0.0
  %3022 = vmatpush2.msra.mxu0 0.0
  %3023 = vmatprep.subr.mxu0 0.0
  %3024 = vmatpush2.msra.mxu0 0.0
  %3025 = vmatprep.subr.mxu0 0.0
  %3026 = vmatpush2.msra.mxu0 0.0
  %3027 = vmatprep.subr.mxu0 0.0
  %3028 = vmatpush2.msra.mxu0 0.0
  %3029 = vmatprep.subr.mxu0 0.0
  %3030 = vmatpush2.msra.mxu0 0.0
  %3031 = vmatprep.mubr.f32.mxu0 0.0
  %3032 = vmatmul.mubr.f32.gmra.mxu0 %v2892
  %v3033 = vpop.f32.mrf.mxu0
  %v3034 = vadd.f32 0.0, %v3033
  %v3035 = vpop.f32.mrf.mxu0
  %3036 = vdwg.mxu0
  %v3037 = vadd.f32 %v2893, %v2963
  %v3038 = vmul.f32 %v3037, 0.5
  %v3039 = vtanh.pop %v3038
  %v3040 = vmul.f32 %v3039, 0.5
  %v3041 = vadd.f32 %v3040, 0.5
  %v3042 = vadd.f32 %v2894, %v2965
  %v3043 = vmul.f32 %v3042, 0.5
  %v3044 = vtanh.pop %v3043
  %v3045 = vmul.f32 %v3044, 0.5
  %v3046 = vadd.f32 %v3045, 0.5
  %v3047 = vadd.f32 %v3034, %v2086
  %v3048 = vmul.f32 %v3041, %v3047
  %v3049 = vadd.f32 %v2895, %v3048
  %v3050 = vtanh.pop %v3049
  %v3051 = vsub.f32 %v2892, %v3050
  %v3052 = vmul.f32 %v3046, %v3051
  %v3053 = vadd.f32 %v3050, %v3052
  %v3054 = vld [vmem:[%s1390] sm:$0xff]
  %v3055 = vld [vmem:[%s1390 + $0x8] sm:$0xff]
  %v3056 = vld [vmem:[%s1390 + $0x10] sm:$0xff]
  %3057 = vmatprep.subr.mxu0 %v1812
  %3058 = vmatpush1.msra.mxu0 %v1811
  %3059 = vmatprep.subr.mxu0 %v1809
  %3060 = vmatpush1.msra.mxu0 %v1808
  %3061 = vmatprep.subr.mxu0 %v1806
  %3062 = vmatpush1.msra.mxu0 %v1805
  %3063 = vmatprep.subr.mxu0 %v1803
  %3064 = vmatpush1.msra.mxu0 %v1802
  %3065 = vmatprep.subr.mxu0 %v1800
  %3066 = vmatpush1.msra.mxu0 %v1799
  %3067 = vmatprep.subr.mxu0 %v1797
  %3068 = vmatpush1.msra.mxu0 %v1796
  %3069 = vmatprep.subr.mxu0 %v1794
  %3070 = vmatpush1.msra.mxu0 %v1793
  %3071 = vmatprep.subr.mxu0 %v1791
  %3072 = vmatpush1.msra.mxu0 %v1790
  %3073 = vmatprep.subr.mxu0 %v1788
  %3074 = vmatpush1.msra.mxu0 %v1787
  %3075 = vmatprep.subr.mxu0 %v1785
  %3076 = vmatpush1.msra.mxu0 %v1784
  %3077 = vmatprep.subr.mxu0 %v1782
  %3078 = vmatpush1.msra.mxu0 %v1781
  %3079 = vmatprep.subr.mxu0 %v1779
  %3080 = vmatpush1.msra.mxu0 %v1778
  %3081 = vmatprep.subr.mxu0 %v1776
  %3082 = vmatpush1.msra.mxu0 %v1775
  %3083 = vmatprep.subr.mxu0 %v1773
  %3084 = vmatpush1.msra.mxu0 %v1772
  %3085 = vmatprep.subr.mxu0 %v1770
  %3086 = vmatpush1.msra.mxu0 %v1769
  %3087 = vmatprep.subr.mxu0 %v1767
  %3088 = vmatpush1.msra.mxu0 %v1766
  %3089 = vmatprep.subr.mxu0 0.0
  %3090 = vmatpush2.msra.mxu0 0.0
  %3091 = vmatprep.subr.mxu0 0.0
  %3092 = vmatpush2.msra.mxu0 0.0
  %3093 = vmatprep.subr.mxu0 0.0
  %3094 = vmatpush2.msra.mxu0 0.0
  %3095 = vmatprep.subr.mxu0 0.0
  %3096 = vmatpush2.msra.mxu0 0.0
  %3097 = vmatprep.subr.mxu0 0.0
  %3098 = vmatpush2.msra.mxu0 0.0
  %3099 = vmatprep.subr.mxu0 0.0
  %3100 = vmatpush2.msra.mxu0 0.0
  %3101 = vmatprep.subr.mxu0 0.0
  %3102 = vmatpush2.msra.mxu0 0.0
  %3103 = vmatprep.subr.mxu0 0.0
  %3104 = vmatpush2.msra.mxu0 0.0
  %3105 = vmatprep.subr.mxu0 0.0
  %3106 = vmatpush2.msra.mxu0 0.0
  %3107 = vmatprep.subr.mxu0 0.0
  %3108 = vmatpush2.msra.mxu0 0.0
  %3109 = vmatprep.subr.mxu0 0.0
  %3110 = vmatpush2.msra.mxu0 0.0
  %3111 = vmatprep.subr.mxu0 0.0
  %3112 = vmatpush2.msra.mxu0 0.0
  %3113 = vmatprep.subr.mxu0 0.0
  %3114 = vmatpush2.msra.mxu0 0.0
  %3115 = vmatprep.subr.mxu0 0.0
  %3116 = vmatpush2.msra.mxu0 0.0
  %3117 = vmatprep.subr.mxu0 0.0
  %3118 = vmatpush2.msra.mxu0 0.0
  %3119 = vmatprep.subr.mxu0 0.0
  %3120 = vmatpush2.msra.mxu0 0.0
  %3121 = vmatprep.mubr.f32.mxu0 0.0
  %3122 = vmatmul.mubr.f32.gmra.mxu0 %v3053
  %v3123 = vpop.f32.mrf.mxu0
  %v3124 = vadd.f32 0.0, %v3123
  %v3125 = vpop.f32.mrf.mxu0
  %v3126 = vadd.f32 0.0, %v3125
  %3127 = vdwg.mxu0
  %3128 = vmatprep.subr.mxu0 0.0
  %3129 = vmatpush1.msra.mxu0 %v1813
  %3130 = vmatprep.subr.mxu0 0.0
  %3131 = vmatpush1.msra.mxu0 %v1810
  %3132 = vmatprep.subr.mxu0 0.0
  %3133 = vmatpush1.msra.mxu0 %v1807
  %3134 = vmatprep.subr.mxu0 0.0
  %3135 = vmatpush1.msra.mxu0 %v1804
  %3136 = vmatprep.subr.mxu0 0.0
  %3137 = vmatpush1.msra.mxu0 %v1801
  %3138 = vmatprep.subr.mxu0 0.0
  %3139 = vmatpush1.msra.mxu0 %v1798
  %3140 = vmatprep.subr.mxu0 0.0
  %3141 = vmatpush1.msra.mxu0 %v1795
  %3142 = vmatprep.subr.mxu0 0.0
  %3143 = vmatpush1.msra.mxu0 %v1792
  %3144 = vmatprep.subr.mxu0 0.0
  %3145 = vmatpush1.msra.mxu0 %v1789
  %3146 = vmatprep.subr.mxu0 0.0
  %3147 = vmatpush1.msra.mxu0 %v1786
  %3148 = vmatprep.subr.mxu0 0.0
  %3149 = vmatpush1.msra.mxu0 %v1783
  %3150 = vmatprep.subr.mxu0 0.0
  %3151 = vmatpush1.msra.mxu0 %v1780
  %3152 = vmatprep.subr.mxu0 0.0
  %3153 = vmatpush1.msra.mxu0 %v1777
  %3154 = vmatprep.subr.mxu0 0.0
  %3155 = vmatpush1.msra.mxu0 %v1774
  %3156 = vmatprep.subr.mxu0 0.0
  %3157 = vmatpush1.msra.mxu0 %v1771
  %3158 = vmatprep.subr.mxu0 0.0
  %3159 = vmatpush1.msra.mxu0 %v1768
  %3160 = vmatprep.subr.mxu0 0.0
  %3161 = vmatpush2.msra.mxu0 0.0
  %3162 = vmatprep.subr.mxu0 0.0
  %3163 = vmatpush2.msra.mxu0 0.0
  %3164 = vmatprep.subr.mxu0 0.0
  %3165 = vmatpush2.msra.mxu0 0.0
  %3166 = vmatprep.subr.mxu0 0.0
  %3167 = vmatpush2.msra.mxu0 0.0
  %3168 = vmatprep.subr.mxu0 0.0
  %3169 = vmatpush2.msra.mxu0 0.0
  %3170 = vmatprep.subr.mxu0 0.0
  %3171 = vmatpush2.msra.mxu0 0.0
  %3172 = vmatprep.subr.mxu0 0.0
  %3173 = vmatpush2.msra.mxu0 0.0
  %3174 = vmatprep.subr.mxu0 0.0
  %3175 = vmatpush2.msra.mxu0 0.0
  %3176 = vmatprep.subr.mxu0 0.0
  %3177 = vmatpush2.msra.mxu0 0.0
  %3178 = vmatprep.subr.mxu0 0.0
  %3179 = vmatpush2.msra.mxu0 0.0
  %3180 = vmatprep.subr.mxu0 0.0
  %3181 = vmatpush2.msra.mxu0 0.0
  %3182 = vmatprep.subr.mxu0 0.0
  %3183 = vmatpush2.msra.mxu0 0.0
  %3184 = vmatprep.subr.mxu0 0.0
  %3185 = vmatpush2.msra.mxu0 0.0
  %3186 = vmatprep.subr.mxu0 0.0
  %3187 = vmatpush2.msra.mxu0 0.0
  %3188 = vmatprep.subr.mxu0 0.0
  %3189 = vmatpush2.msra.mxu0 0.0
  %3190 = vmatprep.subr.mxu0 0.0
  %3191 = vmatpush2.msra.mxu0 0.0
  %3192 = vmatprep.mubr.f32.mxu0 0.0
  %3193 = vmatmul.mubr.f32.gmra.mxu0 %v3053
  %v3194 = vpop.f32.mrf.mxu0
  %v3195 = vadd.f32 0.0, %v3194
  %v3196 = vpop.f32.mrf.mxu0
  %3197 = vdwg.mxu0
  %v3198 = vadd.f32 %v3054, %v3124
  %v3199 = vmul.f32 %v3198, 0.5
  %v3200 = vtanh.pop %v3199
  %v3201 = vmul.f32 %v3200, 0.5
  %v3202 = vadd.f32 %v3201, 0.5
  %v3203 = vadd.f32 %v3055, %v3126
  %v3204 = vmul.f32 %v3203, 0.5
  %v3205 = vtanh.pop %v3204
  %v3206 = vmul.f32 %v3205, 0.5
  %v3207 = vadd.f32 %v3206, 0.5
  %v3208 = vadd.f32 %v3195, %v2086
  %v3209 = vmul.f32 %v3202, %v3208
  %v3210 = vadd.f32 %v3056, %v3209
  %v3211 = vtanh.pop %v3210
  %v3212 = vsub.f32 %v3053, %v3211
  %v3213 = vmul.f32 %v3207, %v3212
  %v3214 = vadd.f32 %v3211, %v3213
  %v3215 = vld [vmem:[%s1554] sm:$0xff]
  %v3216 = vld [vmem:[%s1554 + $0x8] sm:$0xff]
  %v3217 = vld [vmem:[%s1554 + $0x10] sm:$0xff]
  %3218 = vmatprep.subr.mxu0 %v1812
  %3219 = vmatpush1.msra.mxu0 %v1811
  %3220 = vmatprep.subr.mxu0 %v1809
  %3221 = vmatpush1.msra.mxu0 %v1808
  %3222 = vmatprep.subr.mxu0 %v1806
  %3223 = vmatpush1.msra.mxu0 %v1805
  %3224 = vmatprep.subr.mxu0 %v1803
  %3225 = vmatpush1.msra.mxu0 %v1802
  %3226 = vmatprep.subr.mxu0 %v1800
  %3227 = vmatpush1.msra.mxu0 %v1799
  %3228 = vmatprep.subr.mxu0 %v1797
  %3229 = vmatpush1.msra.mxu0 %v1796
  %3230 = vmatprep.subr.mxu0 %v1794
  %3231 = vmatpush1.msra.mxu0 %v1793
  %3232 = vmatprep.subr.mxu0 %v1791
  %3233 = vmatpush1.msra.mxu0 %v1790
  %3234 = vmatprep.subr.mxu0 %v1788
  %3235 = vmatpush1.msra.mxu0 %v1787
  %3236 = vmatprep.subr.mxu0 %v1785
  %3237 = vmatpush1.msra.mxu0 %v1784
  %3238 = vmatprep.subr.mxu0 %v1782
  %3239 = vmatpush1.msra.mxu0 %v1781
  %3240 = vmatprep.subr.mxu0 %v1779
  %3241 = vmatpush1.msra.mxu0 %v1778
  %3242 = vmatprep.subr.mxu0 %v1776
  %3243 = vmatpush1.msra.mxu0 %v1775
  %3244 = vmatprep.subr.mxu0 %v1773
  %3245 = vmatpush1.msra.mxu0 %v1772
  %3246 = vmatprep.subr.mxu0 %v1770
  %3247 = vmatpush1.msra.mxu0 %v1769
  %3248 = vmatprep.subr.mxu0 %v1767
  %3249 = vmatpush1.msra.mxu0 %v1766
  %3250 = vmatprep.subr.mxu0 0.0
  %3251 = vmatpush2.msra.mxu0 0.0
  %3252 = vmatprep.subr.mxu0 0.0
  %3253 = vmatpush2.msra.mxu0 0.0
  %3254 = vmatprep.subr.mxu0 0.0
  %3255 = vmatpush2.msra.mxu0 0.0
  %3256 = vmatprep.subr.mxu0 0.0
  %3257 = vmatpush2.msra.mxu0 0.0
  %3258 = vmatprep.subr.mxu0 0.0
  %3259 = vmatpush2.msra.mxu0 0.0
  %3260 = vmatprep.subr.mxu0 0.0
  %3261 = vmatpush2.msra.mxu0 0.0
  %3262 = vmatprep.subr.mxu0 0.0
  %3263 = vmatpush2.msra.mxu0 0.0
  %3264 = vmatprep.subr.mxu0 0.0
  %3265 = vmatpush2.msra.mxu0 0.0
  %3266 = vmatprep.subr.mxu0 0.0
  %3267 = vmatpush2.msra.mxu0 0.0
  %3268 = vmatprep.subr.mxu0 0.0
  %3269 = vmatpush2.msra.mxu0 0.0
  %3270 = vmatprep.subr.mxu0 0.0
  %3271 = vmatpush2.msra.mxu0 0.0
  %3272 = vmatprep.subr.mxu0 0.0
  %3273 = vmatpush2.msra.mxu0 0.0
  %3274 = vmatprep.subr.mxu0 0.0
  %3275 = vmatpush2.msra.mxu0 0.0
  %3276 = vmatprep.subr.mxu0 0.0
  %3277 = vmatpush2.msra.mxu0 0.0
  %3278 = vmatprep.subr.mxu0 0.0
  %3279 = vmatpush2.msra.mxu0 0.0
  %3280 = vmatprep.subr.mxu0 0.0
  %3281 = vmatpush2.msra.mxu0 0.0
  %3282 = vmatprep.mubr.f32.mxu0 0.0
  %3283 = vmatmul.mubr.f32.gmra.mxu0 %v3214
  %v3284 = vpop.f32.mrf.mxu0
  %v3285 = vadd.f32 0.0, %v3284
  %v3286 = vpop.f32.mrf.mxu0
  %v3287 = vadd.f32 0.0, %v3286
  %3288 = vdwg.mxu0
  %3289 = vmatprep.subr.mxu0 0.0
  %3290 = vmatpush1.msra.mxu0 %v1813
  %3291 = vmatprep.subr.mxu0 0.0
  %3292 = vmatpush1.msra.mxu0 %v1810
  %3293 = vmatprep.subr.mxu0 0.0
  %3294 = vmatpush1.msra.mxu0 %v1807
  %3295 = vmatprep.subr.mxu0 0.0
  %3296 = vmatpush1.msra.mxu0 %v1804
  %3297 = vmatprep.subr.mxu0 0.0
  %3298 = vmatpush1.msra.mxu0 %v1801
  %3299 = vmatprep.subr.mxu0 0.0
  %3300 = vmatpush1.msra.mxu0 %v1798
  %3301 = vmatprep.subr.mxu0 0.0
  %3302 = vmatpush1.msra.mxu0 %v1795
  %3303 = vmatprep.subr.mxu0 0.0
  %3304 = vmatpush1.msra.mxu0 %v1792
  %3305 = vmatprep.subr.mxu0 0.0
  %3306 = vmatpush1.msra.mxu0 %v1789
  %3307 = vmatprep.subr.mxu0 0.0
  %3308 = vmatpush1.msra.mxu0 %v1786
  %3309 = vmatprep.subr.mxu0 0.0
  %3310 = vmatpush1.msra.mxu0 %v1783
  %3311 = vmatprep.subr.mxu0 0.0
  %3312 = vmatpush1.msra.mxu0 %v1780
  %3313 = vmatprep.subr.mxu0 0.0
  %3314 = vmatpush1.msra.mxu0 %v1777
  %3315 = vmatprep.subr.mxu0 0.0
  %3316 = vmatpush1.msra.mxu0 %v1774
  %3317 = vmatprep.subr.mxu0 0.0
  %3318 = vmatpush1.msra.mxu0 %v1771
  %3319 = vmatprep.subr.mxu0 0.0
  %3320 = vmatpush1.msra.mxu0 %v1768
  %3321 = vmatprep.subr.mxu0 0.0
  %3322 = vmatpush2.msra.mxu0 0.0
  %3323 = vmatprep.subr.mxu0 0.0
  %3324 = vmatpush2.msra.mxu0 0.0
  %3325 = vmatprep.subr.mxu0 0.0
  %3326 = vmatpush2.msra.mxu0 0.0
  %3327 = vmatprep.subr.mxu0 0.0
  %3328 = vmatpush2.msra.mxu0 0.0
  %3329 = vmatprep.subr.mxu0 0.0
  %3330 = vmatpush2.msra.mxu0 0.0
  %3331 = vmatprep.subr.mxu0 0.0
  %3332 = vmatpush2.msra.mxu0 0.0
  %3333 = vmatprep.subr.mxu0 0.0
  %3334 = vmatpush2.msra.mxu0 0.0
  %3335 = vmatprep.subr.mxu0 0.0
  %3336 = vmatpush2.msra.mxu0 0.0
  %3337 = vmatprep.subr.mxu0 0.0
  %3338 = vmatpush2.msra.mxu0 0.0
  %3339 = vmatprep.subr.mxu0 0.0
  %3340 = vmatpush2.msra.mxu0 0.0
  %3341 = vmatprep.subr.mxu0 0.0
  %3342 = vmatpush2.msra.mxu0 0.0
  %3343 = vmatprep.subr.mxu0 0.0
  %3344 = vmatpush2.msra.mxu0 0.0
  %3345 = vmatprep.subr.mxu0 0.0
  %3346 = vmatpush2.msra.mxu0 0.0
  %3347 = vmatprep.subr.mxu0 0.0
  %3348 = vmatpush2.msra.mxu0 0.0
  %3349 = vmatprep.subr.mxu0 0.0
  %3350 = vmatpush2.msra.mxu0 0.0
  %3351 = vmatprep.subr.mxu0 0.0
  %3352 = vmatpush2.msra.mxu0 0.0
  %3353 = vmatprep.mubr.f32.mxu0 0.0
  %3354 = vmatmul.mubr.f32.gmra.mxu0 %v3214
  %v3355 = vpop.f32.mrf.mxu0
  %v3356 = vadd.f32 0.0, %v3355
  %v3357 = vpop.f32.mrf.mxu0
  %3358 = vdwg.mxu0
  %v3359 = vadd.f32 %v3215, %v3285
  %v3360 = vmul.f32 %v3359, 0.5
  %v3361 = vtanh.pop %v3360
  %v3362 = vmul.f32 %v3361, 0.5
  %v3363 = vadd.f32 %v3362, 0.5
  %v3364 = vadd.f32 %v3216, %v3287
  %v3365 = vmul.f32 %v3364, 0.5
  %v3366 = vtanh.pop %v3365
  %v3367 = vmul.f32 %v3366, 0.5
  %v3368 = vadd.f32 %v3367, 0.5
  %v3369 = vadd.f32 %v3356, %v2086
  %v3370 = vmul.f32 %v3363, %v3369
  %v3371 = vadd.f32 %v3217, %v3370
  %v3372 = vtanh.pop %v3371
  %v3373 = vsub.f32 %v3214, %v3372
  %v3374 = vmul.f32 %v3368, %v3373
  %v3375 = vadd.f32 %v3372, %v3374
  %v3376 = vld [vmem:[%s9] sm:$0xff]
  %v3377 = vld [vmem:[%s9 + $0x8] sm:$0xff]
  %v3378 = vld [vmem:[%s9 + $0x10] sm:$0xff]
  %v3379 = vld [vmem:[%s9 + $0x18] sm:$0xff]
  %v3380 = vld [vmem:[%s9 + $0x20] sm:$0xff]
  %v3381 = vld [vmem:[%s9 + $0x28] sm:$0xff]
  %v3382 = vld [vmem:[%s9 + $0x30] sm:$0xff]
  %v3383 = vld [vmem:[%s9 + $0x38] sm:$0xff]
  %v3384 = vld [vmem:[%s9 + $0x40] sm:$0xff]
  %v3385 = vld [vmem:[%s9 + $0x48] sm:$0xff]
  %v3386 = vld [vmem:[%s9 + $0x50] sm:$0xff]
  %v3387 = vld [vmem:[%s9 + $0x58] sm:$0xff]
  %v3388 = vld [vmem:[%s9 + $0x60] sm:$0xff]
  %v3389 = vld [vmem:[%s9 + $0x68] sm:$0xff]
  %v3390 = vld [vmem:[%s9 + $0x70] sm:$0xff]
  %v3391 = vld [vmem:[%s9 + $0x78] sm:$0xff]
  %v3392 = vld [vmem:[%s10] sm:$0x1]
  %v3394 = vlaneseq
  %v3395 = vshrl.u32 %v3394, 7
  %v3396 = vsub.s32 0, %v3395
  %v3397 = vrot.slane %v3392, %v3396
  %3399 = vmatprep.subr.mxu0 0.0
  %3400 = vmatpush1.msra.mxu0 %v3391
  %3401 = vmatprep.subr.mxu0 0.0
  %3402 = vmatpush1.msra.mxu0 %v3390
  %3403 = vmatprep.subr.mxu0 0.0
  %3404 = vmatpush1.msra.mxu0 %v3389
  %3405 = vmatprep.subr.mxu0 0.0
  %3406 = vmatpush1.msra.mxu0 %v3388
  %3407 = vmatprep.subr.mxu0 0.0
  %3408 = vmatpush1.msra.mxu0 %v3387
  %3409 = vmatprep.subr.mxu0 0.0
  %3410 = vmatpush1.msra.mxu0 %v3386
  %3411 = vmatprep.subr.mxu0 0.0
  %3412 = vmatpush1.msra.mxu0 %v3385
  %3413 = vmatprep.subr.mxu0 0.0
  %3414 = vmatpush1.msra.mxu0 %v3384
  %3415 = vmatprep.subr.mxu0 0.0
  %3416 = vmatpush1.msra.mxu0 %v3383
  %3417 = vmatprep.subr.mxu0 0.0
  %3418 = vmatpush1.msra.mxu0 %v3382
  %3419 = vmatprep.subr.mxu0 0.0
  %3420 = vmatpush1.msra.mxu0 %v3381
  %3421 = vmatprep.subr.mxu0 0.0
  %3422 = vmatpush1.msra.mxu0 %v3380
  %3423 = vmatprep.subr.mxu0 0.0
  %3424 = vmatpush1.msra.mxu0 %v3379
  %3425 = vmatprep.subr.mxu0 0.0
  %3426 = vmatpush1.msra.mxu0 %v3378
  %3427 = vmatprep.subr.mxu0 0.0
  %3428 = vmatpush1.msra.mxu0 %v3377
  %3429 = vmatprep.subr.mxu0 0.0
  %3430 = vmatpush1.msra.mxu0 %v3376
  %3431 = vmatprep.subr.mxu0 0.0
  %3432 = vmatpush2.msra.mxu0 0.0
  %3433 = vmatprep.subr.mxu0 0.0
  %3434 = vmatpush2.msra.mxu0 0.0
  %3435 = vmatprep.subr.mxu0 0.0
  %3436 = vmatpush2.msra.mxu0 0.0
  %3437 = vmatprep.subr.mxu0 0.0
  %3438 = vmatpush2.msra.mxu0 0.0
  %3439 = vmatprep.subr.mxu0 0.0
  %3440 = vmatpush2.msra.mxu0 0.0
  %3441 = vmatprep.subr.mxu0 0.0
  %3442 = vmatpush2.msra.mxu0 0.0
  %3443 = vmatprep.subr.mxu0 0.0
  %3444 = vmatpush2.msra.mxu0 0.0
  %3445 = vmatprep.subr.mxu0 0.0
  %3446 = vmatpush2.msra.mxu0 0.0
  %3447 = vmatprep.subr.mxu0 0.0
  %3448 = vmatpush2.msra.mxu0 0.0
  %3449 = vmatprep.subr.mxu0 0.0
  %3450 = vmatpush2.msra.mxu0 0.0
  %3451 = vmatprep.subr.mxu0 0.0
  %3452 = vmatpush2.msra.mxu0 0.0
  %3453 = vmatprep.subr.mxu0 0.0
  %3454 = vmatpush2.msra.mxu0 0.0
  %3455 = vmatprep.subr.mxu0 0.0
  %3456 = vmatpush2.msra.mxu0 0.0
  %3457 = vmatprep.subr.mxu0 0.0
  %3458 = vmatpush2.msra.mxu0 0.0
  %3459 = vmatprep.subr.mxu0 0.0
  %3460 = vmatpush2.msra.mxu0 0.0
  %3461 = vmatprep.subr.mxu0 0.0
  %3462 = vmatpush2.msra.mxu0 0.0
  %3463 = vmatprep.mubr.f32.mxu0 0.0
  %3464 = vmatmul.mubr.f32.gmra.mxu0 %v3375
  %v3465 = vpop.f32.mrf.mxu0
  %v3466 = vadd.f32 %v3397, %v3465
  %v3467 = vpop.f32.mrf.mxu0
  %3468 = vdwg.mxu0
  %vm3469 = vcmask 31744
  %3470 = vst.msk [vmem:[%s11] sm:$0xff] %vm3469, %v3466
  // Predicated region
  $region46: #{gru_network_forward.1} parent=0 // pred_check
    _
  $region47: #{gru_network_forward.1} parent=0 // pred_check_branch
    %3472 = sbr.rel (0) target = $region49
  $region48: #{gru_network_forward.1} parent=0 // pred_region
    _
  $region49: #{gru_network_forward.1} parent=0 // pred_fallthru
    _
  // Predicated region
  $region50: #{gru_network_forward.1} parent=0 // pred_check
    _
  $region51: #{gru_network_forward.1} parent=0 // pred_check_branch
    %3474 = sbr.rel (0) target = $region53
  $region52: #{gru_network_forward.1} parent=0 // pred_region
    _
  $region53: #{gru_network_forward.1} parent=0 // pred_fallthru
    _

</llo_original>
